<compile_context>
chip_gen: v7x
topology: tpu7x:2x2x1
jax: 0.10.0
libtpu: 0.0.40
codegen_flags: <defaults>
</compile_context>

<pallas_src>
import jax
import jax.numpy as jnp
from jax.experimental import pallas as pl
from jax.experimental.pallas import tpu as pltpu

IMAGE_CHANNELS = 3
IMAGE_SIZE = 16          # module hardcodes 128; shrunk for a small runnable test
LATENT_DIM = 100
LATENT_PAD = 128         # lane-dense padded width for the final projection
EPS = 1e-5
NEG_SLOPE = 0.2
HIDDEN = (1024, 512, 256, 128)
LAYER1_TN = 512          # N//tn = 2 (even) -> both v7x TensorCores stream


def _leaky_bn(y, g, be):
    """LeakyReLU(0.2) + BatchNorm1d training-mode forward (biased variance)."""
    y = jnp.where(y >= 0, y, NEG_SLOPE * y)
    m = jnp.mean(y, axis=0, keepdims=True)
    v = jnp.mean(jnp.square(y - m), axis=0, keepdims=True)
    return g * (y - m) * jax.lax.rsqrt(v + EPS) + be


def _pick_tk(K):
    """Largest convenient K-tile dividing K (real net: K=49152 -> 16384)."""
    for cand in (16384, 8192, 4096, 2048, 1024):
        if K % cand == 0:
            return cand
    return K


# --------------------------------------------------------------------------
# Layer 1: pure tiled streaming matmul (bf16 weight stream, f32 accumulate).
# grid = (N // tn [parallel, first], K // tk [arbitrary, last]).
# Weights are tile-major (N//tn, K, tn) so every DMA'd tile is contiguous.
# --------------------------------------------------------------------------
def layer1_kernel(x_ref, w_ref, o_ref, acc_ref):
    k = pl.program_id(1)

    @pl.when(k == 0)
    def _():
        acc_ref[...] = jnp.zeros_like(acc_ref)

    acc_ref[...] += jnp.dot(x_ref[...], w_ref[...],
                            preferred_element_type=jnp.float32)

    @pl.when(k == pl.num_programs(1) - 1)
    def _():
        o_ref[...] = acc_ref[...]


def layer1_matmul(x, w_tiled):
    B, K = x.shape
    n_tiles, K2, tn = w_tiled.shape
    assert K2 == K
    N = n_tiles * tn
    tk = _pick_tk(K)

    # Explicit scoped-VMEM budget: double-buffered weight + activation tiles,
    # output + accumulator, plus headroom. (Real net, tk=16384/tn=512 bf16:
    # ~36 MiB; small self-test clamps to the 16 MiB floor.)
    w_bytes = tk * tn * w_tiled.dtype.itemsize
    x_bytes = B * tk * x.dtype.itemsize
    vmem_bytes = int(2 * (w_bytes + x_bytes) + 3 * B * tn * 4 + (4 << 20))
    vmem_bytes = max(vmem_bytes, 16 << 20)

    cost = pl.CostEstimate(
        flops=2 * B * K * N,
        transcendentals=0,
        bytes_accessed=(K * N * w_tiled.dtype.itemsize       # weight stream
                        + n_tiles * B * K * x.dtype.itemsize  # x refetched per j
                        + B * N * 4),
    )
    return pl.pallas_call(
        layer1_kernel,
        out_shape=jax.ShapeDtypeStruct((B, N), jnp.float32),
        grid=(n_tiles, K // tk),
        in_specs=[
            # Activations: full batch resident (required for BN batch stats).
            pl.BlockSpec((B, tk), lambda j, k: (0, k)),
            # Contiguous weight tile j, K-slab k.
            pl.BlockSpec((None, tk, tn), lambda j, k: (j, k, 0)),
        ],
        out_specs=pl.BlockSpec((B, tn), lambda j, k: (0, j)),
        scratch_shapes=[pltpu.VMEM((B, tn), jnp.float32)],
        compiler_params=pltpu.CompilerParams(
            dimension_semantics=("parallel", "arbitrary"),
            vmem_limit_bytes=vmem_bytes),
        cost_estimate=cost,
    )(x, w_tiled)


# --------------------------------------------------------------------------
# Fused tail: layer-1 epilogue (bias + LeakyReLU + BN) hoisted here, then
# (1024->512), (512->256), (256->128) Linear+LeakyReLU+BN and the final Linear
# to latent (padded to 128 lanes). Single call, all weights VMEM-resident in
# bf16 (~1.4 MiB); matmuls run bf16 x bf16 -> f32 on the MXU.
# --------------------------------------------------------------------------
def tail_kernel(h_ref,
                b1_ref, g1_ref, be1_ref,
                w2_ref, b2_ref, g2_ref, be2_ref,
                w3_ref, b3_ref, g3_ref, be3_ref,
                w4_ref, b4_ref, g4_ref, be4_ref,
                wf_ref, bf_ref,
                o_ref):
    def block(h, w, b, g, be):
        y = jnp.dot(h.astype(w.dtype), w,
                    preferred_element_type=jnp.float32) + b
        return _leaky_bn(y, g, be)

    # Layer-1 epilogue: the raw (B, 1024) f32 matmul result arrives here.
    h = _leaky_bn(h_ref[...] + b1_ref[...], g1_ref[...], be1_ref[...])
    h = block(h, w2_ref[...], b2_ref[...], g2_ref[...], be2_ref[...])
    h = block(h, w3_ref[...], b3_ref[...], g3_ref[...], be3_ref[...])
    h = block(h, w4_ref[...], b4_ref[...], g4_ref[...], be4_ref[...])
    o_ref[...] = (jnp.dot(h.astype(wf_ref.dtype), wf_ref[...],
                          preferred_element_type=jnp.float32)
                  + bf_ref[...]).astype(o_ref.dtype)


def fused_tail(h, bn1, tail_layers, wf_pad, bf_pad):
    B = h.shape[0]
    Npad = wf_pad.shape[1]
    flat = [h, *bn1]
    for (w, b, g, be) in tail_layers:
        flat += [w, b, g, be]
    flat += [wf_pad, bf_pad]
    vmem = pl.BlockSpec(memory_space=pltpu.MemorySpace.VMEM)
    return pl.pallas_call(
        tail_kernel,
        out_shape=jax.ShapeDtypeStruct((B, Npad), jnp.float32),
        in_specs=[vmem] * len(flat),
        out_specs=vmem,
    )(*flat)


# --------------------------------------------------------------------------
# Parameters / forward
# --------------------------------------------------------------------------
def init_params(key):
    """Deterministic init (PyTorch-Linear-style uniform bounds)."""
    in_dim = IMAGE_SIZE * IMAGE_SIZE * IMAGE_CHANNELS
    dims = [in_dim, *HIDDEN, LATENT_DIM]

    def linear(key, fan_in, fan_out):
        kw, kb = jax.random.split(key)
        bound = 1.0 / float(fan_in) ** 0.5
        # PyTorch Linear weight is (out, in); stored transposed (in, out) here.
        w = jax.random.uniform(kw, (fan_in, fan_out), jnp.float32, -bound, bound)
        b = jax.random.uniform(kb, (1, fan_out), jnp.float32, -bound, bound)
        return w, b

    keys = jax.random.split(key, len(dims) - 1)

    # Layer 1: bf16 weight, re-laid-out tile-major (N//tn, K, tn) once so the
    # streamed weight tiles are HBM-contiguous. Bias/BN params stay f32 and
    # are consumed in the fused tail (epilogue hoisted out of the stream).
    K, N = dims[0], dims[1]
    assert N % LAYER1_TN == 0
    w1, b1 = linear(keys[0], K, N)
    w1_tiled = (w1.reshape(K, N // LAYER1_TN, LAYER1_TN)
                  .transpose(1, 0, 2)
                  .astype(jnp.bfloat16))
    bn1 = (b1,
           jnp.ones((1, N), jnp.float32),
           jnp.zeros((1, N), jnp.float32))

    # Layers 2-4: bf16 weights (MXU-native), f32 bias/BN; VMEM-resident.
    tail_p = []
    for i in range(1, 4):
        w, b = linear(keys[i], dims[i], dims[i + 1])
        tail_p.append((w.astype(jnp.bfloat16), b,
                       jnp.ones((1, dims[i + 1]), jnp.float32),
                       jnp.zeros((1, dims[i + 1]), jnp.float32)))

    # Final projection: zero-pad latent 100 -> 128 for a lane-dense output.
    wf, bf = linear(keys[4], dims[4], dims[5])
    wf_pad = (jnp.zeros((dims[4], LATENT_PAD), jnp.float32)
                 .at[:, :LATENT_DIM].set(wf).astype(jnp.bfloat16))
    bf_pad = jnp.zeros((1, LATENT_PAD), jnp.float32).at[:, :LATENT_DIM].set(bf)

    return {"w1_tiled": w1_tiled, "bn1": bn1, "tail": tail_p,
            "final": (wf_pad, bf_pad)}


@jax.jit
def encoder_forward(x, params):
    B = x.shape[0]
    h = x.reshape(B, -1).astype(jnp.bfloat16)     # == x.view(x.shape[0], -1)
    h = layer1_matmul(h, params["w1_tiled"])      # raw (B, 1024) f32 matmul
    wf_pad, bf_pad = params["final"]
    out = fused_tail(h, params["bn1"], params["tail"], wf_pad, bf_pad)
    return out[:, :LATENT_DIM]
    # TODO(synk): BatchNorm running_mean/var bookkeeping (no effect on the
    # training-mode forward output) is not tracked.


def encoder_forward_ref(x, params):
    """Plain-JAX reference following the same dtype/precision path."""
    B = x.shape[0]
    h = x.reshape(B, -1).astype(jnp.bfloat16)
    w1_tiled = params["w1_tiled"]
    n_tiles, K, tn = w1_tiled.shape
    w1 = jnp.transpose(w1_tiled, (1, 0, 2)).reshape(K, n_tiles * tn)
    b1, g1, be1 = params["bn1"]
    y = jnp.dot(h, w1, preferred_element_type=jnp.float32) + b1
    h = _leaky_bn(y, g1, be1)
    for (w, b, g, be) in params["tail"]:
        y = jnp.dot(h.astype(w.dtype), w, preferred_element_type=jnp.float32) + b
        h = _leaky_bn(y, g, be)
    wf_pad, bf_pad = params["final"]
    out = jnp.dot(h.astype(wf_pad.dtype), wf_pad,
                  preferred_element_type=jnp.float32) + bf_pad
    return out[:, :LATENT_DIM]


if __name__ == "__main__":
    key = jax.random.PRNGKey(0)
    kx, kp = jax.random.split(key)
    x = jax.random.normal(
        kx, (4, IMAGE_CHANNELS, IMAGE_SIZE, IMAGE_SIZE), jnp.float32)
    params = init_params(kp)

    out = encoder_forward(x, params)
    jax.block_until_ready(out)
    assert out.shape == (4, LATENT_DIM), out.shape

    ref = encoder_forward_ref(x, params)
    assert jnp.allclose(out, ref, atol=2e-3, rtol=2e-3), \
        float(jnp.max(jnp.abs(out - ref)))

    print("KERNEL_OK")
</pallas_src>

<mosaic_0001>
module attributes {stable_mosaic.version = 11 : i64} {
  func.func @tail_kernel(%arg0: memref<4x1024xf32, #tpu.memory_space<vmem>>, %arg1: memref<1x1024xf32, #tpu.memory_space<vmem>>, %arg2: memref<1x1024xf32, #tpu.memory_space<vmem>>, %arg3: memref<1x1024xf32, #tpu.memory_space<vmem>>, %arg4: memref<1024x512xbf16, #tpu.memory_space<vmem>>, %arg5: memref<1x512xf32, #tpu.memory_space<vmem>>, %arg6: memref<1x512xf32, #tpu.memory_space<vmem>>, %arg7: memref<1x512xf32, #tpu.memory_space<vmem>>, %arg8: memref<512x256xbf16, #tpu.memory_space<vmem>>, %arg9: memref<1x256xf32, #tpu.memory_space<vmem>>, %arg10: memref<1x256xf32, #tpu.memory_space<vmem>>, %arg11: memref<1x256xf32, #tpu.memory_space<vmem>>, %arg12: memref<256x128xbf16, #tpu.memory_space<vmem>>, %arg13: memref<1x128xf32, #tpu.memory_space<vmem>>, %arg14: memref<1x128xf32, #tpu.memory_space<vmem>>, %arg15: memref<1x128xf32, #tpu.memory_space<vmem>>, %arg16: memref<128x128xbf16, #tpu.memory_space<vmem>>, %arg17: memref<1x128xf32, #tpu.memory_space<vmem>>, %arg18: memref<4x128xf32, #tpu.memory_space<vmem>>) attributes {dimension_semantics = [], scalar_prefetch = 0 : i64, scratch_operands = 0 : i64, tpu.core_type = #tpu.core_type<tc>} {
    %c0 = arith.constant 0 : index
    %c0_0 = arith.constant 0 : index
    %0 = vector.load %arg0[%c0, %c0_0] : memref<4x1024xf32, #tpu.memory_space<vmem>>, vector<4x1024xf32>
    %c0_1 = arith.constant 0 : index
    %c0_2 = arith.constant 0 : index
    %1 = vector.load %arg1[%c0_1, %c0_2] : memref<1x1024xf32, #tpu.memory_space<vmem>>, vector<1x1024xf32>
    %2 = vector.broadcast %1 : vector<1x1024xf32> to vector<4x1024xf32>
    %3 = arith.addf %0, %2 : vector<4x1024xf32>
    %c0_3 = arith.constant 0 : index
    %c0_4 = arith.constant 0 : index
    %4 = vector.load %arg2[%c0_3, %c0_4] : memref<1x1024xf32, #tpu.memory_space<vmem>>, vector<1x1024xf32>
    %c0_5 = arith.constant 0 : index
    %c0_6 = arith.constant 0 : index
    %5 = vector.load %arg3[%c0_5, %c0_6] : memref<1x1024xf32, #tpu.memory_space<vmem>>, vector<1x1024xf32>
    %cst = arith.constant 0.000000e+00 : f32
    %6 = vector.broadcast %cst : f32 to vector<4x1024xf32>
    %7 = arith.cmpf oge, %3, %6 : vector<4x1024xf32>
    %cst_7 = arith.constant 2.000000e-01 : f32
    %8 = vector.broadcast %cst_7 : f32 to vector<4x1024xf32>
    %9 = arith.mulf %8, %3 : vector<4x1024xf32>
    %10 = arith.select %7, %3, %9 : vector<4x1024xi1>, vector<4x1024xf32>
    %cst_8 = arith.constant dense<0.000000e+00> : vector<1024xf32>
    %11 = vector.multi_reduction <add>, %10, %cst_8 [0] : vector<4x1024xf32> to vector<1024xf32>
    %12 = vector.shape_cast %11 : vector<1024xf32> to vector<1x1024xf32>
    %cst_9 = arith.constant 4.000000e+00 : f32
    %13 = vector.broadcast %cst_9 : f32 to vector<1x1024xf32>
    %14 = arith.divf %12, %13 : vector<1x1024xf32>
    %15 = vector.broadcast %14 : vector<1x1024xf32> to vector<4x1024xf32>
    %16 = arith.subf %10, %15 : vector<4x1024xf32>
    %17 = arith.mulf %16, %16 : vector<4x1024xf32>
    %cst_10 = arith.constant dense<0.000000e+00> : vector<1024xf32>
    %18 = vector.multi_reduction <add>, %17, %cst_10 [0] : vector<4x1024xf32> to vector<1024xf32>
    %19 = vector.shape_cast %18 : vector<1024xf32> to vector<1x1024xf32>
    %cst_11 = arith.constant 4.000000e+00 : f32
    %20 = vector.broadcast %cst_11 : f32 to vector<1x1024xf32>
    %21 = arith.divf %19, %20 : vector<1x1024xf32>
    %22 = vector.broadcast %14 : vector<1x1024xf32> to vector<4x1024xf32>
    %23 = arith.subf %10, %22 : vector<4x1024xf32>
    %24 = vector.broadcast %4 : vector<1x1024xf32> to vector<4x1024xf32>
    %25 = arith.mulf %24, %23 : vector<4x1024xf32>
    %cst_12 = arith.constant 9.99999974E-6 : f32
    %26 = vector.broadcast %cst_12 : f32 to vector<1x1024xf32>
    %27 = arith.addf %21, %26 : vector<1x1024xf32>
    %28 = math.rsqrt %27 : vector<1x1024xf32>
    %29 = vector.broadcast %28 : vector<1x1024xf32> to vector<4x1024xf32>
    %30 = arith.mulf %25, %29 : vector<4x1024xf32>
    %31 = vector.broadcast %5 : vector<1x1024xf32> to vector<4x1024xf32>
    %32 = arith.addf %30, %31 : vector<4x1024xf32>
    %c0_13 = arith.constant 0 : index
    %c0_14 = arith.constant 0 : index
    %33 = vector.load %arg4[%c0_13, %c0_14] : memref<1024x512xbf16, #tpu.memory_space<vmem>>, vector<1024x512xbf16>
    %c0_15 = arith.constant 0 : index
    %c0_16 = arith.constant 0 : index
    %34 = vector.load %arg5[%c0_15, %c0_16] : memref<1x512xf32, #tpu.memory_space<vmem>>, vector<1x512xf32>
    %c0_17 = arith.constant 0 : index
    %c0_18 = arith.constant 0 : index
    %35 = vector.load %arg6[%c0_17, %c0_18] : memref<1x512xf32, #tpu.memory_space<vmem>>, vector<1x512xf32>
    %c0_19 = arith.constant 0 : index
    %c0_20 = arith.constant 0 : index
    %36 = vector.load %arg7[%c0_19, %c0_20] : memref<1x512xf32, #tpu.memory_space<vmem>>, vector<1x512xf32>
    %37 = arith.truncf %32 : vector<4x1024xf32> to vector<4x1024xbf16>
    %cst_21 = arith.constant dense<0.000000e+00> : vector<4x512xf32>
    %38 = tpu.matmul %37, %33, %cst_21 {dimension_numbers = #tpu.dot_dimension_numbers<[1], [0], [0], [1], [0, 0, 1, 1], [], []>} : vector<4x1024xbf16>, vector<1024x512xbf16>, vector<4x512xf32> -> vector<4x512xf32>
    %39 = vector.broadcast %34 : vector<1x512xf32> to vector<4x512xf32>
    %40 = arith.addf %38, %39 : vector<4x512xf32>
    %cst_22 = arith.constant 0.000000e+00 : f32
    %41 = vector.broadcast %cst_22 : f32 to vector<4x512xf32>
    %42 = arith.cmpf oge, %40, %41 : vector<4x512xf32>
    %cst_23 = arith.constant 2.000000e-01 : f32
    %43 = vector.broadcast %cst_23 : f32 to vector<4x512xf32>
    %44 = arith.mulf %43, %40 : vector<4x512xf32>
    %45 = arith.select %42, %40, %44 : vector<4x512xi1>, vector<4x512xf32>
    %cst_24 = arith.constant dense<0.000000e+00> : vector<512xf32>
    %46 = vector.multi_reduction <add>, %45, %cst_24 [0] : vector<4x512xf32> to vector<512xf32>
    %47 = vector.shape_cast %46 : vector<512xf32> to vector<1x512xf32>
    %cst_25 = arith.constant 4.000000e+00 : f32
    %48 = vector.broadcast %cst_25 : f32 to vector<1x512xf32>
    %49 = arith.divf %47, %48 : vector<1x512xf32>
    %50 = vector.broadcast %49 : vector<1x512xf32> to vector<4x512xf32>
    %51 = arith.subf %45, %50 : vector<4x512xf32>
    %52 = arith.mulf %51, %51 : vector<4x512xf32>
    %cst_26 = arith.constant dense<0.000000e+00> : vector<512xf32>
    %53 = vector.multi_reduction <add>, %52, %cst_26 [0] : vector<4x512xf32> to vector<512xf32>
    %54 = vector.shape_cast %53 : vector<512xf32> to vector<1x512xf32>
    %cst_27 = arith.constant 4.000000e+00 : f32
    %55 = vector.broadcast %cst_27 : f32 to vector<1x512xf32>
    %56 = arith.divf %54, %55 : vector<1x512xf32>
    %57 = vector.broadcast %49 : vector<1x512xf32> to vector<4x512xf32>
    %58 = arith.subf %45, %57 : vector<4x512xf32>
    %59 = vector.broadcast %35 : vector<1x512xf32> to vector<4x512xf32>
    %60 = arith.mulf %59, %58 : vector<4x512xf32>
    %cst_28 = arith.constant 9.99999974E-6 : f32
    %61 = vector.broadcast %cst_28 : f32 to vector<1x512xf32>
    %62 = arith.addf %56, %61 : vector<1x512xf32>
    %63 = math.rsqrt %62 : vector<1x512xf32>
    %64 = vector.broadcast %63 : vector<1x512xf32> to vector<4x512xf32>
    %65 = arith.mulf %60, %64 : vector<4x512xf32>
    %66 = vector.broadcast %36 : vector<1x512xf32> to vector<4x512xf32>
    %67 = arith.addf %65, %66 : vector<4x512xf32>
    %c0_29 = arith.constant 0 : index
    %c0_30 = arith.constant 0 : index
    %68 = vector.load %arg8[%c0_29, %c0_30] : memref<512x256xbf16, #tpu.memory_space<vmem>>, vector<512x256xbf16>
    %c0_31 = arith.constant 0 : index
    %c0_32 = arith.constant 0 : index
    %69 = vector.load %arg9[%c0_31, %c0_32] : memref<1x256xf32, #tpu.memory_space<vmem>>, vector<1x256xf32>
    %c0_33 = arith.constant 0 : index
    %c0_34 = arith.constant 0 : index
    %70 = vector.load %arg10[%c0_33, %c0_34] : memref<1x256xf32, #tpu.memory_space<vmem>>, vector<1x256xf32>
    %c0_35 = arith.constant 0 : index
    %c0_36 = arith.constant 0 : index
    %71 = vector.load %arg11[%c0_35, %c0_36] : memref<1x256xf32, #tpu.memory_space<vmem>>, vector<1x256xf32>
    %72 = arith.truncf %67 : vector<4x512xf32> to vector<4x512xbf16>
    %cst_37 = arith.constant dense<0.000000e+00> : vector<4x256xf32>
    %73 = tpu.matmul %72, %68, %cst_37 {dimension_numbers = #tpu.dot_dimension_numbers<[1], [0], [0], [1], [0, 0, 1, 1], [], []>} : vector<4x512xbf16>, vector<512x256xbf16>, vector<4x256xf32> -> vector<4x256xf32>
    %74 = vector.broadcast %69 : vector<1x256xf32> to vector<4x256xf32>
    %75 = arith.addf %73, %74 : vector<4x256xf32>
    %cst_38 = arith.constant 0.000000e+00 : f32
    %76 = vector.broadcast %cst_38 : f32 to vector<4x256xf32>
    %77 = arith.cmpf oge, %75, %76 : vector<4x256xf32>
    %cst_39 = arith.constant 2.000000e-01 : f32
    %78 = vector.broadcast %cst_39 : f32 to vector<4x256xf32>
    %79 = arith.mulf %78, %75 : vector<4x256xf32>
    %80 = arith.select %77, %75, %79 : vector<4x256xi1>, vector<4x256xf32>
    %cst_40 = arith.constant dense<0.000000e+00> : vector<256xf32>
    %81 = vector.multi_reduction <add>, %80, %cst_40 [0] : vector<4x256xf32> to vector<256xf32>
    %82 = vector.shape_cast %81 : vector<256xf32> to vector<1x256xf32>
    %cst_41 = arith.constant 4.000000e+00 : f32
    %83 = vector.broadcast %cst_41 : f32 to vector<1x256xf32>
    %84 = arith.divf %82, %83 : vector<1x256xf32>
    %85 = vector.broadcast %84 : vector<1x256xf32> to vector<4x256xf32>
    %86 = arith.subf %80, %85 : vector<4x256xf32>
    %87 = arith.mulf %86, %86 : vector<4x256xf32>
    %cst_42 = arith.constant dense<0.000000e+00> : vector<256xf32>
    %88 = vector.multi_reduction <add>, %87, %cst_42 [0] : vector<4x256xf32> to vector<256xf32>
    %89 = vector.shape_cast %88 : vector<256xf32> to vector<1x256xf32>
    %cst_43 = arith.constant 4.000000e+00 : f32
    %90 = vector.broadcast %cst_43 : f32 to vector<1x256xf32>
    %91 = arith.divf %89, %90 : vector<1x256xf32>
    %92 = vector.broadcast %84 : vector<1x256xf32> to vector<4x256xf32>
    %93 = arith.subf %80, %92 : vector<4x256xf32>
    %94 = vector.broadcast %70 : vector<1x256xf32> to vector<4x256xf32>
    %95 = arith.mulf %94, %93 : vector<4x256xf32>
    %cst_44 = arith.constant 9.99999974E-6 : f32
    %96 = vector.broadcast %cst_44 : f32 to vector<1x256xf32>
    %97 = arith.addf %91, %96 : vector<1x256xf32>
    %98 = math.rsqrt %97 : vector<1x256xf32>
    %99 = vector.broadcast %98 : vector<1x256xf32> to vector<4x256xf32>
    %100 = arith.mulf %95, %99 : vector<4x256xf32>
    %101 = vector.broadcast %71 : vector<1x256xf32> to vector<4x256xf32>
    %102 = arith.addf %100, %101 : vector<4x256xf32>
    %c0_45 = arith.constant 0 : index
    %c0_46 = arith.constant 0 : index
    %103 = vector.load %arg12[%c0_45, %c0_46] : memref<256x128xbf16, #tpu.memory_space<vmem>>, vector<256x128xbf16>
    %c0_47 = arith.constant 0 : index
    %c0_48 = arith.constant 0 : index
    %104 = vector.load %arg13[%c0_47, %c0_48] : memref<1x128xf32, #tpu.memory_space<vmem>>, vector<1x128xf32>
    %c0_49 = arith.constant 0 : index
    %c0_50 = arith.constant 0 : index
    %105 = vector.load %arg14[%c0_49, %c0_50] : memref<1x128xf32, #tpu.memory_space<vmem>>, vector<1x128xf32>
    %c0_51 = arith.constant 0 : index
    %c0_52 = arith.constant 0 : index
    %106 = vector.load %arg15[%c0_51, %c0_52] : memref<1x128xf32, #tpu.memory_space<vmem>>, vector<1x128xf32>
    %107 = arith.truncf %102 : vector<4x256xf32> to vector<4x256xbf16>
    %cst_53 = arith.constant dense<0.000000e+00> : vector<4x128xf32>
    %108 = tpu.matmul %107, %103, %cst_53 {dimension_numbers = #tpu.dot_dimension_numbers<[1], [0], [0], [1], [0, 0, 1, 1], [], []>} : vector<4x256xbf16>, vector<256x128xbf16>, vector<4x128xf32> -> vector<4x128xf32>
    %109 = vector.broadcast %104 : vector<1x128xf32> to vector<4x128xf32>
    %110 = arith.addf %108, %109 : vector<4x128xf32>
    %cst_54 = arith.constant 0.000000e+00 : f32
    %111 = vector.broadcast %cst_54 : f32 to vector<4x128xf32>
    %112 = arith.cmpf oge, %110, %111 : vector<4x128xf32>
    %cst_55 = arith.constant 2.000000e-01 : f32
    %113 = vector.broadcast %cst_55 : f32 to vector<4x128xf32>
    %114 = arith.mulf %113, %110 : vector<4x128xf32>
    %115 = arith.select %112, %110, %114 : vector<4x128xi1>, vector<4x128xf32>
    %cst_56 = arith.constant dense<0.000000e+00> : vector<128xf32>
    %116 = vector.multi_reduction <add>, %115, %cst_56 [0] : vector<4x128xf32> to vector<128xf32>
    %117 = vector.shape_cast %116 : vector<128xf32> to vector<1x128xf32>
    %cst_57 = arith.constant 4.000000e+00 : f32
    %118 = vector.broadcast %cst_57 : f32 to vector<1x128xf32>
    %119 = arith.divf %117, %118 : vector<1x128xf32>
    %120 = vector.broadcast %119 : vector<1x128xf32> to vector<4x128xf32>
    %121 = arith.subf %115, %120 : vector<4x128xf32>
    %122 = arith.mulf %121, %121 : vector<4x128xf32>
    %cst_58 = arith.constant dense<0.000000e+00> : vector<128xf32>
    %123 = vector.multi_reduction <add>, %122, %cst_58 [0] : vector<4x128xf32> to vector<128xf32>
    %124 = vector.shape_cast %123 : vector<128xf32> to vector<1x128xf32>
    %cst_59 = arith.constant 4.000000e+00 : f32
    %125 = vector.broadcast %cst_59 : f32 to vector<1x128xf32>
    %126 = arith.divf %124, %125 : vector<1x128xf32>
    %127 = vector.broadcast %119 : vector<1x128xf32> to vector<4x128xf32>
    %128 = arith.subf %115, %127 : vector<4x128xf32>
    %129 = vector.broadcast %105 : vector<1x128xf32> to vector<4x128xf32>
    %130 = arith.mulf %129, %128 : vector<4x128xf32>
    %cst_60 = arith.constant 9.99999974E-6 : f32
    %131 = vector.broadcast %cst_60 : f32 to vector<1x128xf32>
    %132 = arith.addf %126, %131 : vector<1x128xf32>
    %133 = math.rsqrt %132 : vector<1x128xf32>
    %134 = vector.broadcast %133 : vector<1x128xf32> to vector<4x128xf32>
    %135 = arith.mulf %130, %134 : vector<4x128xf32>
    %136 = vector.broadcast %106 : vector<1x128xf32> to vector<4x128xf32>
    %137 = arith.addf %135, %136 : vector<4x128xf32>
    %138 = arith.truncf %137 : vector<4x128xf32> to vector<4x128xbf16>
    %c0_61 = arith.constant 0 : index
    %c0_62 = arith.constant 0 : index
    %139 = vector.load %arg16[%c0_61, %c0_62] : memref<128x128xbf16, #tpu.memory_space<vmem>>, vector<128x128xbf16>
    %cst_63 = arith.constant dense<0.000000e+00> : vector<4x128xf32>
    %140 = tpu.matmul %138, %139, %cst_63 {dimension_numbers = #tpu.dot_dimension_numbers<[1], [0], [0], [1], [0, 0, 1, 1], [], []>} : vector<4x128xbf16>, vector<128x128xbf16>, vector<4x128xf32> -> vector<4x128xf32>
    %c0_64 = arith.constant 0 : index
    %c0_65 = arith.constant 0 : index
    %141 = vector.load %arg17[%c0_64, %c0_65] : memref<1x128xf32, #tpu.memory_space<vmem>>, vector<1x128xf32>
    %142 = vector.broadcast %141 : vector<1x128xf32> to vector<4x128xf32>
    %143 = arith.addf %140, %142 : vector<4x128xf32>
    %c0_66 = arith.constant 0 : index
    %c0_67 = arith.constant 0 : index
    %144 = vector.load %arg18[%c0_66, %c0_67] : memref<4x128xf32, #tpu.memory_space<vmem>>, vector<4x128xf32>
    tpu.vector_store %arg18[%c0_66, %c0_67], %143 {strides = array<i32>} : memref<4x128xf32, #tpu.memory_space<vmem>>, vector<4x128xf32>,
    return
  }
}

module attributes {stable_mosaic.version = 11 : i64} {
  func.func @layer1_kernel(%arg0: i32, %arg1: i32, %arg2: memref<4x768xbf16, #tpu.memory_space<vmem>>, %arg3: memref<1x768x512xbf16, #tpu.memory_space<vmem>>, %arg4: memref<4x512xf32, #tpu.memory_space<vmem>>, %arg5: memref<4x512xf32, #tpu.memory_space<vmem>>) attributes {dimension_semantics = [#tpu.dimension_semantics<parallel>, #tpu.dimension_semantics<arbitrary>], iteration_bounds = array<i64: 2, 1>, scalar_prefetch = 0 : i64, scratch_operands = 1 : i64, tpu.core_type = #tpu.core_type<tc>, window_params = [{transform_indices = @transform_0, window_bounds = array<i64: 4, 768>}, {transform_indices = @transform_1, window_bounds = array<i64: 1, 768, 512>}, {transform_indices = @transform_2, window_bounds = array<i64: 4, 512>}]} {
    %c0_i32 = arith.constant 0 : i32
    %0 = arith.cmpi eq, %arg1, %c0_i32 : i32
    %1 = arith.extui %0 : i1 to i32
    %c0_i32_0 = arith.constant 0 : i32
    %2 = arith.cmpi ne, %1, %c0_i32_0 : i32
    scf.if %2 {
      %cst_11 = arith.constant 0.000000e+00 : f32
      %13 = vector.broadcast %cst_11 : f32 to vector<4x512xf32>
      %c0_12 = arith.constant 0 : index
      %c0_13 = arith.constant 0 : index
      %14 = vector.load %arg5[%c0_12, %c0_13] : memref<4x512xf32, #tpu.memory_space<vmem>>, vector<4x512xf32>
      tpu.vector_store %arg5[%c0_12, %c0_13], %13 {strides = array<i32>} : memref<4x512xf32, #tpu.memory_space<vmem>>, vector<4x512xf32>,
    } else {
    }
    %c0 = arith.constant 0 : index
    %c0_1 = arith.constant 0 : index
    %3 = vector.load %arg5[%c0, %c0_1] : memref<4x512xf32, #tpu.memory_space<vmem>>, vector<4x512xf32>
    %c0_2 = arith.constant 0 : index
    %c0_3 = arith.constant 0 : index
    %4 = vector.load %arg2[%c0_2, %c0_3] : memref<4x768xbf16, #tpu.memory_space<vmem>>, vector<4x768xbf16>
    %c0_4 = arith.constant 0 : index
    %c0_5 = arith.constant 0 : index
    %c0_6 = arith.constant 0 : index
    %5 = vector.load %arg3[%c0_4, %c0_5, %c0_6] : memref<1x768x512xbf16, #tpu.memory_space<vmem>>, vector<1x768x512xbf16>
    %6 = vector.shape_cast %5 : vector<1x768x512xbf16> to vector<768x512xbf16>
    %cst = arith.constant dense<0.000000e+00> : vector<4x512xf32>
    %7 = tpu.matmul %4, %6, %cst {dimension_numbers = #tpu.dot_dimension_numbers<[1], [0], [0], [1], [0, 0, 1, 1], [], []>} : vector<4x768xbf16>, vector<768x512xbf16>, vector<4x512xf32> -> vector<4x512xf32>
    %8 = arith.addf %3, %7 : vector<4x512xf32>
    %c0_7 = arith.constant 0 : index
    %c0_8 = arith.constant 0 : index
    %9 = vector.load %arg5[%c0_7, %c0_8] : memref<4x512xf32, #tpu.memory_space<vmem>>, vector<4x512xf32>
    tpu.vector_store %arg5[%c0_7, %c0_8], %8 {strides = array<i32>} : memref<4x512xf32, #tpu.memory_space<vmem>>, vector<4x512xf32>,
    %c0_i32_9 = arith.constant 0 : i32
    %10 = arith.cmpi eq, %arg1, %c0_i32_9 : i32
    %11 = arith.extui %10 : i1 to i32
    %c0_i32_10 = arith.constant 0 : i32
    %12 = arith.cmpi ne, %11, %c0_i32_10 : i32
    scf.if %12 {
      %c0_11 = arith.constant 0 : index
      %c0_12 = arith.constant 0 : index
      %13 = vector.load %arg5[%c0_11, %c0_12] : memref<4x512xf32, #tpu.memory_space<vmem>>, vector<4x512xf32>
      %c0_13 = arith.constant 0 : index
      %c0_14 = arith.constant 0 : index
      %14 = vector.load %arg4[%c0_13, %c0_14] : memref<4x512xf32, #tpu.memory_space<vmem>>, vector<4x512xf32>
      tpu.vector_store %arg4[%c0_13, %c0_14], %13 {strides = array<i32>} : memref<4x512xf32, #tpu.memory_space<vmem>>, vector<4x512xf32>,
    } else {
    }
    return
  }
  func.func @transform_0(%arg0: i32, %arg1: i32) -> (i32, i32) {
    %c0_i32 = arith.constant 0 : i32
    %c0_i32_0 = arith.constant 0 : i32
    return %c0_i32, %arg1 : i32, i32
  }
  func.func @transform_1(%arg0: i32, %arg1: i32) -> (i32, i32, i32) {
    %c0_i32 = arith.constant 0 : i32
    %c0_i32_0 = arith.constant 0 : i32
    return %arg0, %arg1, %c0_i32 : i32, i32, i32
  }
  func.func @transform_2(%arg0: i32, %arg1: i32) -> (i32, i32) {
    %c0_i32 = arith.constant 0 : i32
    %c0_i32_0 = arith.constant 0 : i32
    return %c0_i32, %arg0 : i32, i32
  }
}

</mosaic_0001>

<llo_original>
// kernel: encoder_forward.2
$region0: #{encoder_forward.2}
  #allocation0 [shape = 'u32[]', space=smem, size = 0x4, offset = 0x4, fixed_abs, tag = 'smem constant byte address 0x4 - core index']
  #allocation1 [shape = 'u32[144,128]{1,0:T(1,128)}', space=vmem, size = 0x12000, scoped, tag = 'internal scratch']
  #allocation2 [shape = 'f32[4,512]{1,0:T(4,128)}', space=vmem, size = 0x2000, scoped, tag = 'scratch operand']
  %s0 = inlined_call_operand.vmem [shape: bf16[4,768], index: 0, kind: input, shape index: {}]
  %s1 = inlined_call_operand.hbm [shape: bf16[2,768,512], index: 1, kind: input, shape index: {}]
  %s2 = inlined_call_operand.vmem [shape: f32[4,1024], index: 2, kind: output, shape index: {}]
  %s3 = sld [smem:[#allocation0]]
  $region53: #{encoder_forward.2} parent=0
    _
  %s5 = ssub.s32 1, %s3
  %s6 = scalar_select 0, %s5, %s3
  $region1: #{encoder_forward.2} parent=0
    #allocation3 [shape = 'u8[1572864]{0}', space=vmem, size = 0x180000, scoped, tag = 'input window, operand 1']
    #allocation4 [shape = 's32[2]{0}', space=sflag, size = 0x8, scoped, tag = 'scoped memory for encoder_forward.2']
    %7 = vsyncpa [#allocation4], 0
    %s8 = scalar_lea.sflag [#allocation4], 1
    %9 = vsyncpa %s8, 0
    loop: start=0, step=1, limit=4
    $region2: #{encoder_forward.2} parent=1 // loop_pre_header
      _
    $region3: #{encoder_forward.2} parent=1 // loop_header
      %s11 = sphi 0, %s15
      %p12 = scmp.ge.s32.totalorder %s11, 4
      %s18 = sphi 0, %s30
      %s19 = sphi 0, %s26
      %s20 = sphi 0, %s18
      %s21 = sphi 0, %s19
      %s22 = sphi 0, %s20
      %s23 = sphi 0, %s21
      %s33 = sphi 0, %s35
      %s36 = sphi 0, %s33
      %s37 = sphi 0, %s36
      %s53 = sphi 0, %s37
      %s61 = sphi 0, %s63
      %s64 = sphi 0, %s61
      %s65 = sphi 0, %s64
      %s81 = sphi 0, %s65
      %s87 = sphi 0, %s89
      %s90 = sphi 0, %s87
      %s91 = sphi 0, %s90
      %s107 = sphi 0, %s91
    $region4: #{encoder_forward.2} parent=1 // loop_header_branch
      %14 = sbr.rel (%p12) target = $region8
    $region5: #{encoder_forward.2} parent=1 // loop_body
      %s16 = ssub.s32 %s11, 1
      %s17 = ssub.s32 %s11, 2
      %s24 = sadd.s32 1, %s19
      %p25 = scmp.ge.s32.totalorder %s24, 1
      %s26 = scalar_select %p25, 0, %s24
      %s27 = sadd.s32 1, %s18
      %s28 = scalar_select %p25, %s27, %s18
      %p29 = scmp.ge.s32.totalorder %s28, 2
      %s30 = scalar_select %p29, 0, %s28
      %s31 = ssub.s32 %s19, %s26
      %p32 = scmp.eq.s32.totalorder %s31, 0
      %s34 = sadd.s32 %s33, 1
      %s35 = scalar_select %p32, %s33, %s34
      %p38 = pneg %p32
      %p39 = scmp.eq.s32.totalorder %s11, 1
      %p40 = por %p38, %p39
      %p41 = scmp.ne.s32.totalorder %s33, %s36
      %p42 = scmp.eq.s32.totalorder %s11, 0
      %p43 = por %p41, %p42
      %p44 = scmp.ne.s32.totalorder %s33, %s36
      %p45 = scmp.eq.s32.totalorder %s16, 1
      %p46 = por %p44, %p45
      %p47 = scmp.ne.s32.totalorder %s36, %s37
      %p48 = scmp.eq.s32.totalorder %s16, 0
      %p49 = por %p47, %p48
      %p50 = scmp.ne.s32.totalorder %s36, %s37
      %p51 = scmp.eq.s32.totalorder %s17, 1
      %p52 = por %p50, %p51
      %p54 = scmp.ne.s32.totalorder %s37, %s53
      %p55 = scmp.eq.s32.totalorder %s17, 0
      %p56 = por %p54, %p55
      %s57 = ssub.s32 %s18, %s30
      %s58 = ssub.s32 %s19, %s26
      %s59 = sor.u32 %s57, %s58
      %p60 = scmp.eq.s32.totalorder %s59, 0
      %s62 = sadd.s32 %s61, 1
      %s63 = scalar_select %p60, %s61, %s62
      %p66 = pneg %p60
      %p67 = scmp.eq.s32.totalorder %s11, 1
      %p68 = por %p66, %p67
      %p69 = scmp.ne.s32.totalorder %s61, %s64
      %p70 = scmp.eq.s32.totalorder %s11, 0
      %p71 = por %p69, %p70
      %p72 = scmp.ne.s32.totalorder %s61, %s64
      %p73 = scmp.eq.s32.totalorder %s16, 1
      %p74 = por %p72, %p73
      %p75 = scmp.ne.s32.totalorder %s64, %s65
      %p76 = scmp.eq.s32.totalorder %s16, 0
      %p77 = por %p75, %p76
      %p78 = scmp.ne.s32.totalorder %s64, %s65
      %p79 = scmp.eq.s32.totalorder %s17, 1
      %p80 = por %p78, %p79
      %p82 = scmp.ne.s32.totalorder %s65, %s81
      %p83 = scmp.eq.s32.totalorder %s17, 0
      %p84 = por %p82, %p83
      %s85 = ssub.s32 %s18, %s30
      %p86 = scmp.eq.s32.totalorder %s85, 0
      %s88 = sadd.s32 %s87, 1
      %s89 = scalar_select %p86, %s87, %s88
      %p92 = pneg %p86
      %p93 = scmp.eq.s32.totalorder %s11, 1
      %p94 = por %p92, %p93
      %p95 = scmp.ne.s32.totalorder %s87, %s90
      %p96 = scmp.eq.s32.totalorder %s11, 0
      %p97 = por %p95, %p96
      %p98 = scmp.ne.s32.totalorder %s87, %s90
      %p99 = scmp.eq.s32.totalorder %s16, 1
      %p100 = por %p98, %p99
      %p101 = scmp.ne.s32.totalorder %s90, %s91
      %p102 = scmp.eq.s32.totalorder %s16, 0
      %p103 = por %p101, %p102
      %p104 = scmp.ne.s32.totalorder %s90, %s91
      %p105 = scmp.eq.s32.totalorder %s17, 1
      %p106 = por %p104, %p105
      %p108 = scmp.ne.s32.totalorder %s91, %s107
      %p109 = scmp.eq.s32.totalorder %s17, 0
      %p110 = por %p108, %p109
      %p111 = scmp.le.s32.totalorder 1, %s11
      %p112 = scmp.lt.s32.totalorder %s11, 3
      %p113 = pnand %p111, %p112
      %p114 = pneg %p113
      // Predicated region
      $region9: #{encoder_forward.2} parent=5 // pred_check
        _
      $region10: #{encoder_forward.2} parent=5 // pred_check_branch
        %116 = sbr.rel (%p113) target = $region12
      $region11: #{encoder_forward.2} parent=5 // pred_region
        %s117 = ssub.s32 %s11, 1
        // Predicated region
        $region13: #{encoder_forward.2} parent=11 // pred_check
          %p118 = pneg %p49
        $region14: #{encoder_forward.2} parent=11 // pred_check_branch
          %120 = sbr.rel (%p118) target = $region16
        $region15: #{encoder_forward.2} parent=11 // pred_region
          %s121 = smul.u32 6, %s21
          %p122 = scmp.lt.s32.totalorder %s121, 5
          %s123 = scalar_select %p122, %s121, 5
          %s124 = smul.addr %s123, 2
          %s125 = scalar_lea.vmem %s0, %s124
          %s126 = smul.u32 6, %s21
        $region16: #{encoder_forward.2} parent=11 // pred_fallthru
          _
      $region12: #{encoder_forward.2} parent=5 // pred_fallthru
        _
      %p127 = scmp.lt.s32.totalorder %s11, 2
      // Predicated region
      $region17: #{encoder_forward.2} parent=5 // pred_check
        %p128 = pneg %p127
      $region18: #{encoder_forward.2} parent=5 // pred_check_branch
        %130 = sbr.rel (%p128) target = $region20
      $region19: #{encoder_forward.2} parent=5 // pred_region
        // Predicated region
        $region21: #{encoder_forward.2} parent=19 // pred_check
          %p131 = pneg %p71
        $region22: #{encoder_forward.2} parent=19 // pred_check_branch
          %133 = sbr.rel (%p131) target = $region24
        $region23: #{encoder_forward.2} parent=19 // pred_region
          %s134 = sand.u32 %s61, 1
          %s135 = scalar_lea.sflag [#allocation4], %s134
          %s136 = sand.u32 %s61, 1
          %s137 = smul.addr %s136, 1536
          %s138 = scalar_lea.vmem [#allocation3], %s137
          %s139 = smul.u32 96, %s19
          %s141 = ssub.s32 24576, 24576
          %142 = vsyncadd %s135, %s141
          %s143 = smul.addr %s139, 4
          %s144 = smul.addr %s18, 384
          %s145 = sadd.s32 %s143, %s144
          %s146 = smul.addr %s145, 64
          %s147 = scalar_lea.hbm %s1, %s146
          %s148 = sshll.u32 %s138, 4
          %s149 = int_to_ptr.vmem [resolvable:$true] %s148
          %154 = dma.hbm_to_vmem [thread:$0]  %s147, 24576, %s149, %s135, 256, 256, 16
        $region24: #{encoder_forward.2} parent=19 // pred_fallthru
          _
      $region20: #{encoder_forward.2} parent=5 // pred_fallthru
        _
      %p155 = scmp.le.s32.totalorder 1, %s11
      %p156 = scmp.lt.s32.totalorder %s11, 3
      %p157 = pnand %p155, %p156
      %p158 = pneg %p157
      // Predicated region
      $region25: #{encoder_forward.2} parent=5 // pred_check
        _
      $region26: #{encoder_forward.2} parent=5 // pred_check_branch
        %160 = sbr.rel (%p157) target = $region28
      $region27: #{encoder_forward.2} parent=5 // pred_region
        %s161 = ssub.s32 %s11, 1
        %s162 = sand.u32 %s64, 1
        %s163 = scalar_lea.sflag [#allocation4], %s162
        %s164 = sand.u32 %s64, 1
        %s165 = smul.addr %s164, 1536
        %s166 = scalar_lea.vmem [#allocation3], %s165
        // Predicated region
        $region29: #{encoder_forward.2} parent=27 // pred_check
          %p167 = pneg %p77
        $region30: #{encoder_forward.2} parent=27 // pred_check_branch
          %169 = sbr.rel (%p167) target = $region32
        $region31: #{encoder_forward.2} parent=27 // pred_region
          %170 = dma.done %s163, 24576
        $region32: #{encoder_forward.2} parent=27 // pred_fallthru
          _
        %s171 = smul.u32 6, %s21
        %p172 = scmp.lt.s32.totalorder %s171, 5
        %s173 = scalar_select %p172, %s171, 5
        %s174 = smul.addr %s173, 2
        %s175 = scalar_lea.vmem %s0, %s174
        %p176 = pneg %p49
        %p177 = pneg %p46
        %s178 = sand.u32 %s64, 1
        %s179 = scalar_lea.sflag [#allocation4], %s178
        %s180 = sand.u32 %s64, 1
        %s181 = smul.addr %s180, 1536
        %s182 = scalar_lea.vmem [#allocation3], %s181
        %p183 = pneg %p77
        %p184 = pneg %p74
        %p185 = pneg %p103
        %p186 = pneg %p100
        %s187 = smul.u32 4, %s20
        %p188 = scmp.lt.s32.totalorder %s187, 7
        %s189 = scalar_select %p188, %s187, 7
        %s190 = smul.addr %s189, 4
        %s191 = scalar_lea.vmem %s2, %s190
        %s192 = smul.u32 6, %s21
        %p193 = scmp.lt.s32.totalorder %s192, 5
        %s194 = scalar_select %p193, %s192, 5
        %s195 = smul.addr %s194, 2
        %s196 = scalar_lea.vmem %s0, %s195
        %s197 = smul.u32 6, %s21
        %s198 = smul.u32 96, %s21
        %s199 = smul.u32 4, %s20
        %p200 = scmp.lt.s32.totalorder %s199, 7
        %s201 = scalar_select %p200, %s199, 7
        %s202 = smul.addr %s201, 4
        %s203 = scalar_lea.vmem %s2, %s202
        %s204 = smul.u32 4, %s20
        %p205 = scmp.eq.s32.totalorder %s21, 0
        // Predicated region
        $region33: #{encoder_forward.2} parent=27 // pred_check
          %p206 = pneg %p205
        $region34: #{encoder_forward.2} parent=27 // pred_check_branch
          %208 = sbr.rel (%p206) target = $region36
        $region35: #{encoder_forward.2} parent=27 // pred_region
          %209 = vst [vmem:[#allocation2] sm:$0xff] 0.0
          %210 = vst [vmem:[#allocation2 + $0x8] sm:$0xff] 0.0
        $region36: #{encoder_forward.2} parent=27 // pred_fallthru
          _
        %v211 = vld [vmem:[#allocation2] sm:$0xff]
        %v212 = vld [vmem:[#allocation2 + $0x8] sm:$0xff]
        %v213 = vld [vmem:[%s196] sm:$0xff]
        %v214 = vld [vmem:[%s196 + $0x8] sm:$0xf]
        %v215 = vld [vmem:[%s166] sm:$0xff]
        %v216 = vld [vmem:[%s166 + $0x8] sm:$0xff]
        %v217 = vld [vmem:[%s166 + $0x10] sm:$0xff]
        %v218 = vld [vmem:[%s166 + $0x18] sm:$0xff]
        %v219 = vld [vmem:[%s166 + $0x20] sm:$0xff]
        %v220 = vld [vmem:[%s166 + $0x28] sm:$0xff]
        %v221 = vld [vmem:[%s166 + $0x30] sm:$0xff]
        %v222 = vld [vmem:[%s166 + $0x38] sm:$0xff]
        %v223 = vld [vmem:[%s166 + $0x40] sm:$0xff]
        %v224 = vld [vmem:[%s166 + $0x48] sm:$0xff]
        %v225 = vld [vmem:[%s166 + $0x50] sm:$0xff]
        %v226 = vld [vmem:[%s166 + $0x58] sm:$0xff]
        %v227 = vld [vmem:[%s166 + $0x60] sm:$0xff]
        %v228 = vld [vmem:[%s166 + $0x68] sm:$0xff]
        %v229 = vld [vmem:[%s166 + $0x70] sm:$0xff]
        %v230 = vld [vmem:[%s166 + $0x78] sm:$0xff]
        %v231 = vld [vmem:[%s166 + $0x80] sm:$0xff]
        %v232 = vld [vmem:[%s166 + $0x88] sm:$0xff]
        %v233 = vld [vmem:[%s166 + $0x90] sm:$0xff]
        %v234 = vld [vmem:[%s166 + $0x98] sm:$0xff]
        %v235 = vld [vmem:[%s166 + $0xa0] sm:$0xff]
        %v236 = vld [vmem:[%s166 + $0xa8] sm:$0xff]
        %v237 = vld [vmem:[%s166 + $0xb0] sm:$0xff]
        %v238 = vld [vmem:[%s166 + $0xb8] sm:$0xff]
        %v239 = vld [vmem:[%s166 + $0xc0] sm:$0xff]
        %v240 = vld [vmem:[%s166 + $0xc8] sm:$0xff]
        %v241 = vld [vmem:[%s166 + $0xd0] sm:$0xff]
        %v242 = vld [vmem:[%s166 + $0xd8] sm:$0xff]
        %v243 = vld [vmem:[%s166 + $0xe0] sm:$0xff]
        %v244 = vld [vmem:[%s166 + $0xe8] sm:$0xff]
        %v245 = vld [vmem:[%s166 + $0xf0] sm:$0xff]
        %v246 = vld [vmem:[%s166 + $0xf8] sm:$0xff]
        %v247 = vld [vmem:[%s166 + $0x100] sm:$0xff]
        %v248 = vld [vmem:[%s166 + $0x108] sm:$0xff]
        %v249 = vld [vmem:[%s166 + $0x110] sm:$0xff]
        %v250 = vld [vmem:[%s166 + $0x118] sm:$0xff]
        %v251 = vld [vmem:[%s166 + $0x120] sm:$0xff]
        %v252 = vld [vmem:[%s166 + $0x128] sm:$0xff]
        %v253 = vld [vmem:[%s166 + $0x130] sm:$0xff]
        %v254 = vld [vmem:[%s166 + $0x138] sm:$0xff]
        %v255 = vld [vmem:[%s166 + $0x140] sm:$0xff]
        %v256 = vld [vmem:[%s166 + $0x148] sm:$0xff]
        %v257 = vld [vmem:[%s166 + $0x150] sm:$0xff]
        %v258 = vld [vmem:[%s166 + $0x158] sm:$0xff]
        %v259 = vld [vmem:[%s166 + $0x160] sm:$0xff]
        %v260 = vld [vmem:[%s166 + $0x168] sm:$0xff]
        %v261 = vld [vmem:[%s166 + $0x170] sm:$0xff]
        %v262 = vld [vmem:[%s166 + $0x178] sm:$0xff]
        %v263 = vld [vmem:[%s166 + $0x180] sm:$0xff]
        %v264 = vld [vmem:[%s166 + $0x188] sm:$0xff]
        %v265 = vld [vmem:[%s166 + $0x190] sm:$0xff]
        %v266 = vld [vmem:[%s166 + $0x198] sm:$0xff]
        %v267 = vld [vmem:[%s166 + $0x1a0] sm:$0xff]
        %v268 = vld [vmem:[%s166 + $0x1a8] sm:$0xff]
        %v269 = vld [vmem:[%s166 + $0x1b0] sm:$0xff]
        %v270 = vld [vmem:[%s166 + $0x1b8] sm:$0xff]
        %v271 = vld [vmem:[%s166 + $0x1c0] sm:$0xff]
        %v272 = vld [vmem:[%s166 + $0x1c8] sm:$0xff]
        %v273 = vld [vmem:[%s166 + $0x1d0] sm:$0xff]
        %v274 = vld [vmem:[%s166 + $0x1d8] sm:$0xff]
        %v275 = vld [vmem:[%s166 + $0x1e0] sm:$0xff]
        %v276 = vld [vmem:[%s166 + $0x1e8] sm:$0xff]
        %v277 = vld [vmem:[%s166 + $0x1f0] sm:$0xff]
        %v278 = vld [vmem:[%s166 + $0x1f8] sm:$0xff]
        %v279 = vld [vmem:[%s166 + $0x200] sm:$0xff]
        %v280 = vld [vmem:[%s166 + $0x208] sm:$0xff]
        %v281 = vld [vmem:[%s166 + $0x210] sm:$0xff]
        %v282 = vld [vmem:[%s166 + $0x218] sm:$0xff]
        %v283 = vld [vmem:[%s166 + $0x220] sm:$0xff]
        %v284 = vld [vmem:[%s166 + $0x228] sm:$0xff]
        %v285 = vld [vmem:[%s166 + $0x230] sm:$0xff]
        %v286 = vld [vmem:[%s166 + $0x238] sm:$0xff]
        %v287 = vld [vmem:[%s166 + $0x240] sm:$0xff]
        %v288 = vld [vmem:[%s166 + $0x248] sm:$0xff]
        %v289 = vld [vmem:[%s166 + $0x250] sm:$0xff]
        %v290 = vld [vmem:[%s166 + $0x258] sm:$0xff]
        %v291 = vld [vmem:[%s166 + $0x260] sm:$0xff]
        %v292 = vld [vmem:[%s166 + $0x268] sm:$0xff]
        %v293 = vld [vmem:[%s166 + $0x270] sm:$0xff]
        %v294 = vld [vmem:[%s166 + $0x278] sm:$0xff]
        %v295 = vld [vmem:[%s166 + $0x280] sm:$0xff]
        %v296 = vld [vmem:[%s166 + $0x288] sm:$0xff]
        %v297 = vld [vmem:[%s166 + $0x290] sm:$0xff]
        %v298 = vld [vmem:[%s166 + $0x298] sm:$0xff]
        %v299 = vld [vmem:[%s166 + $0x2a0] sm:$0xff]
        %v300 = vld [vmem:[%s166 + $0x2a8] sm:$0xff]
        %v301 = vld [vmem:[%s166 + $0x2b0] sm:$0xff]
        %v302 = vld [vmem:[%s166 + $0x2b8] sm:$0xff]
        %v303 = vld [vmem:[%s166 + $0x2c0] sm:$0xff]
        %v304 = vld [vmem:[%s166 + $0x2c8] sm:$0xff]
        %v305 = vld [vmem:[%s166 + $0x2d0] sm:$0xff]
        %v306 = vld [vmem:[%s166 + $0x2d8] sm:$0xff]
        %v307 = vld [vmem:[%s166 + $0x2e0] sm:$0xff]
        %v308 = vld [vmem:[%s166 + $0x2e8] sm:$0xff]
        %v309 = vld [vmem:[%s166 + $0x2f0] sm:$0xff]
        %v310 = vld [vmem:[%s166 + $0x2f8] sm:$0xff]
        %v311 = vld [vmem:[%s166 + $0x300] sm:$0xff]
        %v312 = vld [vmem:[%s166 + $0x308] sm:$0xff]
        %v313 = vld [vmem:[%s166 + $0x310] sm:$0xff]
        %v314 = vld [vmem:[%s166 + $0x318] sm:$0xff]
        %v315 = vld [vmem:[%s166 + $0x320] sm:$0xff]
        %v316 = vld [vmem:[%s166 + $0x328] sm:$0xff]
        %v317 = vld [vmem:[%s166 + $0x330] sm:$0xff]
        %v318 = vld [vmem:[%s166 + $0x338] sm:$0xff]
        %v319 = vld [vmem:[%s166 + $0x340] sm:$0xff]
        %v320 = vld [vmem:[%s166 + $0x348] sm:$0xff]
        %v321 = vld [vmem:[%s166 + $0x350] sm:$0xff]
        %v322 = vld [vmem:[%s166 + $0x358] sm:$0xff]
        %v323 = vld [vmem:[%s166 + $0x360] sm:$0xff]
        %v324 = vld [vmem:[%s166 + $0x368] sm:$0xff]
        %v325 = vld [vmem:[%s166 + $0x370] sm:$0xff]
        %v326 = vld [vmem:[%s166 + $0x378] sm:$0xff]
        %v327 = vld [vmem:[%s166 + $0x380] sm:$0xff]
        %v328 = vld [vmem:[%s166 + $0x388] sm:$0xff]
        %v329 = vld [vmem:[%s166 + $0x390] sm:$0xff]
        %v330 = vld [vmem:[%s166 + $0x398] sm:$0xff]
        %v331 = vld [vmem:[%s166 + $0x3a0] sm:$0xff]
        %v332 = vld [vmem:[%s166 + $0x3a8] sm:$0xff]
        %v333 = vld [vmem:[%s166 + $0x3b0] sm:$0xff]
        %v334 = vld [vmem:[%s166 + $0x3b8] sm:$0xff]
        %v335 = vld [vmem:[%s166 + $0x3c0] sm:$0xff]
        %v336 = vld [vmem:[%s166 + $0x3c8] sm:$0xff]
        %v337 = vld [vmem:[%s166 + $0x3d0] sm:$0xff]
        %v338 = vld [vmem:[%s166 + $0x3d8] sm:$0xff]
        %v339 = vld [vmem:[%s166 + $0x3e0] sm:$0xff]
        %v340 = vld [vmem:[%s166 + $0x3e8] sm:$0xff]
        %v341 = vld [vmem:[%s166 + $0x3f0] sm:$0xff]
        %v342 = vld [vmem:[%s166 + $0x3f8] sm:$0xff]
        %v343 = vld [vmem:[%s166 + $0x400] sm:$0xff]
        %v344 = vld [vmem:[%s166 + $0x408] sm:$0xff]
        %v345 = vld [vmem:[%s166 + $0x410] sm:$0xff]
        %v346 = vld [vmem:[%s166 + $0x418] sm:$0xff]
        %v347 = vld [vmem:[%s166 + $0x420] sm:$0xff]
        %v348 = vld [vmem:[%s166 + $0x428] sm:$0xff]
        %v349 = vld [vmem:[%s166 + $0x430] sm:$0xff]
        %v350 = vld [vmem:[%s166 + $0x438] sm:$0xff]
        %v351 = vld [vmem:[%s166 + $0x440] sm:$0xff]
        %v352 = vld [vmem:[%s166 + $0x448] sm:$0xff]
        %v353 = vld [vmem:[%s166 + $0x450] sm:$0xff]
        %v354 = vld [vmem:[%s166 + $0x458] sm:$0xff]
        %v355 = vld [vmem:[%s166 + $0x460] sm:$0xff]
        %v356 = vld [vmem:[%s166 + $0x468] sm:$0xff]
        %v357 = vld [vmem:[%s166 + $0x470] sm:$0xff]
        %v358 = vld [vmem:[%s166 + $0x478] sm:$0xff]
        %v359 = vld [vmem:[%s166 + $0x480] sm:$0xff]
        %v360 = vld [vmem:[%s166 + $0x488] sm:$0xff]
        %v361 = vld [vmem:[%s166 + $0x490] sm:$0xff]
        %v362 = vld [vmem:[%s166 + $0x498] sm:$0xff]
        %v363 = vld [vmem:[%s166 + $0x4a0] sm:$0xff]
        %v364 = vld [vmem:[%s166 + $0x4a8] sm:$0xff]
        %v365 = vld [vmem:[%s166 + $0x4b0] sm:$0xff]
        %v366 = vld [vmem:[%s166 + $0x4b8] sm:$0xff]
        %v367 = vld [vmem:[%s166 + $0x4c0] sm:$0xff]
        %v368 = vld [vmem:[%s166 + $0x4c8] sm:$0xff]
        %v369 = vld [vmem:[%s166 + $0x4d0] sm:$0xff]
        %v370 = vld [vmem:[%s166 + $0x4d8] sm:$0xff]
        %v371 = vld [vmem:[%s166 + $0x4e0] sm:$0xff]
        %v372 = vld [vmem:[%s166 + $0x4e8] sm:$0xff]
        %v373 = vld [vmem:[%s166 + $0x4f0] sm:$0xff]
        %v374 = vld [vmem:[%s166 + $0x4f8] sm:$0xff]
        %v375 = vld [vmem:[%s166 + $0x500] sm:$0xff]
        %v376 = vld [vmem:[%s166 + $0x508] sm:$0xff]
        %v377 = vld [vmem:[%s166 + $0x510] sm:$0xff]
        %v378 = vld [vmem:[%s166 + $0x518] sm:$0xff]
        %v379 = vld [vmem:[%s166 + $0x520] sm:$0xff]
        %v380 = vld [vmem:[%s166 + $0x528] sm:$0xff]
        %v381 = vld [vmem:[%s166 + $0x530] sm:$0xff]
        %v382 = vld [vmem:[%s166 + $0x538] sm:$0xff]
        %v383 = vld [vmem:[%s166 + $0x540] sm:$0xff]
        %v384 = vld [vmem:[%s166 + $0x548] sm:$0xff]
        %v385 = vld [vmem:[%s166 + $0x550] sm:$0xff]
        %v386 = vld [vmem:[%s166 + $0x558] sm:$0xff]
        %v387 = vld [vmem:[%s166 + $0x560] sm:$0xff]
        %v388 = vld [vmem:[%s166 + $0x568] sm:$0xff]
        %v389 = vld [vmem:[%s166 + $0x570] sm:$0xff]
        %v390 = vld [vmem:[%s166 + $0x578] sm:$0xff]
        %v391 = vld [vmem:[%s166 + $0x580] sm:$0xff]
        %v392 = vld [vmem:[%s166 + $0x588] sm:$0xff]
        %v393 = vld [vmem:[%s166 + $0x590] sm:$0xff]
        %v394 = vld [vmem:[%s166 + $0x598] sm:$0xff]
        %v395 = vld [vmem:[%s166 + $0x5a0] sm:$0xff]
        %v396 = vld [vmem:[%s166 + $0x5a8] sm:$0xff]
        %v397 = vld [vmem:[%s166 + $0x5b0] sm:$0xff]
        %v398 = vld [vmem:[%s166 + $0x5b8] sm:$0xff]
        %v399 = vld [vmem:[%s166 + $0x5c0] sm:$0xff]
        %v400 = vld [vmem:[%s166 + $0x5c8] sm:$0xff]
        %v401 = vld [vmem:[%s166 + $0x5d0] sm:$0xff]
        %v402 = vld [vmem:[%s166 + $0x5d8] sm:$0xff]
        %v403 = vld [vmem:[%s166 + $0x5e0] sm:$0xff]
        %v404 = vld [vmem:[%s166 + $0x5e8] sm:$0xff]
        %v405 = vld [vmem:[%s166 + $0x5f0] sm:$0xff]
        %v406 = vld [vmem:[%s166 + $0x5f8] sm:$0xff]
        %v409 = vcombine.high %v213, %v213
        %v411 = vunpack.c.l.s4 1983009808
        %v412 = vunpack.c.0.s8 %v411
        %v413 = vlaneseq
        %v414 = vshrl.u32 %v413, 7
        %v415 = vsub.s32 %v412, %v414
        %v416 = vrot.slane %v213, %v415
        %v418 = vunpack.c.l.s4 1983009808
        %v419 = vunpack.c.0.s8 %v418
        %v420 = vlaneseq
        %v421 = vshrl.u32 %v420, 7
        %v422 = vsub.s32 %v419, %v421
        %v423 = vrot.slane %v409, %v422
        %v424 = vcombine.high %v416, %v416
        %v425 = vcombine.high %v423, %v423
        %v427 = vunpack.c.l.s4 1983009808
        %v428 = vunpack.c.0.s8 %v427
        %v429 = vlaneseq
        %v430 = vshrl.u32 %v429, 7
        %v431 = vsub.s32 %v428, %v430
        %v432 = vrot.slane %v214, %v431
        %v433 = vcombine.high %v432, %v432
        %v632 = vunpack.c.l.b16 %v215
        %v633 = vunpack.c.h.b16 %v215
        %v634 = vunpack.c.l.b16 %v216
        %v635 = vunpack.c.h.b16 %v216
        %v636 = vunpack.c.l.b16 %v217
        %v637 = vunpack.c.h.b16 %v217
        %v638 = vunpack.c.l.b16 %v218
        %v639 = vunpack.c.h.b16 %v218
        %v640 = vunpack.c.l.b16 %v219
        %v641 = vunpack.c.h.b16 %v219
        %v642 = vunpack.c.l.b16 %v220
        %v643 = vunpack.c.h.b16 %v220
        %v644 = vunpack.c.l.b16 %v221
        %v645 = vunpack.c.h.b16 %v221
        %v646 = vunpack.c.l.b16 %v222
        %v647 = vunpack.c.h.b16 %v222
        %v648 = vunpack.c.l.b16 %v223
        %v649 = vunpack.c.h.b16 %v223
        %v650 = vunpack.c.l.b16 %v224
        %v651 = vunpack.c.h.b16 %v224
        %v652 = vunpack.c.l.b16 %v225
        %v653 = vunpack.c.h.b16 %v225
        %v654 = vunpack.c.l.b16 %v226
        %v655 = vunpack.c.h.b16 %v226
        %v656 = vunpack.c.l.b16 %v227
        %v657 = vunpack.c.h.b16 %v227
        %v658 = vunpack.c.l.b16 %v228
        %v659 = vunpack.c.h.b16 %v228
        %v660 = vunpack.c.l.b16 %v229
        %v661 = vunpack.c.h.b16 %v229
        %v662 = vunpack.c.l.b16 %v230
        %v663 = vunpack.c.h.b16 %v230
        %v664 = vunpack.c.l.b16 %v231
        %v665 = vunpack.c.h.b16 %v231
        %v666 = vunpack.c.l.b16 %v232
        %v667 = vunpack.c.h.b16 %v232
        %v668 = vunpack.c.l.b16 %v233
        %v669 = vunpack.c.h.b16 %v233
        %v670 = vunpack.c.l.b16 %v234
        %v671 = vunpack.c.h.b16 %v234
        %v672 = vunpack.c.l.b16 %v235
        %v673 = vunpack.c.h.b16 %v235
        %v674 = vunpack.c.l.b16 %v236
        %v675 = vunpack.c.h.b16 %v236
        %v676 = vunpack.c.l.b16 %v237
        %v677 = vunpack.c.h.b16 %v237
        %v678 = vunpack.c.l.b16 %v238
        %v679 = vunpack.c.h.b16 %v238
        %v680 = vunpack.c.l.b16 %v239
        %v681 = vunpack.c.h.b16 %v239
        %v682 = vunpack.c.l.b16 %v240
        %v683 = vunpack.c.h.b16 %v240
        %v684 = vunpack.c.l.b16 %v241
        %v685 = vunpack.c.h.b16 %v241
        %v686 = vunpack.c.l.b16 %v242
        %v687 = vunpack.c.h.b16 %v242
        %v688 = vunpack.c.l.b16 %v243
        %v689 = vunpack.c.h.b16 %v243
        %v690 = vunpack.c.l.b16 %v244
        %v691 = vunpack.c.h.b16 %v244
        %v692 = vunpack.c.l.b16 %v245
        %v693 = vunpack.c.h.b16 %v245
        %v694 = vunpack.c.l.b16 %v246
        %v695 = vunpack.c.h.b16 %v246
        %v696 = vunpack.c.l.b16 %v247
        %v697 = vunpack.c.h.b16 %v247
        %v698 = vunpack.c.l.b16 %v248
        %v699 = vunpack.c.h.b16 %v248
        %v700 = vunpack.c.l.b16 %v249
        %v701 = vunpack.c.h.b16 %v249
        %v702 = vunpack.c.l.b16 %v250
        %v703 = vunpack.c.h.b16 %v250
        %v704 = vunpack.c.l.b16 %v251
        %v705 = vunpack.c.h.b16 %v251
        %v706 = vunpack.c.l.b16 %v252
        %v707 = vunpack.c.h.b16 %v252
        %v708 = vunpack.c.l.b16 %v253
        %v709 = vunpack.c.h.b16 %v253
        %v710 = vunpack.c.l.b16 %v254
        %v711 = vunpack.c.h.b16 %v254
        %v712 = vunpack.c.l.b16 %v255
        %v713 = vunpack.c.h.b16 %v255
        %v714 = vunpack.c.l.b16 %v256
        %v715 = vunpack.c.h.b16 %v256
        %v716 = vunpack.c.l.b16 %v257
        %v717 = vunpack.c.h.b16 %v257
        %v718 = vunpack.c.l.b16 %v258
        %v719 = vunpack.c.h.b16 %v258
        %v720 = vunpack.c.l.b16 %v259
        %v721 = vunpack.c.h.b16 %v259
        %v722 = vunpack.c.l.b16 %v260
        %v723 = vunpack.c.h.b16 %v260
        %v724 = vunpack.c.l.b16 %v261
        %v725 = vunpack.c.h.b16 %v261
        %v726 = vunpack.c.l.b16 %v262
        %v727 = vunpack.c.h.b16 %v262
        %v728 = vunpack.c.l.b16 %v263
        %v729 = vunpack.c.h.b16 %v263
        %v730 = vunpack.c.l.b16 %v264
        %v731 = vunpack.c.h.b16 %v264
        %v732 = vunpack.c.l.b16 %v265
        %v733 = vunpack.c.h.b16 %v265
        %v734 = vunpack.c.l.b16 %v266
        %v735 = vunpack.c.h.b16 %v266
        %v736 = vunpack.c.l.b16 %v267
        %v737 = vunpack.c.h.b16 %v267
        %v738 = vunpack.c.l.b16 %v268
        %v739 = vunpack.c.h.b16 %v268
        %v740 = vunpack.c.l.b16 %v269
        %v741 = vunpack.c.h.b16 %v269
        %v742 = vunpack.c.l.b16 %v270
        %v743 = vunpack.c.h.b16 %v270
        %v744 = vunpack.c.l.b16 %v271
        %v745 = vunpack.c.h.b16 %v271
        %v746 = vunpack.c.l.b16 %v272
        %v747 = vunpack.c.h.b16 %v272
        %v748 = vunpack.c.l.b16 %v273
        %v749 = vunpack.c.h.b16 %v273
        %v750 = vunpack.c.l.b16 %v274
        %v751 = vunpack.c.h.b16 %v274
        %v752 = vunpack.c.l.b16 %v275
        %v753 = vunpack.c.h.b16 %v275
        %v754 = vunpack.c.l.b16 %v276
        %v755 = vunpack.c.h.b16 %v276
        %v756 = vunpack.c.l.b16 %v277
        %v757 = vunpack.c.h.b16 %v277
        %v758 = vunpack.c.l.b16 %v278
        %v759 = vunpack.c.h.b16 %v278
        %v760 = vunpack.c.l.b16 %v279
        %v761 = vunpack.c.h.b16 %v279
        %v762 = vunpack.c.l.b16 %v280
        %v763 = vunpack.c.h.b16 %v280
        %v764 = vunpack.c.l.b16 %v281
        %v765 = vunpack.c.h.b16 %v281
        %v766 = vunpack.c.l.b16 %v282
        %v767 = vunpack.c.h.b16 %v282
        %v768 = vunpack.c.l.b16 %v283
        %v769 = vunpack.c.h.b16 %v283
        %v770 = vunpack.c.l.b16 %v284
        %v771 = vunpack.c.h.b16 %v284
        %v772 = vunpack.c.l.b16 %v285
        %v773 = vunpack.c.h.b16 %v285
        %v774 = vunpack.c.l.b16 %v286
        %v775 = vunpack.c.h.b16 %v286
        %v776 = vunpack.c.l.b16 %v287
        %v777 = vunpack.c.h.b16 %v287
        %v778 = vunpack.c.l.b16 %v288
        %v779 = vunpack.c.h.b16 %v288
        %v780 = vunpack.c.l.b16 %v289
        %v781 = vunpack.c.h.b16 %v289
        %v782 = vunpack.c.l.b16 %v290
        %v783 = vunpack.c.h.b16 %v290
        %v784 = vunpack.c.l.b16 %v291
        %v785 = vunpack.c.h.b16 %v291
        %v786 = vunpack.c.l.b16 %v292
        %v787 = vunpack.c.h.b16 %v292
        %v788 = vunpack.c.l.b16 %v293
        %v789 = vunpack.c.h.b16 %v293
        %v790 = vunpack.c.l.b16 %v294
        %v791 = vunpack.c.h.b16 %v294
        %v792 = vunpack.c.l.b16 %v295
        %v793 = vunpack.c.h.b16 %v295
        %v794 = vunpack.c.l.b16 %v296
        %v795 = vunpack.c.h.b16 %v296
        %v796 = vunpack.c.l.b16 %v297
        %v797 = vunpack.c.h.b16 %v297
        %v798 = vunpack.c.l.b16 %v298
        %v799 = vunpack.c.h.b16 %v298
        %v800 = vunpack.c.l.b16 %v299
        %v801 = vunpack.c.h.b16 %v299
        %v802 = vunpack.c.l.b16 %v300
        %v803 = vunpack.c.h.b16 %v300
        %v804 = vunpack.c.l.b16 %v301
        %v805 = vunpack.c.h.b16 %v301
        %v806 = vunpack.c.l.b16 %v302
        %v807 = vunpack.c.h.b16 %v302
        %v808 = vunpack.c.l.b16 %v303
        %v809 = vunpack.c.h.b16 %v303
        %v810 = vunpack.c.l.b16 %v304
        %v811 = vunpack.c.h.b16 %v304
        %v812 = vunpack.c.l.b16 %v305
        %v813 = vunpack.c.h.b16 %v305
        %v814 = vunpack.c.l.b16 %v306
        %v815 = vunpack.c.h.b16 %v306
        %v816 = vunpack.c.l.b16 %v307
        %v817 = vunpack.c.h.b16 %v307
        %v818 = vunpack.c.l.b16 %v308
        %v819 = vunpack.c.h.b16 %v308
        %v820 = vunpack.c.l.b16 %v309
        %v821 = vunpack.c.h.b16 %v309
        %v822 = vunpack.c.l.b16 %v310
        %v823 = vunpack.c.h.b16 %v310
        %v824 = vunpack.c.l.b16 %v311
        %v825 = vunpack.c.h.b16 %v311
        %v826 = vunpack.c.l.b16 %v312
        %v827 = vunpack.c.h.b16 %v312
        %v828 = vunpack.c.l.b16 %v313
        %v829 = vunpack.c.h.b16 %v313
        %v830 = vunpack.c.l.b16 %v314
        %v831 = vunpack.c.h.b16 %v314
        %v832 = vunpack.c.l.b16 %v315
        %v833 = vunpack.c.h.b16 %v315
        %v834 = vunpack.c.l.b16 %v316
        %v835 = vunpack.c.h.b16 %v316
        %v836 = vunpack.c.l.b16 %v317
        %v837 = vunpack.c.h.b16 %v317
        %v838 = vunpack.c.l.b16 %v318
        %v839 = vunpack.c.h.b16 %v318
        %v840 = vunpack.c.l.b16 %v319
        %v841 = vunpack.c.h.b16 %v319
        %v842 = vunpack.c.l.b16 %v320
        %v843 = vunpack.c.h.b16 %v320
        %v844 = vunpack.c.l.b16 %v321
        %v845 = vunpack.c.h.b16 %v321
        %v846 = vunpack.c.l.b16 %v322
        %v847 = vunpack.c.h.b16 %v322
        %v848 = vunpack.c.l.b16 %v323
        %v849 = vunpack.c.h.b16 %v323
        %v850 = vunpack.c.l.b16 %v324
        %v851 = vunpack.c.h.b16 %v324
        %v852 = vunpack.c.l.b16 %v325
        %v853 = vunpack.c.h.b16 %v325
        %v854 = vunpack.c.l.b16 %v326
        %v855 = vunpack.c.h.b16 %v326
        %v856 = vunpack.c.l.b16 %v327
        %v857 = vunpack.c.h.b16 %v327
        %v858 = vunpack.c.l.b16 %v328
        %v859 = vunpack.c.h.b16 %v328
        %v860 = vunpack.c.l.b16 %v329
        %v861 = vunpack.c.h.b16 %v329
        %v862 = vunpack.c.l.b16 %v330
        %v863 = vunpack.c.h.b16 %v330
        %v864 = vunpack.c.l.b16 %v331
        %v865 = vunpack.c.h.b16 %v331
        %v866 = vunpack.c.l.b16 %v332
        %v867 = vunpack.c.h.b16 %v332
        %v868 = vunpack.c.l.b16 %v333
        %v869 = vunpack.c.h.b16 %v333
        %v870 = vunpack.c.l.b16 %v334
        %v871 = vunpack.c.h.b16 %v334
        %v872 = vunpack.c.l.b16 %v335
        %v873 = vunpack.c.h.b16 %v335
        %v874 = vunpack.c.l.b16 %v336
        %v875 = vunpack.c.h.b16 %v336
        %v876 = vunpack.c.l.b16 %v337
        %v877 = vunpack.c.h.b16 %v337
        %v878 = vunpack.c.l.b16 %v338
        %v879 = vunpack.c.h.b16 %v338
        %v880 = vunpack.c.l.b16 %v339
        %v881 = vunpack.c.h.b16 %v339
        %v882 = vunpack.c.l.b16 %v340
        %v883 = vunpack.c.h.b16 %v340
        %v884 = vunpack.c.l.b16 %v341
        %v885 = vunpack.c.h.b16 %v341
        %v886 = vunpack.c.l.b16 %v342
        %v887 = vunpack.c.h.b16 %v342
        %v888 = vunpack.c.l.b16 %v343
        %v889 = vunpack.c.h.b16 %v343
        %v890 = vunpack.c.l.b16 %v344
        %v891 = vunpack.c.h.b16 %v344
        %v892 = vunpack.c.l.b16 %v345
        %v893 = vunpack.c.h.b16 %v345
        %v894 = vunpack.c.l.b16 %v346
        %v895 = vunpack.c.h.b16 %v346
        %v896 = vunpack.c.l.b16 %v347
        %v897 = vunpack.c.h.b16 %v347
        %v898 = vunpack.c.l.b16 %v348
        %v899 = vunpack.c.h.b16 %v348
        %v900 = vunpack.c.l.b16 %v349
        %v901 = vunpack.c.h.b16 %v349
        %v902 = vunpack.c.l.b16 %v350
        %v903 = vunpack.c.h.b16 %v350
        %v904 = vunpack.c.l.b16 %v351
        %v905 = vunpack.c.h.b16 %v351
        %v906 = vunpack.c.l.b16 %v352
        %v907 = vunpack.c.h.b16 %v352
        %v908 = vunpack.c.l.b16 %v353
        %v909 = vunpack.c.h.b16 %v353
        %v910 = vunpack.c.l.b16 %v354
        %v911 = vunpack.c.h.b16 %v354
        %v912 = vunpack.c.l.b16 %v355
        %v913 = vunpack.c.h.b16 %v355
        %v914 = vunpack.c.l.b16 %v356
        %v915 = vunpack.c.h.b16 %v356
        %v916 = vunpack.c.l.b16 %v357
        %v917 = vunpack.c.h.b16 %v357
        %v918 = vunpack.c.l.b16 %v358
        %v919 = vunpack.c.h.b16 %v358
        %v920 = vunpack.c.l.b16 %v359
        %v921 = vunpack.c.h.b16 %v359
        %v922 = vunpack.c.l.b16 %v360
        %v923 = vunpack.c.h.b16 %v360
        %v924 = vunpack.c.l.b16 %v361
        %v925 = vunpack.c.h.b16 %v361
        %v926 = vunpack.c.l.b16 %v362
        %v927 = vunpack.c.h.b16 %v362
        %v928 = vunpack.c.l.b16 %v363
        %v929 = vunpack.c.h.b16 %v363
        %v930 = vunpack.c.l.b16 %v364
        %v931 = vunpack.c.h.b16 %v364
        %v932 = vunpack.c.l.b16 %v365
        %v933 = vunpack.c.h.b16 %v365
        %v934 = vunpack.c.l.b16 %v366
        %v935 = vunpack.c.h.b16 %v366
        %v936 = vunpack.c.l.b16 %v367
        %v937 = vunpack.c.h.b16 %v367
        %v938 = vunpack.c.l.b16 %v368
        %v939 = vunpack.c.h.b16 %v368
        %v940 = vunpack.c.l.b16 %v369
        %v941 = vunpack.c.h.b16 %v369
        %v942 = vunpack.c.l.b16 %v370
        %v943 = vunpack.c.h.b16 %v370
        %v944 = vunpack.c.l.b16 %v371
        %v945 = vunpack.c.h.b16 %v371
        %v946 = vunpack.c.l.b16 %v372
        %v947 = vunpack.c.h.b16 %v372
        %v948 = vunpack.c.l.b16 %v373
        %v949 = vunpack.c.h.b16 %v373
        %v950 = vunpack.c.l.b16 %v374
        %v951 = vunpack.c.h.b16 %v374
        %v952 = vunpack.c.l.b16 %v375
        %v953 = vunpack.c.h.b16 %v375
        %v954 = vunpack.c.l.b16 %v376
        %v955 = vunpack.c.h.b16 %v376
        %v956 = vunpack.c.l.b16 %v377
        %v957 = vunpack.c.h.b16 %v377
        %v958 = vunpack.c.l.b16 %v378
        %v959 = vunpack.c.h.b16 %v378
        %v960 = vunpack.c.l.b16 %v379
        %v961 = vunpack.c.h.b16 %v379
        %v962 = vunpack.c.l.b16 %v380
        %v963 = vunpack.c.h.b16 %v380
        %v964 = vunpack.c.l.b16 %v381
        %v965 = vunpack.c.h.b16 %v381
        %v966 = vunpack.c.l.b16 %v382
        %v967 = vunpack.c.h.b16 %v382
        %v968 = vunpack.c.l.b16 %v383
        %v969 = vunpack.c.h.b16 %v383
        %v970 = vunpack.c.l.b16 %v384
        %v971 = vunpack.c.h.b16 %v384
        %v972 = vunpack.c.l.b16 %v385
        %v973 = vunpack.c.h.b16 %v385
        %v974 = vunpack.c.l.b16 %v386
        %v975 = vunpack.c.h.b16 %v386
        %v976 = vunpack.c.l.b16 %v387
        %v977 = vunpack.c.h.b16 %v387
        %v978 = vunpack.c.l.b16 %v388
        %v979 = vunpack.c.h.b16 %v388
        %v980 = vunpack.c.l.b16 %v389
        %v981 = vunpack.c.h.b16 %v389
        %v982 = vunpack.c.l.b16 %v390
        %v983 = vunpack.c.h.b16 %v390
        %v984 = vunpack.c.l.b16 %v391
        %v985 = vunpack.c.h.b16 %v391
        %v986 = vunpack.c.l.b16 %v392
        %v987 = vunpack.c.h.b16 %v392
        %v988 = vunpack.c.l.b16 %v393
        %v989 = vunpack.c.h.b16 %v393
        %v990 = vunpack.c.l.b16 %v394
        %v991 = vunpack.c.h.b16 %v394
        %v992 = vunpack.c.l.b16 %v395
        %v993 = vunpack.c.h.b16 %v395
        %v994 = vunpack.c.l.b16 %v396
        %v995 = vunpack.c.h.b16 %v396
        %v996 = vunpack.c.l.b16 %v397
        %v997 = vunpack.c.h.b16 %v397
        %v998 = vunpack.c.l.b16 %v398
        %v999 = vunpack.c.h.b16 %v398
        %v1000 = vunpack.c.l.b16 %v399
        %v1001 = vunpack.c.h.b16 %v399
        %v1002 = vunpack.c.l.b16 %v400
        %v1003 = vunpack.c.h.b16 %v400
        %v1004 = vunpack.c.l.b16 %v401
        %v1005 = vunpack.c.h.b16 %v401
        %v1006 = vunpack.c.l.b16 %v402
        %v1007 = vunpack.c.h.b16 %v402
        %v1008 = vunpack.c.l.b16 %v403
        %v1009 = vunpack.c.h.b16 %v403
        %v1010 = vunpack.c.l.b16 %v404
        %v1011 = vunpack.c.h.b16 %v404
        %v1012 = vunpack.c.l.b16 %v405
        %v1013 = vunpack.c.h.b16 %v405
        %v1014 = vunpack.c.l.b16 %v406
        %v1015 = vunpack.c.h.b16 %v406
        %v1016 = vpack.c.b16 %v636, %v632
        %v1017 = vpack.c.b16 %v637, %v633
        %v1018 = vpack.c.b16 %v638, %v634
        %v1019 = vpack.c.b16 %v639, %v635
        %v1020 = vpack.c.b16 %v644, %v640
        %v1021 = vpack.c.b16 %v645, %v641
        %v1022 = vpack.c.b16 %v646, %v642
        %v1023 = vpack.c.b16 %v647, %v643
        %v1024 = vpack.c.b16 %v652, %v648
        %v1025 = vpack.c.b16 %v653, %v649
        %v1026 = vpack.c.b16 %v654, %v650
        %v1027 = vpack.c.b16 %v655, %v651
        %v1028 = vpack.c.b16 %v660, %v656
        %v1029 = vpack.c.b16 %v661, %v657
        %v1030 = vpack.c.b16 %v662, %v658
        %v1031 = vpack.c.b16 %v663, %v659
        %v1032 = vpack.c.b16 %v668, %v664
        %v1033 = vpack.c.b16 %v669, %v665
        %v1034 = vpack.c.b16 %v670, %v666
        %v1035 = vpack.c.b16 %v671, %v667
        %v1036 = vpack.c.b16 %v676, %v672
        %v1037 = vpack.c.b16 %v677, %v673
        %v1038 = vpack.c.b16 %v678, %v674
        %v1039 = vpack.c.b16 %v679, %v675
        %v1040 = vpack.c.b16 %v684, %v680
        %v1041 = vpack.c.b16 %v685, %v681
        %v1042 = vpack.c.b16 %v686, %v682
        %v1043 = vpack.c.b16 %v687, %v683
        %v1044 = vpack.c.b16 %v692, %v688
        %v1045 = vpack.c.b16 %v693, %v689
        %v1046 = vpack.c.b16 %v694, %v690
        %v1047 = vpack.c.b16 %v695, %v691
        %v1048 = vpack.c.b16 %v700, %v696
        %v1049 = vpack.c.b16 %v701, %v697
        %v1050 = vpack.c.b16 %v702, %v698
        %v1051 = vpack.c.b16 %v703, %v699
        %v1052 = vpack.c.b16 %v708, %v704
        %v1053 = vpack.c.b16 %v709, %v705
        %v1054 = vpack.c.b16 %v710, %v706
        %v1055 = vpack.c.b16 %v711, %v707
        %v1056 = vpack.c.b16 %v716, %v712
        %v1057 = vpack.c.b16 %v717, %v713
        %v1058 = vpack.c.b16 %v718, %v714
        %v1059 = vpack.c.b16 %v719, %v715
        %v1060 = vpack.c.b16 %v724, %v720
        %v1061 = vpack.c.b16 %v725, %v721
        %v1062 = vpack.c.b16 %v726, %v722
        %v1063 = vpack.c.b16 %v727, %v723
        %v1064 = vpack.c.b16 %v732, %v728
        %v1065 = vpack.c.b16 %v733, %v729
        %v1066 = vpack.c.b16 %v734, %v730
        %v1067 = vpack.c.b16 %v735, %v731
        %v1068 = vpack.c.b16 %v740, %v736
        %v1069 = vpack.c.b16 %v741, %v737
        %v1070 = vpack.c.b16 %v742, %v738
        %v1071 = vpack.c.b16 %v743, %v739
        %v1072 = vpack.c.b16 %v748, %v744
        %v1073 = vpack.c.b16 %v749, %v745
        %v1074 = vpack.c.b16 %v750, %v746
        %v1075 = vpack.c.b16 %v751, %v747
        %v1076 = vpack.c.b16 %v756, %v752
        %v1077 = vpack.c.b16 %v757, %v753
        %v1078 = vpack.c.b16 %v758, %v754
        %v1079 = vpack.c.b16 %v759, %v755
        %v1080 = vpack.c.b16 %v764, %v760
        %v1081 = vpack.c.b16 %v765, %v761
        %v1082 = vpack.c.b16 %v766, %v762
        %v1083 = vpack.c.b16 %v767, %v763
        %v1084 = vpack.c.b16 %v772, %v768
        %v1085 = vpack.c.b16 %v773, %v769
        %v1086 = vpack.c.b16 %v774, %v770
        %v1087 = vpack.c.b16 %v775, %v771
        %v1088 = vpack.c.b16 %v780, %v776
        %v1089 = vpack.c.b16 %v781, %v777
        %v1090 = vpack.c.b16 %v782, %v778
        %v1091 = vpack.c.b16 %v783, %v779
        %v1092 = vpack.c.b16 %v788, %v784
        %v1093 = vpack.c.b16 %v789, %v785
        %v1094 = vpack.c.b16 %v790, %v786
        %v1095 = vpack.c.b16 %v791, %v787
        %v1096 = vpack.c.b16 %v796, %v792
        %v1097 = vpack.c.b16 %v797, %v793
        %v1098 = vpack.c.b16 %v798, %v794
        %v1099 = vpack.c.b16 %v799, %v795
        %v1100 = vpack.c.b16 %v804, %v800
        %v1101 = vpack.c.b16 %v805, %v801
        %v1102 = vpack.c.b16 %v806, %v802
        %v1103 = vpack.c.b16 %v807, %v803
        %v1104 = vpack.c.b16 %v812, %v808
        %v1105 = vpack.c.b16 %v813, %v809
        %v1106 = vpack.c.b16 %v814, %v810
        %v1107 = vpack.c.b16 %v815, %v811
        %v1108 = vpack.c.b16 %v820, %v816
        %v1109 = vpack.c.b16 %v821, %v817
        %v1110 = vpack.c.b16 %v822, %v818
        %v1111 = vpack.c.b16 %v823, %v819
        %v1112 = vpack.c.b16 %v828, %v824
        %v1113 = vpack.c.b16 %v829, %v825
        %v1114 = vpack.c.b16 %v830, %v826
        %v1115 = vpack.c.b16 %v831, %v827
        %v1116 = vpack.c.b16 %v836, %v832
        %v1117 = vpack.c.b16 %v837, %v833
        %v1118 = vpack.c.b16 %v838, %v834
        %v1119 = vpack.c.b16 %v839, %v835
        %v1120 = vpack.c.b16 %v844, %v840
        %v1121 = vpack.c.b16 %v845, %v841
        %v1122 = vpack.c.b16 %v846, %v842
        %v1123 = vpack.c.b16 %v847, %v843
        %v1124 = vpack.c.b16 %v852, %v848
        %v1125 = vpack.c.b16 %v853, %v849
        %v1126 = vpack.c.b16 %v854, %v850
        %v1127 = vpack.c.b16 %v855, %v851
        %v1128 = vpack.c.b16 %v860, %v856
        %v1129 = vpack.c.b16 %v861, %v857
        %v1130 = vpack.c.b16 %v862, %v858
        %v1131 = vpack.c.b16 %v863, %v859
        %v1132 = vpack.c.b16 %v868, %v864
        %v1133 = vpack.c.b16 %v869, %v865
        %v1134 = vpack.c.b16 %v870, %v866
        %v1135 = vpack.c.b16 %v871, %v867
        %v1136 = vpack.c.b16 %v876, %v872
        %v1137 = vpack.c.b16 %v877, %v873
        %v1138 = vpack.c.b16 %v878, %v874
        %v1139 = vpack.c.b16 %v879, %v875
        %v1140 = vpack.c.b16 %v884, %v880
        %v1141 = vpack.c.b16 %v885, %v881
        %v1142 = vpack.c.b16 %v886, %v882
        %v1143 = vpack.c.b16 %v887, %v883
        %v1144 = vpack.c.b16 %v892, %v888
        %v1145 = vpack.c.b16 %v893, %v889
        %v1146 = vpack.c.b16 %v894, %v890
        %v1147 = vpack.c.b16 %v895, %v891
        %v1148 = vpack.c.b16 %v900, %v896
        %v1149 = vpack.c.b16 %v901, %v897
        %v1150 = vpack.c.b16 %v902, %v898
        %v1151 = vpack.c.b16 %v903, %v899
        %v1152 = vpack.c.b16 %v908, %v904
        %v1153 = vpack.c.b16 %v909, %v905
        %v1154 = vpack.c.b16 %v910, %v906
        %v1155 = vpack.c.b16 %v911, %v907
        %v1156 = vpack.c.b16 %v916, %v912
        %v1157 = vpack.c.b16 %v917, %v913
        %v1158 = vpack.c.b16 %v918, %v914
        %v1159 = vpack.c.b16 %v919, %v915
        %v1160 = vpack.c.b16 %v924, %v920
        %v1161 = vpack.c.b16 %v925, %v921
        %v1162 = vpack.c.b16 %v926, %v922
        %v1163 = vpack.c.b16 %v927, %v923
        %v1164 = vpack.c.b16 %v932, %v928
        %v1165 = vpack.c.b16 %v933, %v929
        %v1166 = vpack.c.b16 %v934, %v930
        %v1167 = vpack.c.b16 %v935, %v931
        %v1168 = vpack.c.b16 %v940, %v936
        %v1169 = vpack.c.b16 %v941, %v937
        %v1170 = vpack.c.b16 %v942, %v938
        %v1171 = vpack.c.b16 %v943, %v939
        %v1172 = vpack.c.b16 %v948, %v944
        %v1173 = vpack.c.b16 %v949, %v945
        %v1174 = vpack.c.b16 %v950, %v946
        %v1175 = vpack.c.b16 %v951, %v947
        %v1176 = vpack.c.b16 %v956, %v952
        %v1177 = vpack.c.b16 %v957, %v953
        %v1178 = vpack.c.b16 %v958, %v954
        %v1179 = vpack.c.b16 %v959, %v955
        %v1180 = vpack.c.b16 %v964, %v960
        %v1181 = vpack.c.b16 %v965, %v961
        %v1182 = vpack.c.b16 %v966, %v962
        %v1183 = vpack.c.b16 %v967, %v963
        %v1184 = vpack.c.b16 %v972, %v968
        %v1185 = vpack.c.b16 %v973, %v969
        %v1186 = vpack.c.b16 %v974, %v970
        %v1187 = vpack.c.b16 %v975, %v971
        %v1188 = vpack.c.b16 %v980, %v976
        %v1189 = vpack.c.b16 %v981, %v977
        %v1190 = vpack.c.b16 %v982, %v978
        %v1191 = vpack.c.b16 %v983, %v979
        %v1192 = vpack.c.b16 %v988, %v984
        %v1193 = vpack.c.b16 %v989, %v985
        %v1194 = vpack.c.b16 %v990, %v986
        %v1195 = vpack.c.b16 %v991, %v987
        %v1196 = vpack.c.b16 %v996, %v992
        %v1197 = vpack.c.b16 %v997, %v993
        %v1198 = vpack.c.b16 %v998, %v994
        %v1199 = vpack.c.b16 %v999, %v995
        %v1200 = vpack.c.b16 %v1004, %v1000
        %v1201 = vpack.c.b16 %v1005, %v1001
        %v1202 = vpack.c.b16 %v1006, %v1002
        %v1203 = vpack.c.b16 %v1007, %v1003
        %v1204 = vpack.c.b16 %v1012, %v1008
        %v1205 = vpack.c.b16 %v1013, %v1009
        %v1206 = vpack.c.b16 %v1014, %v1010
        %v1207 = vpack.c.b16 %v1015, %v1011
        %1400 = vmatprep.subr.bf16.mxu0 %v1017
        %1401 = vmatpush1.bf16.msra.mxu0 %v1016
        %1402 = vmatprep.subr.bf16.mxu0 %v1021
        %1403 = vmatpush1.bf16.msra.mxu0 %v1020
        %1404 = vmatprep.subr.bf16.mxu0 %v1025
        %1405 = vmatpush1.bf16.msra.mxu0 %v1024
        %1406 = vmatprep.subr.bf16.mxu0 %v1029
        %1407 = vmatpush1.bf16.msra.mxu0 %v1028
        %1408 = vmatprep.subr.bf16.mxu0 %v1033
        %1409 = vmatpush1.bf16.msra.mxu0 %v1032
        %1410 = vmatprep.subr.bf16.mxu0 %v1037
        %1411 = vmatpush1.bf16.msra.mxu0 %v1036
        %1412 = vmatprep.subr.bf16.mxu0 %v1041
        %1413 = vmatpush1.bf16.msra.mxu0 %v1040
        %1414 = vmatprep.subr.bf16.mxu0 %v1045
        %1415 = vmatpush1.bf16.msra.mxu0 %v1044
        %1416 = vmatprep.subr.bf16.mxu0 %v1049
        %1417 = vmatpush1.bf16.msra.mxu0 %v1048
        %1418 = vmatprep.subr.bf16.mxu0 %v1053
        %1419 = vmatpush1.bf16.msra.mxu0 %v1052
        %1420 = vmatprep.subr.bf16.mxu0 %v1057
        %1421 = vmatpush1.bf16.msra.mxu0 %v1056
        %1422 = vmatprep.subr.bf16.mxu0 %v1061
        %1423 = vmatpush1.bf16.msra.mxu0 %v1060
        %1424 = vmatprep.subr.bf16.mxu0 %v1065
        %1425 = vmatpush1.bf16.msra.mxu0 %v1064
        %1426 = vmatprep.subr.bf16.mxu0 %v1069
        %1427 = vmatpush1.bf16.msra.mxu0 %v1068
        %1428 = vmatprep.subr.bf16.mxu0 %v1073
        %1429 = vmatpush1.bf16.msra.mxu0 %v1072
        %1430 = vmatprep.subr.bf16.mxu0 %v1077
        %1431 = vmatpush1.bf16.msra.mxu0 %v1076
        %1432 = vmatprep.mubr.bf16.mxu0 %v424
        %1433 = vmatmul.mubr.bf16.gmra.mrb[0].mxu0 %v416
        %v1434 = vpop.f32.mrb[0].mxu0
        %v1435 = vadd.f32 0.0, %v1434
        %v1436 = vpop.f32.mrb[0].mxu0
        %v1437 = vadd.f32 0.0, %v1436
        %v1438 = vpop.f32.mrb[0].mxu0
        %v1439 = vpop.f32.mrb[0].mxu0
        %1440 = vdwg.mxu0
        %1441 = vmatprep.subr.bf16.mxu0 %v1081
        %1442 = vmatpush1.bf16.msra.mxu0 %v1080
        %1443 = vmatprep.subr.bf16.mxu0 %v1085
        %1444 = vmatpush1.bf16.msra.mxu0 %v1084
        %1445 = vmatprep.subr.bf16.mxu0 %v1089
        %1446 = vmatpush1.bf16.msra.mxu0 %v1088
        %1447 = vmatprep.subr.bf16.mxu0 %v1093
        %1448 = vmatpush1.bf16.msra.mxu0 %v1092
        %1449 = vmatprep.subr.bf16.mxu0 %v1097
        %1450 = vmatpush1.bf16.msra.mxu0 %v1096
        %1451 = vmatprep.subr.bf16.mxu0 %v1101
        %1452 = vmatpush1.bf16.msra.mxu0 %v1100
        %1453 = vmatprep.subr.bf16.mxu0 %v1105
        %1454 = vmatpush1.bf16.msra.mxu0 %v1104
        %1455 = vmatprep.subr.bf16.mxu0 %v1109
        %1456 = vmatpush1.bf16.msra.mxu0 %v1108
        %1457 = vmatprep.subr.bf16.mxu0 %v1113
        %1458 = vmatpush1.bf16.msra.mxu0 %v1112
        %1459 = vmatprep.subr.bf16.mxu0 %v1117
        %1460 = vmatpush1.bf16.msra.mxu0 %v1116
        %1461 = vmatprep.subr.bf16.mxu0 %v1121
        %1462 = vmatpush1.bf16.msra.mxu0 %v1120
        %1463 = vmatprep.subr.bf16.mxu0 %v1125
        %1464 = vmatpush1.bf16.msra.mxu0 %v1124
        %1465 = vmatprep.subr.bf16.mxu0 %v1129
        %1466 = vmatpush1.bf16.msra.mxu0 %v1128
        %1467 = vmatprep.subr.bf16.mxu0 %v1133
        %1468 = vmatpush1.bf16.msra.mxu0 %v1132
        %1469 = vmatprep.subr.bf16.mxu0 %v1137
        %1470 = vmatpush1.bf16.msra.mxu0 %v1136
        %1471 = vmatprep.subr.bf16.mxu0 %v1141
        %1472 = vmatpush1.bf16.msra.mxu0 %v1140
        %1473 = vmatprep.mubr.bf16.mxu0 %v425
        %1474 = vmatmul.mubr.bf16.gmra.mrb[0].mxu0 %v423
        %v1475 = vpop.f32.mrb[0].mxu0
        %v1476 = vadd.f32 %v1435, %v1475
        %v1477 = vpop.f32.mrb[0].mxu0
        %v1478 = vadd.f32 %v1437, %v1477
        %v1479 = vpop.f32.mrb[0].mxu0
        %v1480 = vpop.f32.mrb[0].mxu0
        %1481 = vdwg.mxu0
        %1482 = vmatprep.subr.bf16.mxu0 %v1145
        %1483 = vmatpush1.bf16.msra.mxu0 %v1144
        %1484 = vmatprep.subr.bf16.mxu0 %v1149
        %1485 = vmatpush1.bf16.msra.mxu0 %v1148
        %1486 = vmatprep.subr.bf16.mxu0 %v1153
        %1487 = vmatpush1.bf16.msra.mxu0 %v1152
        %1488 = vmatprep.subr.bf16.mxu0 %v1157
        %1489 = vmatpush1.bf16.msra.mxu0 %v1156
        %1490 = vmatprep.subr.bf16.mxu0 %v1161
        %1491 = vmatpush1.bf16.msra.mxu0 %v1160
        %1492 = vmatprep.subr.bf16.mxu0 %v1165
        %1493 = vmatpush1.bf16.msra.mxu0 %v1164
        %1494 = vmatprep.subr.bf16.mxu0 %v1169
        %1495 = vmatpush1.bf16.msra.mxu0 %v1168
        %1496 = vmatprep.subr.bf16.mxu0 %v1173
        %1497 = vmatpush1.bf16.msra.mxu0 %v1172
        %1498 = vmatprep.subr.bf16.mxu0 %v1177
        %1499 = vmatpush1.bf16.msra.mxu0 %v1176
        %1500 = vmatprep.subr.bf16.mxu0 %v1181
        %1501 = vmatpush1.bf16.msra.mxu0 %v1180
        %1502 = vmatprep.subr.bf16.mxu0 %v1185
        %1503 = vmatpush1.bf16.msra.mxu0 %v1184
        %1504 = vmatprep.subr.bf16.mxu0 %v1189
        %1505 = vmatpush1.bf16.msra.mxu0 %v1188
        %1506 = vmatprep.subr.bf16.mxu0 %v1193
        %1507 = vmatpush1.bf16.msra.mxu0 %v1192
        %1508 = vmatprep.subr.bf16.mxu0 %v1197
        %1509 = vmatpush1.bf16.msra.mxu0 %v1196
        %1510 = vmatprep.subr.bf16.mxu0 %v1201
        %1511 = vmatpush1.bf16.msra.mxu0 %v1200
        %1512 = vmatprep.subr.bf16.mxu0 %v1205
        %1513 = vmatpush1.bf16.msra.mxu0 %v1204
        %1514 = vmatprep.mubr.bf16.mxu0 %v433
        %1515 = vmatmul.mubr.bf16.gmra.mrb[0].mxu0 %v432
        %v1516 = vpop.f32.mrb[0].mxu0
        %v1517 = vadd.f32 %v1476, %v1516
        %v1518 = vpop.f32.mrb[0].mxu0
        %v1519 = vadd.f32 %v1478, %v1518
        %v1520 = vpop.f32.mrb[0].mxu0
        %v1521 = vpop.f32.mrb[0].mxu0
        %1522 = vdwg.mxu0
        %1523 = vmatprep.subr.bf16.mxu0 %v1019
        %1524 = vmatpush1.bf16.msra.mxu0 %v1018
        %1525 = vmatprep.subr.bf16.mxu0 %v1023
        %1526 = vmatpush1.bf16.msra.mxu0 %v1022
        %1527 = vmatprep.subr.bf16.mxu0 %v1027
        %1528 = vmatpush1.bf16.msra.mxu0 %v1026
        %1529 = vmatprep.subr.bf16.mxu0 %v1031
        %1530 = vmatpush1.bf16.msra.mxu0 %v1030
        %1531 = vmatprep.subr.bf16.mxu0 %v1035
        %1532 = vmatpush1.bf16.msra.mxu0 %v1034
        %1533 = vmatprep.subr.bf16.mxu0 %v1039
        %1534 = vmatpush1.bf16.msra.mxu0 %v1038
        %1535 = vmatprep.subr.bf16.mxu0 %v1043
        %1536 = vmatpush1.bf16.msra.mxu0 %v1042
        %1537 = vmatprep.subr.bf16.mxu0 %v1047
        %1538 = vmatpush1.bf16.msra.mxu0 %v1046
        %1539 = vmatprep.subr.bf16.mxu0 %v1051
        %1540 = vmatpush1.bf16.msra.mxu0 %v1050
        %1541 = vmatprep.subr.bf16.mxu0 %v1055
        %1542 = vmatpush1.bf16.msra.mxu0 %v1054
        %1543 = vmatprep.subr.bf16.mxu0 %v1059
        %1544 = vmatpush1.bf16.msra.mxu0 %v1058
        %1545 = vmatprep.subr.bf16.mxu0 %v1063
        %1546 = vmatpush1.bf16.msra.mxu0 %v1062
        %1547 = vmatprep.subr.bf16.mxu0 %v1067
        %1548 = vmatpush1.bf16.msra.mxu0 %v1066
        %1549 = vmatprep.subr.bf16.mxu0 %v1071
        %1550 = vmatpush1.bf16.msra.mxu0 %v1070
        %1551 = vmatprep.subr.bf16.mxu0 %v1075
        %1552 = vmatpush1.bf16.msra.mxu0 %v1074
        %1553 = vmatprep.subr.bf16.mxu0 %v1079
        %1554 = vmatpush1.bf16.msra.mxu0 %v1078
        %1555 = vmatprep.mubr.bf16.mxu0 %v424
        %1556 = vmatmul.mubr.bf16.gmra.mrb[0].mxu0 %v416
        %v1557 = vpop.f32.mrb[0].mxu0
        %v1558 = vadd.f32 0.0, %v1557
        %v1559 = vpop.f32.mrb[0].mxu0
        %v1560 = vadd.f32 0.0, %v1559
        %v1561 = vpop.f32.mrb[0].mxu0
        %v1562 = vpop.f32.mrb[0].mxu0
        %1563 = vdwg.mxu0
        %1564 = vmatprep.subr.bf16.mxu0 %v1083
        %1565 = vmatpush1.bf16.msra.mxu0 %v1082
        %1566 = vmatprep.subr.bf16.mxu0 %v1087
        %1567 = vmatpush1.bf16.msra.mxu0 %v1086
        %1568 = vmatprep.subr.bf16.mxu0 %v1091
        %1569 = vmatpush1.bf16.msra.mxu0 %v1090
        %1570 = vmatprep.subr.bf16.mxu0 %v1095
        %1571 = vmatpush1.bf16.msra.mxu0 %v1094
        %1572 = vmatprep.subr.bf16.mxu0 %v1099
        %1573 = vmatpush1.bf16.msra.mxu0 %v1098
        %1574 = vmatprep.subr.bf16.mxu0 %v1103
        %1575 = vmatpush1.bf16.msra.mxu0 %v1102
        %1576 = vmatprep.subr.bf16.mxu0 %v1107
        %1577 = vmatpush1.bf16.msra.mxu0 %v1106
        %1578 = vmatprep.subr.bf16.mxu0 %v1111
        %1579 = vmatpush1.bf16.msra.mxu0 %v1110
        %1580 = vmatprep.subr.bf16.mxu0 %v1115
        %1581 = vmatpush1.bf16.msra.mxu0 %v1114
        %1582 = vmatprep.subr.bf16.mxu0 %v1119
        %1583 = vmatpush1.bf16.msra.mxu0 %v1118
        %1584 = vmatprep.subr.bf16.mxu0 %v1123
        %1585 = vmatpush1.bf16.msra.mxu0 %v1122
        %1586 = vmatprep.subr.bf16.mxu0 %v1127
        %1587 = vmatpush1.bf16.msra.mxu0 %v1126
        %1588 = vmatprep.subr.bf16.mxu0 %v1131
        %1589 = vmatpush1.bf16.msra.mxu0 %v1130
        %1590 = vmatprep.subr.bf16.mxu0 %v1135
        %1591 = vmatpush1.bf16.msra.mxu0 %v1134
        %1592 = vmatprep.subr.bf16.mxu0 %v1139
        %1593 = vmatpush1.bf16.msra.mxu0 %v1138
        %1594 = vmatprep.subr.bf16.mxu0 %v1143
        %1595 = vmatpush1.bf16.msra.mxu0 %v1142
        %1596 = vmatprep.mubr.bf16.mxu0 %v425
        %1597 = vmatmul.mubr.bf16.gmra.mrb[0].mxu0 %v423
        %v1598 = vpop.f32.mrb[0].mxu0
        %v1599 = vadd.f32 %v1558, %v1598
        %v1600 = vpop.f32.mrb[0].mxu0
        %v1601 = vadd.f32 %v1560, %v1600
        %v1602 = vpop.f32.mrb[0].mxu0
        %v1603 = vpop.f32.mrb[0].mxu0
        %1604 = vdwg.mxu0
        %1605 = vmatprep.subr.bf16.mxu0 %v1147
        %1606 = vmatpush1.bf16.msra.mxu0 %v1146
        %1607 = vmatprep.subr.bf16.mxu0 %v1151
        %1608 = vmatpush1.bf16.msra.mxu0 %v1150
        %1609 = vmatprep.subr.bf16.mxu0 %v1155
        %1610 = vmatpush1.bf16.msra.mxu0 %v1154
        %1611 = vmatprep.subr.bf16.mxu0 %v1159
        %1612 = vmatpush1.bf16.msra.mxu0 %v1158
        %1613 = vmatprep.subr.bf16.mxu0 %v1163
        %1614 = vmatpush1.bf16.msra.mxu0 %v1162
        %1615 = vmatprep.subr.bf16.mxu0 %v1167
        %1616 = vmatpush1.bf16.msra.mxu0 %v1166
        %1617 = vmatprep.subr.bf16.mxu0 %v1171
        %1618 = vmatpush1.bf16.msra.mxu0 %v1170
        %1619 = vmatprep.subr.bf16.mxu0 %v1175
        %1620 = vmatpush1.bf16.msra.mxu0 %v1174
        %1621 = vmatprep.subr.bf16.mxu0 %v1179
        %1622 = vmatpush1.bf16.msra.mxu0 %v1178
        %1623 = vmatprep.subr.bf16.mxu0 %v1183
        %1624 = vmatpush1.bf16.msra.mxu0 %v1182
        %1625 = vmatprep.subr.bf16.mxu0 %v1187
        %1626 = vmatpush1.bf16.msra.mxu0 %v1186
        %1627 = vmatprep.subr.bf16.mxu0 %v1191
        %1628 = vmatpush1.bf16.msra.mxu0 %v1190
        %1629 = vmatprep.subr.bf16.mxu0 %v1195
        %1630 = vmatpush1.bf16.msra.mxu0 %v1194
        %1631 = vmatprep.subr.bf16.mxu0 %v1199
        %1632 = vmatpush1.bf16.msra.mxu0 %v1198
        %1633 = vmatprep.subr.bf16.mxu0 %v1203
        %1634 = vmatpush1.bf16.msra.mxu0 %v1202
        %1635 = vmatprep.subr.bf16.mxu0 %v1207
        %1636 = vmatpush1.bf16.msra.mxu0 %v1206
        %1637 = vmatprep.mubr.bf16.mxu0 %v433
        %1638 = vmatmul.mubr.bf16.gmra.mrb[0].mxu0 %v432
        %v1639 = vpop.f32.mrb[0].mxu0
        %v1640 = vadd.f32 %v1599, %v1639
        %v1641 = vpop.f32.mrb[0].mxu0
        %v1642 = vadd.f32 %v1601, %v1641
        %v1643 = vpop.f32.mrb[0].mxu0
        %v1644 = vpop.f32.mrb[0].mxu0
        %1645 = vdwg.mxu0
        %v1650 = vcombine.low %v1517, %v1519
        %v1651 = vcombine.low %v1640, %v1642
        %v1654 = vadd.f32 %v211, %v1650
        %v1655 = vadd.f32 %v212, %v1651
        %1656 = vst [vmem:[#allocation2] sm:$0xff] %v1654
        %1657 = vst [vmem:[#allocation2 + $0x8] sm:$0xff] %v1655
        // Predicated region
        $region37: #{encoder_forward.2} parent=27 // pred_check
          %p1658 = pneg %p205
        $region38: #{encoder_forward.2} parent=27 // pred_check_branch
          %1660 = sbr.rel (%p1658) target = $region40
        $region39: #{encoder_forward.2} parent=27 // pred_region
          %v1661 = vld [vmem:[#allocation2] sm:$0xff]
          %v1662 = vld [vmem:[#allocation2 + $0x8] sm:$0xff]
          %1663 = vst [vmem:[%s203] sm:$0xff] %v1661
          %1664 = vst [vmem:[%s203 + $0x8] sm:$0xff] %v1662
        $region40: #{encoder_forward.2} parent=27 // pred_fallthru
          _
        %s1665 = smul.u32 4, %s20
        %p1666 = scmp.lt.s32.totalorder %s1665, 7
        %s1667 = scalar_select %p1666, %s1665, 7
        %s1668 = smul.addr %s1667, 4
        %s1669 = scalar_lea.vmem %s2, %s1668
        // Predicated region
        $region41: #{encoder_forward.2} parent=27 // pred_check
          %p1670 = pneg %p100
        $region42: #{encoder_forward.2} parent=27 // pred_check_branch
          %1672 = sbr.rel (%p1670) target = $region44
        $region43: #{encoder_forward.2} parent=27 // pred_region
          %s1673 = smul.u32 4, %s20
        $region44: #{encoder_forward.2} parent=27 // pred_fallthru
          _
      $region28: #{encoder_forward.2} parent=5 // pred_fallthru
        _
      %p1674 = scmp.le.s32.totalorder 2, %s11
      // Predicated region
      $region45: #{encoder_forward.2} parent=5 // pred_check
        %p1675 = pneg %p1674
      $region46: #{encoder_forward.2} parent=5 // pred_check_branch
        %1677 = sbr.rel (%p1675) target = $region48
      $region47: #{encoder_forward.2} parent=5 // pred_region
        %s1678 = ssub.s32 %s11, 2
        // Predicated region
        $region49: #{encoder_forward.2} parent=47 // pred_check
          %p1679 = pneg %p106
        $region50: #{encoder_forward.2} parent=47 // pred_check_branch
          %1681 = sbr.rel (%p1679) target = $region52
        $region51: #{encoder_forward.2} parent=47 // pred_region
          %s1682 = smul.u32 4, %s22
          %p1683 = scmp.lt.s32.totalorder %s1682, 7
          %s1684 = scalar_select %p1683, %s1682, 7
          %s1685 = smul.addr %s1684, 4
          %s1686 = scalar_lea.vmem %s2, %s1685
        $region52: #{encoder_forward.2} parent=47 // pred_fallthru
          _
      $region48: #{encoder_forward.2} parent=5 // pred_fallthru
        _
    $region6: #{encoder_forward.2} parent=1 // loop_footer
      %s15 = sadd.s32 1, %s11
    $region7: #{encoder_forward.2} parent=1 // loop_footer_branch
      %10 = sbr.rel target = $region3
    $region8: #{encoder_forward.2} parent=1 // loop_exit
      _
    %1687 = vsyncpa [#allocation4], 1
    %s1688 = scalar_lea.sflag [#allocation4], 1
    %1689 = vsyncpa %s1688, 1

// kernel: encoder_forward.3
$region0: #{encoder_forward.3}
  #allocation0 [shape = 'u32[]', space=smem, size = 0x4, offset = 0x4, fixed_abs, tag = 'smem constant byte address 0x4 - core index']
  #allocation1 [shape = 'u32[144,128]{1,0:T(1,128)}', space=vmem, size = 0x12000, scoped, tag = 'internal scratch']
  %s0 = inlined_call_operand.vmem [shape: f32[4,1024], index: 0, kind: input, shape index: {}]
  %s1 = inlined_call_operand.vmem [shape: f32[1,1024], index: 1, kind: input, shape index: {}]
  %s2 = inlined_call_operand.vmem [shape: f32[1,1024], index: 2, kind: input, shape index: {}]
  %s3 = inlined_call_operand.vmem [shape: f32[1,1024], index: 3, kind: input, shape index: {}]
  %s4 = inlined_call_operand.vmem [shape: bf16[1024,512], index: 4, kind: input, shape index: {}]
  %s5 = inlined_call_operand.vmem [shape: f32[1,512], index: 5, kind: input, shape index: {}]
  %s6 = inlined_call_operand.vmem [shape: f32[1,512], index: 6, kind: input, shape index: {}]
  %s7 = inlined_call_operand.vmem [shape: f32[1,512], index: 7, kind: input, shape index: {}]
  %s8 = inlined_call_operand.vmem [shape: bf16[512,256], index: 8, kind: input, shape index: {}]
  %s9 = inlined_call_operand.vmem [shape: f32[1,256], index: 9, kind: input, shape index: {}]
  %s10 = inlined_call_operand.vmem [shape: f32[1,256], index: 10, kind: input, shape index: {}]
  %s11 = inlined_call_operand.vmem [shape: f32[1,256], index: 11, kind: input, shape index: {}]
  %s12 = inlined_call_operand.vmem [shape: bf16[256,128], index: 12, kind: input, shape index: {}]
  %s13 = inlined_call_operand.vmem [shape: f32[1,128], index: 13, kind: input, shape index: {}]
  %s14 = inlined_call_operand.vmem [shape: f32[1,128], index: 14, kind: input, shape index: {}]
  %s15 = inlined_call_operand.vmem [shape: f32[1,128], index: 15, kind: input, shape index: {}]
  %s16 = inlined_call_operand.vmem [shape: bf16[128,128], index: 16, kind: input, shape index: {}]
  %s17 = inlined_call_operand.vmem [shape: f32[1,128], index: 17, kind: input, shape index: {}]
  %s18 = inlined_call_operand.hbm [shape: f32[4,128], index: 18, kind: output, shape index: {}]
  %s19 = sld [smem:[#allocation0]]
  $region82: #{encoder_forward.3} parent=0
    _
  %s21 = ssub.s32 1, %s19
  %s22 = scalar_select 0, %s21, %s19
  $region1: #{encoder_forward.3} parent=0
    #allocation2 [shape = 'u8[2048]{0}', space=vmem, size = 0x800, scoped, tag = 'output window, operand 0, single buffered']
    #allocation3 [shape = 's32[1]{0}', space=sflag, size = 0x4, scoped, tag = 'scoped memory for encoder_forward.3']
    %23 = vsyncpa [#allocation3], 0
    // Predicated region
    $region2: #{encoder_forward.3} parent=1 // pred_check
      _
    $region3: #{encoder_forward.3} parent=1 // pred_check_branch
      %25 = sbr.rel (0) target = $region5
    $region4: #{encoder_forward.3} parent=1 // pred_region
      _
    $region5: #{encoder_forward.3} parent=1 // pred_fallthru
      _
    // Predicated region
    $region6: #{encoder_forward.3} parent=1 // pred_check
      _
    $region7: #{encoder_forward.3} parent=1 // pred_check_branch
      %27 = sbr.rel (0) target = $region9
    $region8: #{encoder_forward.3} parent=1 // pred_region
      _
    $region9: #{encoder_forward.3} parent=1 // pred_fallthru
      _
    // Predicated region
    $region10: #{encoder_forward.3} parent=1 // pred_check
      _
    $region11: #{encoder_forward.3} parent=1 // pred_check_branch
      %29 = sbr.rel (0) target = $region13
    $region12: #{encoder_forward.3} parent=1 // pred_region
      _
    $region13: #{encoder_forward.3} parent=1 // pred_fallthru
      _
    // Predicated region
    $region14: #{encoder_forward.3} parent=1 // pred_check
      _
    $region15: #{encoder_forward.3} parent=1 // pred_check_branch
      %31 = sbr.rel (0) target = $region17
    $region16: #{encoder_forward.3} parent=1 // pred_region
      _
    $region17: #{encoder_forward.3} parent=1 // pred_fallthru
      _
    // Predicated region
    $region18: #{encoder_forward.3} parent=1 // pred_check
      _
    $region19: #{encoder_forward.3} parent=1 // pred_check_branch
      %33 = sbr.rel (0) target = $region21
    $region20: #{encoder_forward.3} parent=1 // pred_region
      _
    $region21: #{encoder_forward.3} parent=1 // pred_fallthru
      _
    // Predicated region
    $region22: #{encoder_forward.3} parent=1 // pred_check
      _
    $region23: #{encoder_forward.3} parent=1 // pred_check_branch
      %35 = sbr.rel (0) target = $region25
    $region24: #{encoder_forward.3} parent=1 // pred_region
      _
    $region25: #{encoder_forward.3} parent=1 // pred_fallthru
      _
    // Predicated region
    $region26: #{encoder_forward.3} parent=1 // pred_check
      _
    $region27: #{encoder_forward.3} parent=1 // pred_check_branch
      %37 = sbr.rel (0) target = $region29
    $region28: #{encoder_forward.3} parent=1 // pred_region
      _
    $region29: #{encoder_forward.3} parent=1 // pred_fallthru
      _
    // Predicated region
    $region30: #{encoder_forward.3} parent=1 // pred_check
      _
    $region31: #{encoder_forward.3} parent=1 // pred_check_branch
      %39 = sbr.rel (0) target = $region33
    $region32: #{encoder_forward.3} parent=1 // pred_region
      _
    $region33: #{encoder_forward.3} parent=1 // pred_fallthru
      _
    // Predicated region
    $region34: #{encoder_forward.3} parent=1 // pred_check
      _
    $region35: #{encoder_forward.3} parent=1 // pred_check_branch
      %41 = sbr.rel (0) target = $region37
    $region36: #{encoder_forward.3} parent=1 // pred_region
      _
    $region37: #{encoder_forward.3} parent=1 // pred_fallthru
      _
    // Predicated region
    $region38: #{encoder_forward.3} parent=1 // pred_check
      _
    $region39: #{encoder_forward.3} parent=1 // pred_check_branch
      %43 = sbr.rel (0) target = $region41
    $region40: #{encoder_forward.3} parent=1 // pred_region
      _
    $region41: #{encoder_forward.3} parent=1 // pred_fallthru
      _
    // Predicated region
    $region42: #{encoder_forward.3} parent=1 // pred_check
      _
    $region43: #{encoder_forward.3} parent=1 // pred_check_branch
      %45 = sbr.rel (0) target = $region45
    $region44: #{encoder_forward.3} parent=1 // pred_region
      _
    $region45: #{encoder_forward.3} parent=1 // pred_fallthru
      _
    // Predicated region
    $region46: #{encoder_forward.3} parent=1 // pred_check
      _
    $region47: #{encoder_forward.3} parent=1 // pred_check_branch
      %47 = sbr.rel (0) target = $region49
    $region48: #{encoder_forward.3} parent=1 // pred_region
      _
    $region49: #{encoder_forward.3} parent=1 // pred_fallthru
      _
    // Predicated region
    $region50: #{encoder_forward.3} parent=1 // pred_check
      _
    $region51: #{encoder_forward.3} parent=1 // pred_check_branch
      %49 = sbr.rel (0) target = $region53
    $region52: #{encoder_forward.3} parent=1 // pred_region
      _
    $region53: #{encoder_forward.3} parent=1 // pred_fallthru
      _
    // Predicated region
    $region54: #{encoder_forward.3} parent=1 // pred_check
      _
    $region55: #{encoder_forward.3} parent=1 // pred_check_branch
      %51 = sbr.rel (0) target = $region57
    $region56: #{encoder_forward.3} parent=1 // pred_region
      _
    $region57: #{encoder_forward.3} parent=1 // pred_fallthru
      _
    // Predicated region
    $region58: #{encoder_forward.3} parent=1 // pred_check
      _
    $region59: #{encoder_forward.3} parent=1 // pred_check_branch
      %53 = sbr.rel (0) target = $region61
    $region60: #{encoder_forward.3} parent=1 // pred_region
      _
    $region61: #{encoder_forward.3} parent=1 // pred_fallthru
      _
    // Predicated region
    $region62: #{encoder_forward.3} parent=1 // pred_check
      _
    $region63: #{encoder_forward.3} parent=1 // pred_check_branch
      %55 = sbr.rel (0) target = $region65
    $region64: #{encoder_forward.3} parent=1 // pred_region
      _
    $region65: #{encoder_forward.3} parent=1 // pred_fallthru
      _
    // Predicated region
    $region66: #{encoder_forward.3} parent=1 // pred_check
      _
    $region67: #{encoder_forward.3} parent=1 // pred_check_branch
      %57 = sbr.rel (0) target = $region69
    $region68: #{encoder_forward.3} parent=1 // pred_region
      _
    $region69: #{encoder_forward.3} parent=1 // pred_fallthru
      _
    // Predicated region
    $region70: #{encoder_forward.3} parent=1 // pred_check
      _
    $region71: #{encoder_forward.3} parent=1 // pred_check_branch
      %59 = sbr.rel (0) target = $region73
    $region72: #{encoder_forward.3} parent=1 // pred_region
      _
    $region73: #{encoder_forward.3} parent=1 // pred_fallthru
      _
    %v61 = vld [vmem:[%s0] sm:$0xff]
    %v62 = vld [vmem:[%s0 + $0x8] sm:$0xff]
    %v63 = vld [vmem:[%s0 + $0x10] sm:$0xff]
    %v64 = vld [vmem:[%s0 + $0x18] sm:$0xff]
    %v65 = vld [vmem:[%s1] sm:$0xff]
    %v67 = vlaneseq
    %v68 = vshrl.u32 %v67, 7
    %v69 = vsub.s32 0, %v68
    %v70 = vrot.slane %v65, %v69
    %v71 = vlaneseq
    %v72 = vshrl.u32 %v71, 7
    %v73 = vsub.s32 1, %v72
    %v74 = vrot.slane %v65, %v73
    %v75 = vlaneseq
    %v76 = vshrl.u32 %v75, 7
    %v77 = vsub.s32 2, %v76
    %v78 = vrot.slane %v65, %v77
    %v79 = vlaneseq
    %v80 = vshrl.u32 %v79, 7
    %v81 = vsub.s32 3, %v80
    %v82 = vrot.slane %v65, %v81
    %v83 = vlaneseq
    %v84 = vshrl.u32 %v83, 7
    %v85 = vsub.s32 4, %v84
    %v86 = vrot.slane %v65, %v85
    %v87 = vlaneseq
    %v88 = vshrl.u32 %v87, 7
    %v89 = vsub.s32 5, %v88
    %v90 = vrot.slane %v65, %v89
    %v91 = vlaneseq
    %v92 = vshrl.u32 %v91, 7
    %v93 = vsub.s32 6, %v92
    %v94 = vrot.slane %v65, %v93
    %v95 = vlaneseq
    %v96 = vshrl.u32 %v95, 7
    %v97 = vsub.s32 7, %v96
    %v98 = vrot.slane %v65, %v97
    %v99 = vcombine.low %v70, %v74
    %v100 = vcombine.low %v78, %v82
    %v101 = vcombine.low %v86, %v90
    %v102 = vcombine.low %v94, %v98
    %v107 = vadd.f32 %v61, %v99
    %v108 = vadd.f32 %v62, %v100
    %v109 = vadd.f32 %v63, %v101
    %v110 = vadd.f32 %v64, %v102
    %v111 = vld [vmem:[%s2] sm:$0xff]
    %v112 = vld [vmem:[%s3] sm:$0xff]
    %vm113 = vcmp.ge.f32.partialorder %v107, 0.0
    %vm114 = vcmp.ge.f32.partialorder %v108, 0.0
    %vm115 = vcmp.ge.f32.partialorder %v109, 0.0
    %vm116 = vcmp.ge.f32.partialorder %v110, 0.0
    %v117 = vmul.f32 %v107, 0.2
    %v118 = vmul.f32 %v108, 0.2
    %v119 = vmul.f32 %v109, 0.2
    %v120 = vmul.f32 %v110, 0.2
    %v121 = vsel %vm113, %v107, %v117
    %v122 = vsel %vm114, %v108, %v118
    %v123 = vsel %vm115, %v109, %v119
    %v124 = vsel %vm116, %v110, %v120
    %v129 = vcombine.high %v121, %v121
    %v130 = vcombine.high %v122, %v122
    %v131 = vcombine.high %v123, %v123
    %v132 = vcombine.high %v124, %v124
    %vm137 = vcmask 1043456
    %v138 = vsel %vm137, %v121, 0.0
    %v139 = vrot.slane %v138, 4
    %v140 = vadd.f32 %v138, %v139
    %v141 = vrot.slane %v140, 2
    %v142 = vadd.f32 %v140, %v141
    %v143 = vrot.slane %v142, 1
    %v144 = vadd.f32 %v142, %v143
    %v145 = vsel %vm137, %v129, 0.0
    %v146 = vrot.slane %v145, 4
    %v147 = vadd.f32 %v145, %v146
    %v148 = vrot.slane %v147, 2
    %v149 = vadd.f32 %v147, %v148
    %v150 = vrot.slane %v149, 1
    %v151 = vadd.f32 %v149, %v150
    %v152 = vsel %vm137, %v122, 0.0
    %v153 = vrot.slane %v152, 4
    %v154 = vadd.f32 %v152, %v153
    %v155 = vrot.slane %v154, 2
    %v156 = vadd.f32 %v154, %v155
    %v157 = vrot.slane %v156, 1
    %v158 = vadd.f32 %v156, %v157
    %v159 = vsel %vm137, %v130, 0.0
    %v160 = vrot.slane %v159, 4
    %v161 = vadd.f32 %v159, %v160
    %v162 = vrot.slane %v161, 2
    %v163 = vadd.f32 %v161, %v162
    %v164 = vrot.slane %v163, 1
    %v165 = vadd.f32 %v163, %v164
    %v166 = vsel %vm137, %v123, 0.0
    %v167 = vrot.slane %v166, 4
    %v168 = vadd.f32 %v166, %v167
    %v169 = vrot.slane %v168, 2
    %v170 = vadd.f32 %v168, %v169
    %v171 = vrot.slane %v170, 1
    %v172 = vadd.f32 %v170, %v171
    %v173 = vsel %vm137, %v131, 0.0
    %v174 = vrot.slane %v173, 4
    %v175 = vadd.f32 %v173, %v174
    %v176 = vrot.slane %v175, 2
    %v177 = vadd.f32 %v175, %v176
    %v178 = vrot.slane %v177, 1
    %v179 = vadd.f32 %v177, %v178
    %v180 = vsel %vm137, %v124, 0.0
    %v181 = vrot.slane %v180, 4
    %v182 = vadd.f32 %v180, %v181
    %v183 = vrot.slane %v182, 2
    %v184 = vadd.f32 %v182, %v183
    %v185 = vrot.slane %v184, 1
    %v186 = vadd.f32 %v184, %v185
    %v187 = vsel %vm137, %v132, 0.0
    %v188 = vrot.slane %v187, 4
    %v189 = vadd.f32 %v187, %v188
    %v190 = vrot.slane %v189, 2
    %v191 = vadd.f32 %v189, %v190
    %v192 = vrot.slane %v191, 1
    %v193 = vadd.f32 %v191, %v192
    %v194 = vrcp.pop 4.0
    %v195 = vmul.f32 %v144, %v194
    %v196 = vmul.f32 %v151, %v194
    %v197 = vmul.f32 %v158, %v194
    %v198 = vmul.f32 %v165, %v194
    %v199 = vmul.f32 %v172, %v194
    %v200 = vmul.f32 %v179, %v194
    %v201 = vmul.f32 %v186, %v194
    %v202 = vmul.f32 %v193, %v194
    %v211 = vcombine.low %v195, %v196
    %v212 = vcombine.low %v197, %v198
    %v213 = vcombine.low %v199, %v200
    %v214 = vcombine.low %v201, %v202
    %v219 = vsub.f32 %v121, %v211
    %v220 = vsub.f32 %v122, %v212
    %v221 = vsub.f32 %v123, %v213
    %v222 = vsub.f32 %v124, %v214
    %v223 = vmul.f32 %v219, %v219
    %v224 = vmul.f32 %v220, %v220
    %v225 = vmul.f32 %v221, %v221
    %v226 = vmul.f32 %v222, %v222
    %v231 = vcombine.high %v223, %v223
    %v232 = vcombine.high %v224, %v224
    %v233 = vcombine.high %v225, %v225
    %v234 = vcombine.high %v226, %v226
    %v239 = vsel %vm137, %v223, 0.0
    %v240 = vrot.slane %v239, 4
    %v241 = vadd.f32 %v239, %v240
    %v242 = vrot.slane %v241, 2
    %v243 = vadd.f32 %v241, %v242
    %v244 = vrot.slane %v243, 1
    %v245 = vadd.f32 %v243, %v244
    %v246 = vsel %vm137, %v231, 0.0
    %v247 = vrot.slane %v246, 4
    %v248 = vadd.f32 %v246, %v247
    %v249 = vrot.slane %v248, 2
    %v250 = vadd.f32 %v248, %v249
    %v251 = vrot.slane %v250, 1
    %v252 = vadd.f32 %v250, %v251
    %v253 = vsel %vm137, %v224, 0.0
    %v254 = vrot.slane %v253, 4
    %v255 = vadd.f32 %v253, %v254
    %v256 = vrot.slane %v255, 2
    %v257 = vadd.f32 %v255, %v256
    %v258 = vrot.slane %v257, 1
    %v259 = vadd.f32 %v257, %v258
    %v260 = vsel %vm137, %v232, 0.0
    %v261 = vrot.slane %v260, 4
    %v262 = vadd.f32 %v260, %v261
    %v263 = vrot.slane %v262, 2
    %v264 = vadd.f32 %v262, %v263
    %v265 = vrot.slane %v264, 1
    %v266 = vadd.f32 %v264, %v265
    %v267 = vsel %vm137, %v225, 0.0
    %v268 = vrot.slane %v267, 4
    %v269 = vadd.f32 %v267, %v268
    %v270 = vrot.slane %v269, 2
    %v271 = vadd.f32 %v269, %v270
    %v272 = vrot.slane %v271, 1
    %v273 = vadd.f32 %v271, %v272
    %v274 = vsel %vm137, %v233, 0.0
    %v275 = vrot.slane %v274, 4
    %v276 = vadd.f32 %v274, %v275
    %v277 = vrot.slane %v276, 2
    %v278 = vadd.f32 %v276, %v277
    %v279 = vrot.slane %v278, 1
    %v280 = vadd.f32 %v278, %v279
    %v281 = vsel %vm137, %v226, 0.0
    %v282 = vrot.slane %v281, 4
    %v283 = vadd.f32 %v281, %v282
    %v284 = vrot.slane %v283, 2
    %v285 = vadd.f32 %v283, %v284
    %v286 = vrot.slane %v285, 1
    %v287 = vadd.f32 %v285, %v286
    %v288 = vsel %vm137, %v234, 0.0
    %v289 = vrot.slane %v288, 4
    %v290 = vadd.f32 %v288, %v289
    %v291 = vrot.slane %v290, 2
    %v292 = vadd.f32 %v290, %v291
    %v293 = vrot.slane %v292, 1
    %v294 = vadd.f32 %v292, %v293
    %v295 = vmul.f32 %v245, %v194
    %v296 = vmul.f32 %v252, %v194
    %v297 = vmul.f32 %v259, %v194
    %v298 = vmul.f32 %v266, %v194
    %v299 = vmul.f32 %v273, %v194
    %v300 = vmul.f32 %v280, %v194
    %v301 = vmul.f32 %v287, %v194
    %v302 = vmul.f32 %v294, %v194
    %v304 = vlaneseq
    %v305 = vshrl.u32 %v304, 7
    %v306 = vsub.s32 0, %v305
    %v307 = vrot.slane %v111, %v306
    %v308 = vlaneseq
    %v309 = vshrl.u32 %v308, 7
    %v310 = vsub.s32 1, %v309
    %v311 = vrot.slane %v111, %v310
    %v312 = vlaneseq
    %v313 = vshrl.u32 %v312, 7
    %v314 = vsub.s32 2, %v313
    %v315 = vrot.slane %v111, %v314
    %v316 = vlaneseq
    %v317 = vshrl.u32 %v316, 7
    %v318 = vsub.s32 3, %v317
    %v319 = vrot.slane %v111, %v318
    %v320 = vlaneseq
    %v321 = vshrl.u32 %v320, 7
    %v322 = vsub.s32 4, %v321
    %v323 = vrot.slane %v111, %v322
    %v324 = vlaneseq
    %v325 = vshrl.u32 %v324, 7
    %v326 = vsub.s32 5, %v325
    %v327 = vrot.slane %v111, %v326
    %v328 = vlaneseq
    %v329 = vshrl.u32 %v328, 7
    %v330 = vsub.s32 6, %v329
    %v331 = vrot.slane %v111, %v330
    %v332 = vlaneseq
    %v333 = vshrl.u32 %v332, 7
    %v334 = vsub.s32 7, %v333
    %v335 = vrot.slane %v111, %v334
    %v348 = vcombine.high %v219, %v219
    %v349 = vcombine.high %v220, %v220
    %v350 = vcombine.high %v221, %v221
    %v351 = vcombine.high %v222, %v222
    %v356 = vmul.f32 %v307, %v219
    %v357 = vmul.f32 %v311, %v348
    %v358 = vmul.f32 %v315, %v220
    %v359 = vmul.f32 %v319, %v349
    %v360 = vmul.f32 %v323, %v221
    %v361 = vmul.f32 %v327, %v350
    %v362 = vmul.f32 %v331, %v222
    %v363 = vmul.f32 %v335, %v351
    %v364 = vadd.f32 %v295, 1e-05
    %v365 = vadd.f32 %v296, 1e-05
    %v366 = vadd.f32 %v297, 1e-05
    %v367 = vadd.f32 %v298, 1e-05
    %v368 = vadd.f32 %v299, 1e-05
    %v369 = vadd.f32 %v300, 1e-05
    %v370 = vadd.f32 %v301, 1e-05
    %v371 = vadd.f32 %v302, 1e-05
    %v372 = vrsqrt.pop %v364
    %v373 = vrsqrt.pop %v365
    %v374 = vrsqrt.pop %v366
    %v375 = vrsqrt.pop %v367
    %v376 = vrsqrt.pop %v368
    %v377 = vrsqrt.pop %v369
    %v378 = vrsqrt.pop %v370
    %v379 = vrsqrt.pop %v371
    %v380 = vmul.f32 %v356, %v372
    %v381 = vmul.f32 %v357, %v373
    %v382 = vmul.f32 %v358, %v374
    %v383 = vmul.f32 %v359, %v375
    %v384 = vmul.f32 %v360, %v376
    %v385 = vmul.f32 %v361, %v377
    %v386 = vmul.f32 %v362, %v378
    %v387 = vmul.f32 %v363, %v379
    %v389 = vlaneseq
    %v390 = vshrl.u32 %v389, 7
    %v391 = vsub.s32 0, %v390
    %v392 = vrot.slane %v112, %v391
    %v393 = vlaneseq
    %v394 = vshrl.u32 %v393, 7
    %v395 = vsub.s32 1, %v394
    %v396 = vrot.slane %v112, %v395
    %v397 = vlaneseq
    %v398 = vshrl.u32 %v397, 7
    %v399 = vsub.s32 2, %v398
    %v400 = vrot.slane %v112, %v399
    %v401 = vlaneseq
    %v402 = vshrl.u32 %v401, 7
    %v403 = vsub.s32 3, %v402
    %v404 = vrot.slane %v112, %v403
    %v405 = vlaneseq
    %v406 = vshrl.u32 %v405, 7
    %v407 = vsub.s32 4, %v406
    %v408 = vrot.slane %v112, %v407
    %v409 = vlaneseq
    %v410 = vshrl.u32 %v409, 7
    %v411 = vsub.s32 5, %v410
    %v412 = vrot.slane %v112, %v411
    %v413 = vlaneseq
    %v414 = vshrl.u32 %v413, 7
    %v415 = vsub.s32 6, %v414
    %v416 = vrot.slane %v112, %v415
    %v417 = vlaneseq
    %v418 = vshrl.u32 %v417, 7
    %v419 = vsub.s32 7, %v418
    %v420 = vrot.slane %v112, %v419
    %v429 = vadd.f32 %v380, %v392
    %v430 = vadd.f32 %v381, %v396
    %v431 = vadd.f32 %v382, %v400
    %v432 = vadd.f32 %v383, %v404
    %v433 = vadd.f32 %v384, %v408
    %v434 = vadd.f32 %v385, %v412
    %v435 = vadd.f32 %v386, %v416
    %v436 = vadd.f32 %v387, %v420
    %v437 = vld [vmem:[%s4] sm:$0xff]
    %v438 = vld [vmem:[%s4 + $0x8] sm:$0xff]
    %v439 = vld [vmem:[%s4 + $0x10] sm:$0xff]
    %v440 = vld [vmem:[%s4 + $0x18] sm:$0xff]
    %v441 = vld [vmem:[%s4 + $0x20] sm:$0xff]
    %v442 = vld [vmem:[%s4 + $0x28] sm:$0xff]
    %v443 = vld [vmem:[%s4 + $0x30] sm:$0xff]
    %v444 = vld [vmem:[%s4 + $0x38] sm:$0xff]
    %v445 = vld [vmem:[%s4 + $0x40] sm:$0xff]
    %v446 = vld [vmem:[%s4 + $0x48] sm:$0xff]
    %v447 = vld [vmem:[%s4 + $0x50] sm:$0xff]
    %v448 = vld [vmem:[%s4 + $0x58] sm:$0xff]
    %v449 = vld [vmem:[%s4 + $0x60] sm:$0xff]
    %v450 = vld [vmem:[%s4 + $0x68] sm:$0xff]
    %v451 = vld [vmem:[%s4 + $0x70] sm:$0xff]
    %v452 = vld [vmem:[%s4 + $0x78] sm:$0xff]
    %v453 = vld [vmem:[%s4 + $0x80] sm:$0xff]
    %v454 = vld [vmem:[%s4 + $0x88] sm:$0xff]
    %v455 = vld [vmem:[%s4 + $0x90] sm:$0xff]
    %v456 = vld [vmem:[%s4 + $0x98] sm:$0xff]
    %v457 = vld [vmem:[%s4 + $0xa0] sm:$0xff]
    %v458 = vld [vmem:[%s4 + $0xa8] sm:$0xff]
    %v459 = vld [vmem:[%s4 + $0xb0] sm:$0xff]
    %v460 = vld [vmem:[%s4 + $0xb8] sm:$0xff]
    %v461 = vld [vmem:[%s4 + $0xc0] sm:$0xff]
    %v462 = vld [vmem:[%s4 + $0xc8] sm:$0xff]
    %v463 = vld [vmem:[%s4 + $0xd0] sm:$0xff]
    %v464 = vld [vmem:[%s4 + $0xd8] sm:$0xff]
    %v465 = vld [vmem:[%s4 + $0xe0] sm:$0xff]
    %v466 = vld [vmem:[%s4 + $0xe8] sm:$0xff]
    %v467 = vld [vmem:[%s4 + $0xf0] sm:$0xff]
    %v468 = vld [vmem:[%s4 + $0xf8] sm:$0xff]
    %v469 = vld [vmem:[%s4 + $0x100] sm:$0xff]
    %v470 = vld [vmem:[%s4 + $0x108] sm:$0xff]
    %v471 = vld [vmem:[%s4 + $0x110] sm:$0xff]
    %v472 = vld [vmem:[%s4 + $0x118] sm:$0xff]
    %v473 = vld [vmem:[%s4 + $0x120] sm:$0xff]
    %v474 = vld [vmem:[%s4 + $0x128] sm:$0xff]
    %v475 = vld [vmem:[%s4 + $0x130] sm:$0xff]
    %v476 = vld [vmem:[%s4 + $0x138] sm:$0xff]
    %v477 = vld [vmem:[%s4 + $0x140] sm:$0xff]
    %v478 = vld [vmem:[%s4 + $0x148] sm:$0xff]
    %v479 = vld [vmem:[%s4 + $0x150] sm:$0xff]
    %v480 = vld [vmem:[%s4 + $0x158] sm:$0xff]
    %v481 = vld [vmem:[%s4 + $0x160] sm:$0xff]
    %v482 = vld [vmem:[%s4 + $0x168] sm:$0xff]
    %v483 = vld [vmem:[%s4 + $0x170] sm:$0xff]
    %v484 = vld [vmem:[%s4 + $0x178] sm:$0xff]
    %v485 = vld [vmem:[%s4 + $0x180] sm:$0xff]
    %v486 = vld [vmem:[%s4 + $0x188] sm:$0xff]
    %v487 = vld [vmem:[%s4 + $0x190] sm:$0xff]
    %v488 = vld [vmem:[%s4 + $0x198] sm:$0xff]
    %v489 = vld [vmem:[%s4 + $0x1a0] sm:$0xff]
    %v490 = vld [vmem:[%s4 + $0x1a8] sm:$0xff]
    %v491 = vld [vmem:[%s4 + $0x1b0] sm:$0xff]
    %v492 = vld [vmem:[%s4 + $0x1b8] sm:$0xff]
    %v493 = vld [vmem:[%s4 + $0x1c0] sm:$0xff]
    %v494 = vld [vmem:[%s4 + $0x1c8] sm:$0xff]
    %v495 = vld [vmem:[%s4 + $0x1d0] sm:$0xff]
    %v496 = vld [vmem:[%s4 + $0x1d8] sm:$0xff]
    %v497 = vld [vmem:[%s4 + $0x1e0] sm:$0xff]
    %v498 = vld [vmem:[%s4 + $0x1e8] sm:$0xff]
    %v499 = vld [vmem:[%s4 + $0x1f0] sm:$0xff]
    %v500 = vld [vmem:[%s4 + $0x1f8] sm:$0xff]
    %v501 = vld [vmem:[%s4 + $0x200] sm:$0xff]
    %v502 = vld [vmem:[%s4 + $0x208] sm:$0xff]
    %v503 = vld [vmem:[%s4 + $0x210] sm:$0xff]
    %v504 = vld [vmem:[%s4 + $0x218] sm:$0xff]
    %v505 = vld [vmem:[%s4 + $0x220] sm:$0xff]
    %v506 = vld [vmem:[%s4 + $0x228] sm:$0xff]
    %v507 = vld [vmem:[%s4 + $0x230] sm:$0xff]
    %v508 = vld [vmem:[%s4 + $0x238] sm:$0xff]
    %v509 = vld [vmem:[%s4 + $0x240] sm:$0xff]
    %v510 = vld [vmem:[%s4 + $0x248] sm:$0xff]
    %v511 = vld [vmem:[%s4 + $0x250] sm:$0xff]
    %v512 = vld [vmem:[%s4 + $0x258] sm:$0xff]
    %v513 = vld [vmem:[%s4 + $0x260] sm:$0xff]
    %v514 = vld [vmem:[%s4 + $0x268] sm:$0xff]
    %v515 = vld [vmem:[%s4 + $0x270] sm:$0xff]
    %v516 = vld [vmem:[%s4 + $0x278] sm:$0xff]
    %v517 = vld [vmem:[%s4 + $0x280] sm:$0xff]
    %v518 = vld [vmem:[%s4 + $0x288] sm:$0xff]
    %v519 = vld [vmem:[%s4 + $0x290] sm:$0xff]
    %v520 = vld [vmem:[%s4 + $0x298] sm:$0xff]
    %v521 = vld [vmem:[%s4 + $0x2a0] sm:$0xff]
    %v522 = vld [vmem:[%s4 + $0x2a8] sm:$0xff]
    %v523 = vld [vmem:[%s4 + $0x2b0] sm:$0xff]
    %v524 = vld [vmem:[%s4 + $0x2b8] sm:$0xff]
    %v525 = vld [vmem:[%s4 + $0x2c0] sm:$0xff]
    %v526 = vld [vmem:[%s4 + $0x2c8] sm:$0xff]
    %v527 = vld [vmem:[%s4 + $0x2d0] sm:$0xff]
    %v528 = vld [vmem:[%s4 + $0x2d8] sm:$0xff]
    %v529 = vld [vmem:[%s4 + $0x2e0] sm:$0xff]
    %v530 = vld [vmem:[%s4 + $0x2e8] sm:$0xff]
    %v531 = vld [vmem:[%s4 + $0x2f0] sm:$0xff]
    %v532 = vld [vmem:[%s4 + $0x2f8] sm:$0xff]
    %v533 = vld [vmem:[%s4 + $0x300] sm:$0xff]
    %v534 = vld [vmem:[%s4 + $0x308] sm:$0xff]
    %v535 = vld [vmem:[%s4 + $0x310] sm:$0xff]
    %v536 = vld [vmem:[%s4 + $0x318] sm:$0xff]
    %v537 = vld [vmem:[%s4 + $0x320] sm:$0xff]
    %v538 = vld [vmem:[%s4 + $0x328] sm:$0xff]
    %v539 = vld [vmem:[%s4 + $0x330] sm:$0xff]
    %v540 = vld [vmem:[%s4 + $0x338] sm:$0xff]
    %v541 = vld [vmem:[%s4 + $0x340] sm:$0xff]
    %v542 = vld [vmem:[%s4 + $0x348] sm:$0xff]
    %v543 = vld [vmem:[%s4 + $0x350] sm:$0xff]
    %v544 = vld [vmem:[%s4 + $0x358] sm:$0xff]
    %v545 = vld [vmem:[%s4 + $0x360] sm:$0xff]
    %v546 = vld [vmem:[%s4 + $0x368] sm:$0xff]
    %v547 = vld [vmem:[%s4 + $0x370] sm:$0xff]
    %v548 = vld [vmem:[%s4 + $0x378] sm:$0xff]
    %v549 = vld [vmem:[%s4 + $0x380] sm:$0xff]
    %v550 = vld [vmem:[%s4 + $0x388] sm:$0xff]
    %v551 = vld [vmem:[%s4 + $0x390] sm:$0xff]
    %v552 = vld [vmem:[%s4 + $0x398] sm:$0xff]
    %v553 = vld [vmem:[%s4 + $0x3a0] sm:$0xff]
    %v554 = vld [vmem:[%s4 + $0x3a8] sm:$0xff]
    %v555 = vld [vmem:[%s4 + $0x3b0] sm:$0xff]
    %v556 = vld [vmem:[%s4 + $0x3b8] sm:$0xff]
    %v557 = vld [vmem:[%s4 + $0x3c0] sm:$0xff]
    %v558 = vld [vmem:[%s4 + $0x3c8] sm:$0xff]
    %v559 = vld [vmem:[%s4 + $0x3d0] sm:$0xff]
    %v560 = vld [vmem:[%s4 + $0x3d8] sm:$0xff]
    %v561 = vld [vmem:[%s4 + $0x3e0] sm:$0xff]
    %v562 = vld [vmem:[%s4 + $0x3e8] sm:$0xff]
    %v563 = vld [vmem:[%s4 + $0x3f0] sm:$0xff]
    %v564 = vld [vmem:[%s4 + $0x3f8] sm:$0xff]
    %v565 = vld [vmem:[%s4 + $0x400] sm:$0xff]
    %v566 = vld [vmem:[%s4 + $0x408] sm:$0xff]
    %v567 = vld [vmem:[%s4 + $0x410] sm:$0xff]
    %v568 = vld [vmem:[%s4 + $0x418] sm:$0xff]
    %v569 = vld [vmem:[%s4 + $0x420] sm:$0xff]
    %v570 = vld [vmem:[%s4 + $0x428] sm:$0xff]
    %v571 = vld [vmem:[%s4 + $0x430] sm:$0xff]
    %v572 = vld [vmem:[%s4 + $0x438] sm:$0xff]
    %v573 = vld [vmem:[%s4 + $0x440] sm:$0xff]
    %v574 = vld [vmem:[%s4 + $0x448] sm:$0xff]
    %v575 = vld [vmem:[%s4 + $0x450] sm:$0xff]
    %v576 = vld [vmem:[%s4 + $0x458] sm:$0xff]
    %v577 = vld [vmem:[%s4 + $0x460] sm:$0xff]
    %v578 = vld [vmem:[%s4 + $0x468] sm:$0xff]
    %v579 = vld [vmem:[%s4 + $0x470] sm:$0xff]
    %v580 = vld [vmem:[%s4 + $0x478] sm:$0xff]
    %v581 = vld [vmem:[%s4 + $0x480] sm:$0xff]
    %v582 = vld [vmem:[%s4 + $0x488] sm:$0xff]
    %v583 = vld [vmem:[%s4 + $0x490] sm:$0xff]
    %v584 = vld [vmem:[%s4 + $0x498] sm:$0xff]
    %v585 = vld [vmem:[%s4 + $0x4a0] sm:$0xff]
    %v586 = vld [vmem:[%s4 + $0x4a8] sm:$0xff]
    %v587 = vld [vmem:[%s4 + $0x4b0] sm:$0xff]
    %v588 = vld [vmem:[%s4 + $0x4b8] sm:$0xff]
    %v589 = vld [vmem:[%s4 + $0x4c0] sm:$0xff]
    %v590 = vld [vmem:[%s4 + $0x4c8] sm:$0xff]
    %v591 = vld [vmem:[%s4 + $0x4d0] sm:$0xff]
    %v592 = vld [vmem:[%s4 + $0x4d8] sm:$0xff]
    %v593 = vld [vmem:[%s4 + $0x4e0] sm:$0xff]
    %v594 = vld [vmem:[%s4 + $0x4e8] sm:$0xff]
    %v595 = vld [vmem:[%s4 + $0x4f0] sm:$0xff]
    %v596 = vld [vmem:[%s4 + $0x4f8] sm:$0xff]
    %v597 = vld [vmem:[%s4 + $0x500] sm:$0xff]
    %v598 = vld [vmem:[%s4 + $0x508] sm:$0xff]
    %v599 = vld [vmem:[%s4 + $0x510] sm:$0xff]
    %v600 = vld [vmem:[%s4 + $0x518] sm:$0xff]
    %v601 = vld [vmem:[%s4 + $0x520] sm:$0xff]
    %v602 = vld [vmem:[%s4 + $0x528] sm:$0xff]
    %v603 = vld [vmem:[%s4 + $0x530] sm:$0xff]
    %v604 = vld [vmem:[%s4 + $0x538] sm:$0xff]
    %v605 = vld [vmem:[%s4 + $0x540] sm:$0xff]
    %v606 = vld [vmem:[%s4 + $0x548] sm:$0xff]
    %v607 = vld [vmem:[%s4 + $0x550] sm:$0xff]
    %v608 = vld [vmem:[%s4 + $0x558] sm:$0xff]
    %v609 = vld [vmem:[%s4 + $0x560] sm:$0xff]
    %v610 = vld [vmem:[%s4 + $0x568] sm:$0xff]
    %v611 = vld [vmem:[%s4 + $0x570] sm:$0xff]
    %v612 = vld [vmem:[%s4 + $0x578] sm:$0xff]
    %v613 = vld [vmem:[%s4 + $0x580] sm:$0xff]
    %v614 = vld [vmem:[%s4 + $0x588] sm:$0xff]
    %v615 = vld [vmem:[%s4 + $0x590] sm:$0xff]
    %v616 = vld [vmem:[%s4 + $0x598] sm:$0xff]
    %v617 = vld [vmem:[%s4 + $0x5a0] sm:$0xff]
    %v618 = vld [vmem:[%s4 + $0x5a8] sm:$0xff]
    %v619 = vld [vmem:[%s4 + $0x5b0] sm:$0xff]
    %v620 = vld [vmem:[%s4 + $0x5b8] sm:$0xff]
    %v621 = vld [vmem:[%s4 + $0x5c0] sm:$0xff]
    %v622 = vld [vmem:[%s4 + $0x5c8] sm:$0xff]
    %v623 = vld [vmem:[%s4 + $0x5d0] sm:$0xff]
    %v624 = vld [vmem:[%s4 + $0x5d8] sm:$0xff]
    %v625 = vld [vmem:[%s4 + $0x5e0] sm:$0xff]
    %v626 = vld [vmem:[%s4 + $0x5e8] sm:$0xff]
    %v627 = vld [vmem:[%s4 + $0x5f0] sm:$0xff]
    %v628 = vld [vmem:[%s4 + $0x5f8] sm:$0xff]
    %v629 = vld [vmem:[%s4 + $0x600] sm:$0xff]
    %v630 = vld [vmem:[%s4 + $0x608] sm:$0xff]
    %v631 = vld [vmem:[%s4 + $0x610] sm:$0xff]
    %v632 = vld [vmem:[%s4 + $0x618] sm:$0xff]
    %v633 = vld [vmem:[%s4 + $0x620] sm:$0xff]
    %v634 = vld [vmem:[%s4 + $0x628] sm:$0xff]
    %v635 = vld [vmem:[%s4 + $0x630] sm:$0xff]
    %v636 = vld [vmem:[%s4 + $0x638] sm:$0xff]
    %v637 = vld [vmem:[%s4 + $0x640] sm:$0xff]
    %v638 = vld [vmem:[%s4 + $0x648] sm:$0xff]
    %v639 = vld [vmem:[%s4 + $0x650] sm:$0xff]
    %v640 = vld [vmem:[%s4 + $0x658] sm:$0xff]
    %v641 = vld [vmem:[%s4 + $0x660] sm:$0xff]
    %v642 = vld [vmem:[%s4 + $0x668] sm:$0xff]
    %v643 = vld [vmem:[%s4 + $0x670] sm:$0xff]
    %v644 = vld [vmem:[%s4 + $0x678] sm:$0xff]
    %v645 = vld [vmem:[%s4 + $0x680] sm:$0xff]
    %v646 = vld [vmem:[%s4 + $0x688] sm:$0xff]
    %v647 = vld [vmem:[%s4 + $0x690] sm:$0xff]
    %v648 = vld [vmem:[%s4 + $0x698] sm:$0xff]
    %v649 = vld [vmem:[%s4 + $0x6a0] sm:$0xff]
    %v650 = vld [vmem:[%s4 + $0x6a8] sm:$0xff]
    %v651 = vld [vmem:[%s4 + $0x6b0] sm:$0xff]
    %v652 = vld [vmem:[%s4 + $0x6b8] sm:$0xff]
    %v653 = vld [vmem:[%s4 + $0x6c0] sm:$0xff]
    %v654 = vld [vmem:[%s4 + $0x6c8] sm:$0xff]
    %v655 = vld [vmem:[%s4 + $0x6d0] sm:$0xff]
    %v656 = vld [vmem:[%s4 + $0x6d8] sm:$0xff]
    %v657 = vld [vmem:[%s4 + $0x6e0] sm:$0xff]
    %v658 = vld [vmem:[%s4 + $0x6e8] sm:$0xff]
    %v659 = vld [vmem:[%s4 + $0x6f0] sm:$0xff]
    %v660 = vld [vmem:[%s4 + $0x6f8] sm:$0xff]
    %v661 = vld [vmem:[%s4 + $0x700] sm:$0xff]
    %v662 = vld [vmem:[%s4 + $0x708] sm:$0xff]
    %v663 = vld [vmem:[%s4 + $0x710] sm:$0xff]
    %v664 = vld [vmem:[%s4 + $0x718] sm:$0xff]
    %v665 = vld [vmem:[%s4 + $0x720] sm:$0xff]
    %v666 = vld [vmem:[%s4 + $0x728] sm:$0xff]
    %v667 = vld [vmem:[%s4 + $0x730] sm:$0xff]
    %v668 = vld [vmem:[%s4 + $0x738] sm:$0xff]
    %v669 = vld [vmem:[%s4 + $0x740] sm:$0xff]
    %v670 = vld [vmem:[%s4 + $0x748] sm:$0xff]
    %v671 = vld [vmem:[%s4 + $0x750] sm:$0xff]
    %v672 = vld [vmem:[%s4 + $0x758] sm:$0xff]
    %v673 = vld [vmem:[%s4 + $0x760] sm:$0xff]
    %v674 = vld [vmem:[%s4 + $0x768] sm:$0xff]
    %v675 = vld [vmem:[%s4 + $0x770] sm:$0xff]
    %v676 = vld [vmem:[%s4 + $0x778] sm:$0xff]
    %v677 = vld [vmem:[%s4 + $0x780] sm:$0xff]
    %v678 = vld [vmem:[%s4 + $0x788] sm:$0xff]
    %v679 = vld [vmem:[%s4 + $0x790] sm:$0xff]
    %v680 = vld [vmem:[%s4 + $0x798] sm:$0xff]
    %v681 = vld [vmem:[%s4 + $0x7a0] sm:$0xff]
    %v682 = vld [vmem:[%s4 + $0x7a8] sm:$0xff]
    %v683 = vld [vmem:[%s4 + $0x7b0] sm:$0xff]
    %v684 = vld [vmem:[%s4 + $0x7b8] sm:$0xff]
    %v685 = vld [vmem:[%s4 + $0x7c0] sm:$0xff]
    %v686 = vld [vmem:[%s4 + $0x7c8] sm:$0xff]
    %v687 = vld [vmem:[%s4 + $0x7d0] sm:$0xff]
    %v688 = vld [vmem:[%s4 + $0x7d8] sm:$0xff]
    %v689 = vld [vmem:[%s4 + $0x7e0] sm:$0xff]
    %v690 = vld [vmem:[%s4 + $0x7e8] sm:$0xff]
    %v691 = vld [vmem:[%s4 + $0x7f0] sm:$0xff]
    %v692 = vld [vmem:[%s4 + $0x7f8] sm:$0xff]
    %v693 = vld [vmem:[%s5] sm:$0xf]
    %v694 = vld [vmem:[%s6] sm:$0xf]
    %v695 = vld [vmem:[%s7] sm:$0xf]
    %v696 = vpack.c.bf16 %v429, %v429
    %v697 = vpack.c.bf16 %v430, %v430
    %v698 = vpack.c.bf16 %v431, %v431
    %v699 = vpack.c.bf16 %v432, %v432
    %v700 = vpack.c.bf16 %v433, %v433
    %v701 = vpack.c.bf16 %v434, %v434
    %v702 = vpack.c.bf16 %v435, %v435
    %v703 = vpack.c.bf16 %v436, %v436
    %v705 = vlaneseq
    %v706 = vshrl.u32 %v705, 7
    %v707 = vsub.s32 0, %v706
    %v708 = vrot.slane %v693, %v707
    %v709 = vlaneseq
    %v710 = vshrl.u32 %v709, 7
    %v711 = vsub.s32 1, %v710
    %v712 = vrot.slane %v693, %v711
    %v713 = vlaneseq
    %v714 = vshrl.u32 %v713, 7
    %v715 = vsub.s32 2, %v714
    %v716 = vrot.slane %v693, %v715
    %v717 = vlaneseq
    %v718 = vshrl.u32 %v717, 7
    %v719 = vsub.s32 3, %v718
    %v720 = vrot.slane %v693, %v719
    %v981 = vunpack.c.l.b16 %v437
    %v982 = vunpack.c.h.b16 %v437
    %v983 = vunpack.c.l.b16 %v438
    %v984 = vunpack.c.h.b16 %v438
    %v985 = vunpack.c.l.b16 %v439
    %v986 = vunpack.c.h.b16 %v439
    %v987 = vunpack.c.l.b16 %v440
    %v988 = vunpack.c.h.b16 %v440
    %v989 = vunpack.c.l.b16 %v441
    %v990 = vunpack.c.h.b16 %v441
    %v991 = vunpack.c.l.b16 %v442
    %v992 = vunpack.c.h.b16 %v442
    %v993 = vunpack.c.l.b16 %v443
    %v994 = vunpack.c.h.b16 %v443
    %v995 = vunpack.c.l.b16 %v444
    %v996 = vunpack.c.h.b16 %v444
    %v997 = vunpack.c.l.b16 %v445
    %v998 = vunpack.c.h.b16 %v445
    %v999 = vunpack.c.l.b16 %v446
    %v1000 = vunpack.c.h.b16 %v446
    %v1001 = vunpack.c.l.b16 %v447
    %v1002 = vunpack.c.h.b16 %v447
    %v1003 = vunpack.c.l.b16 %v448
    %v1004 = vunpack.c.h.b16 %v448
    %v1005 = vunpack.c.l.b16 %v449
    %v1006 = vunpack.c.h.b16 %v449
    %v1007 = vunpack.c.l.b16 %v450
    %v1008 = vunpack.c.h.b16 %v450
    %v1009 = vunpack.c.l.b16 %v451
    %v1010 = vunpack.c.h.b16 %v451
    %v1011 = vunpack.c.l.b16 %v452
    %v1012 = vunpack.c.h.b16 %v452
    %v1013 = vunpack.c.l.b16 %v453
    %v1014 = vunpack.c.h.b16 %v453
    %v1015 = vunpack.c.l.b16 %v454
    %v1016 = vunpack.c.h.b16 %v454
    %v1017 = vunpack.c.l.b16 %v455
    %v1018 = vunpack.c.h.b16 %v455
    %v1019 = vunpack.c.l.b16 %v456
    %v1020 = vunpack.c.h.b16 %v456
    %v1021 = vunpack.c.l.b16 %v457
    %v1022 = vunpack.c.h.b16 %v457
    %v1023 = vunpack.c.l.b16 %v458
    %v1024 = vunpack.c.h.b16 %v458
    %v1025 = vunpack.c.l.b16 %v459
    %v1026 = vunpack.c.h.b16 %v459
    %v1027 = vunpack.c.l.b16 %v460
    %v1028 = vunpack.c.h.b16 %v460
    %v1029 = vunpack.c.l.b16 %v461
    %v1030 = vunpack.c.h.b16 %v461
    %v1031 = vunpack.c.l.b16 %v462
    %v1032 = vunpack.c.h.b16 %v462
    %v1033 = vunpack.c.l.b16 %v463
    %v1034 = vunpack.c.h.b16 %v463
    %v1035 = vunpack.c.l.b16 %v464
    %v1036 = vunpack.c.h.b16 %v464
    %v1037 = vunpack.c.l.b16 %v465
    %v1038 = vunpack.c.h.b16 %v465
    %v1039 = vunpack.c.l.b16 %v466
    %v1040 = vunpack.c.h.b16 %v466
    %v1041 = vunpack.c.l.b16 %v467
    %v1042 = vunpack.c.h.b16 %v467
    %v1043 = vunpack.c.l.b16 %v468
    %v1044 = vunpack.c.h.b16 %v468
    %v1045 = vunpack.c.l.b16 %v469
    %v1046 = vunpack.c.h.b16 %v469
    %v1047 = vunpack.c.l.b16 %v470
    %v1048 = vunpack.c.h.b16 %v470
    %v1049 = vunpack.c.l.b16 %v471
    %v1050 = vunpack.c.h.b16 %v471
    %v1051 = vunpack.c.l.b16 %v472
    %v1052 = vunpack.c.h.b16 %v472
    %v1053 = vunpack.c.l.b16 %v473
    %v1054 = vunpack.c.h.b16 %v473
    %v1055 = vunpack.c.l.b16 %v474
    %v1056 = vunpack.c.h.b16 %v474
    %v1057 = vunpack.c.l.b16 %v475
    %v1058 = vunpack.c.h.b16 %v475
    %v1059 = vunpack.c.l.b16 %v476
    %v1060 = vunpack.c.h.b16 %v476
    %v1061 = vunpack.c.l.b16 %v477
    %v1062 = vunpack.c.h.b16 %v477
    %v1063 = vunpack.c.l.b16 %v478
    %v1064 = vunpack.c.h.b16 %v478
    %v1065 = vunpack.c.l.b16 %v479
    %v1066 = vunpack.c.h.b16 %v479
    %v1067 = vunpack.c.l.b16 %v480
    %v1068 = vunpack.c.h.b16 %v480
    %v1069 = vunpack.c.l.b16 %v481
    %v1070 = vunpack.c.h.b16 %v481
    %v1071 = vunpack.c.l.b16 %v482
    %v1072 = vunpack.c.h.b16 %v482
    %v1073 = vunpack.c.l.b16 %v483
    %v1074 = vunpack.c.h.b16 %v483
    %v1075 = vunpack.c.l.b16 %v484
    %v1076 = vunpack.c.h.b16 %v484
    %v1077 = vunpack.c.l.b16 %v485
    %v1078 = vunpack.c.h.b16 %v485
    %v1079 = vunpack.c.l.b16 %v486
    %v1080 = vunpack.c.h.b16 %v486
    %v1081 = vunpack.c.l.b16 %v487
    %v1082 = vunpack.c.h.b16 %v487
    %v1083 = vunpack.c.l.b16 %v488
    %v1084 = vunpack.c.h.b16 %v488
    %v1085 = vunpack.c.l.b16 %v489
    %v1086 = vunpack.c.h.b16 %v489
    %v1087 = vunpack.c.l.b16 %v490
    %v1088 = vunpack.c.h.b16 %v490
    %v1089 = vunpack.c.l.b16 %v491
    %v1090 = vunpack.c.h.b16 %v491
    %v1091 = vunpack.c.l.b16 %v492
    %v1092 = vunpack.c.h.b16 %v492
    %v1093 = vunpack.c.l.b16 %v493
    %v1094 = vunpack.c.h.b16 %v493
    %v1095 = vunpack.c.l.b16 %v494
    %v1096 = vunpack.c.h.b16 %v494
    %v1097 = vunpack.c.l.b16 %v495
    %v1098 = vunpack.c.h.b16 %v495
    %v1099 = vunpack.c.l.b16 %v496
    %v1100 = vunpack.c.h.b16 %v496
    %v1101 = vunpack.c.l.b16 %v497
    %v1102 = vunpack.c.h.b16 %v497
    %v1103 = vunpack.c.l.b16 %v498
    %v1104 = vunpack.c.h.b16 %v498
    %v1105 = vunpack.c.l.b16 %v499
    %v1106 = vunpack.c.h.b16 %v499
    %v1107 = vunpack.c.l.b16 %v500
    %v1108 = vunpack.c.h.b16 %v500
    %v1109 = vunpack.c.l.b16 %v501
    %v1110 = vunpack.c.h.b16 %v501
    %v1111 = vunpack.c.l.b16 %v502
    %v1112 = vunpack.c.h.b16 %v502
    %v1113 = vunpack.c.l.b16 %v503
    %v1114 = vunpack.c.h.b16 %v503
    %v1115 = vunpack.c.l.b16 %v504
    %v1116 = vunpack.c.h.b16 %v504
    %v1117 = vunpack.c.l.b16 %v505
    %v1118 = vunpack.c.h.b16 %v505
    %v1119 = vunpack.c.l.b16 %v506
    %v1120 = vunpack.c.h.b16 %v506
    %v1121 = vunpack.c.l.b16 %v507
    %v1122 = vunpack.c.h.b16 %v507
    %v1123 = vunpack.c.l.b16 %v508
    %v1124 = vunpack.c.h.b16 %v508
    %v1125 = vunpack.c.l.b16 %v509
    %v1126 = vunpack.c.h.b16 %v509
    %v1127 = vunpack.c.l.b16 %v510
    %v1128 = vunpack.c.h.b16 %v510
    %v1129 = vunpack.c.l.b16 %v511
    %v1130 = vunpack.c.h.b16 %v511
    %v1131 = vunpack.c.l.b16 %v512
    %v1132 = vunpack.c.h.b16 %v512
    %v1133 = vunpack.c.l.b16 %v513
    %v1134 = vunpack.c.h.b16 %v513
    %v1135 = vunpack.c.l.b16 %v514
    %v1136 = vunpack.c.h.b16 %v514
    %v1137 = vunpack.c.l.b16 %v515
    %v1138 = vunpack.c.h.b16 %v515
    %v1139 = vunpack.c.l.b16 %v516
    %v1140 = vunpack.c.h.b16 %v516
    %v1141 = vunpack.c.l.b16 %v517
    %v1142 = vunpack.c.h.b16 %v517
    %v1143 = vunpack.c.l.b16 %v518
    %v1144 = vunpack.c.h.b16 %v518
    %v1145 = vunpack.c.l.b16 %v519
    %v1146 = vunpack.c.h.b16 %v519
    %v1147 = vunpack.c.l.b16 %v520
    %v1148 = vunpack.c.h.b16 %v520
    %v1149 = vunpack.c.l.b16 %v521
    %v1150 = vunpack.c.h.b16 %v521
    %v1151 = vunpack.c.l.b16 %v522
    %v1152 = vunpack.c.h.b16 %v522
    %v1153 = vunpack.c.l.b16 %v523
    %v1154 = vunpack.c.h.b16 %v523
    %v1155 = vunpack.c.l.b16 %v524
    %v1156 = vunpack.c.h.b16 %v524
    %v1157 = vunpack.c.l.b16 %v525
    %v1158 = vunpack.c.h.b16 %v525
    %v1159 = vunpack.c.l.b16 %v526
    %v1160 = vunpack.c.h.b16 %v526
    %v1161 = vunpack.c.l.b16 %v527
    %v1162 = vunpack.c.h.b16 %v527
    %v1163 = vunpack.c.l.b16 %v528
    %v1164 = vunpack.c.h.b16 %v528
    %v1165 = vunpack.c.l.b16 %v529
    %v1166 = vunpack.c.h.b16 %v529
    %v1167 = vunpack.c.l.b16 %v530
    %v1168 = vunpack.c.h.b16 %v530
    %v1169 = vunpack.c.l.b16 %v531
    %v1170 = vunpack.c.h.b16 %v531
    %v1171 = vunpack.c.l.b16 %v532
    %v1172 = vunpack.c.h.b16 %v532
    %v1173 = vunpack.c.l.b16 %v533
    %v1174 = vunpack.c.h.b16 %v533
    %v1175 = vunpack.c.l.b16 %v534
    %v1176 = vunpack.c.h.b16 %v534
    %v1177 = vunpack.c.l.b16 %v535
    %v1178 = vunpack.c.h.b16 %v535
    %v1179 = vunpack.c.l.b16 %v536
    %v1180 = vunpack.c.h.b16 %v536
    %v1181 = vunpack.c.l.b16 %v537
    %v1182 = vunpack.c.h.b16 %v537
    %v1183 = vunpack.c.l.b16 %v538
    %v1184 = vunpack.c.h.b16 %v538
    %v1185 = vunpack.c.l.b16 %v539
    %v1186 = vunpack.c.h.b16 %v539
    %v1187 = vunpack.c.l.b16 %v540
    %v1188 = vunpack.c.h.b16 %v540
    %v1189 = vunpack.c.l.b16 %v541
    %v1190 = vunpack.c.h.b16 %v541
    %v1191 = vunpack.c.l.b16 %v542
    %v1192 = vunpack.c.h.b16 %v542
    %v1193 = vunpack.c.l.b16 %v543
    %v1194 = vunpack.c.h.b16 %v543
    %v1195 = vunpack.c.l.b16 %v544
    %v1196 = vunpack.c.h.b16 %v544
    %v1197 = vunpack.c.l.b16 %v545
    %v1198 = vunpack.c.h.b16 %v545
    %v1199 = vunpack.c.l.b16 %v546
    %v1200 = vunpack.c.h.b16 %v546
    %v1201 = vunpack.c.l.b16 %v547
    %v1202 = vunpack.c.h.b16 %v547
    %v1203 = vunpack.c.l.b16 %v548
    %v1204 = vunpack.c.h.b16 %v548
    %v1205 = vunpack.c.l.b16 %v549
    %v1206 = vunpack.c.h.b16 %v549
    %v1207 = vunpack.c.l.b16 %v550
    %v1208 = vunpack.c.h.b16 %v550
    %v1209 = vunpack.c.l.b16 %v551
    %v1210 = vunpack.c.h.b16 %v551
    %v1211 = vunpack.c.l.b16 %v552
    %v1212 = vunpack.c.h.b16 %v552
    %v1213 = vunpack.c.l.b16 %v553
    %v1214 = vunpack.c.h.b16 %v553
    %v1215 = vunpack.c.l.b16 %v554
    %v1216 = vunpack.c.h.b16 %v554
    %v1217 = vunpack.c.l.b16 %v555
    %v1218 = vunpack.c.h.b16 %v555
    %v1219 = vunpack.c.l.b16 %v556
    %v1220 = vunpack.c.h.b16 %v556
    %v1221 = vunpack.c.l.b16 %v557
    %v1222 = vunpack.c.h.b16 %v557
    %v1223 = vunpack.c.l.b16 %v558
    %v1224 = vunpack.c.h.b16 %v558
    %v1225 = vunpack.c.l.b16 %v559
    %v1226 = vunpack.c.h.b16 %v559
    %v1227 = vunpack.c.l.b16 %v560
    %v1228 = vunpack.c.h.b16 %v560
    %v1229 = vunpack.c.l.b16 %v561
    %v1230 = vunpack.c.h.b16 %v561
    %v1231 = vunpack.c.l.b16 %v562
    %v1232 = vunpack.c.h.b16 %v562
    %v1233 = vunpack.c.l.b16 %v563
    %v1234 = vunpack.c.h.b16 %v563
    %v1235 = vunpack.c.l.b16 %v564
    %v1236 = vunpack.c.h.b16 %v564
    %v1237 = vunpack.c.l.b16 %v565
    %v1238 = vunpack.c.h.b16 %v565
    %v1239 = vunpack.c.l.b16 %v566
    %v1240 = vunpack.c.h.b16 %v566
    %v1241 = vunpack.c.l.b16 %v567
    %v1242 = vunpack.c.h.b16 %v567
    %v1243 = vunpack.c.l.b16 %v568
    %v1244 = vunpack.c.h.b16 %v568
    %v1245 = vunpack.c.l.b16 %v569
    %v1246 = vunpack.c.h.b16 %v569
    %v1247 = vunpack.c.l.b16 %v570
    %v1248 = vunpack.c.h.b16 %v570
    %v1249 = vunpack.c.l.b16 %v571
    %v1250 = vunpack.c.h.b16 %v571
    %v1251 = vunpack.c.l.b16 %v572
    %v1252 = vunpack.c.h.b16 %v572
    %v1253 = vunpack.c.l.b16 %v573
    %v1254 = vunpack.c.h.b16 %v573
    %v1255 = vunpack.c.l.b16 %v574
    %v1256 = vunpack.c.h.b16 %v574
    %v1257 = vunpack.c.l.b16 %v575
    %v1258 = vunpack.c.h.b16 %v575
    %v1259 = vunpack.c.l.b16 %v576
    %v1260 = vunpack.c.h.b16 %v576
    %v1261 = vunpack.c.l.b16 %v577
    %v1262 = vunpack.c.h.b16 %v577
    %v1263 = vunpack.c.l.b16 %v578
    %v1264 = vunpack.c.h.b16 %v578
    %v1265 = vunpack.c.l.b16 %v579
    %v1266 = vunpack.c.h.b16 %v579
    %v1267 = vunpack.c.l.b16 %v580
    %v1268 = vunpack.c.h.b16 %v580
    %v1269 = vunpack.c.l.b16 %v581
    %v1270 = vunpack.c.h.b16 %v581
    %v1271 = vunpack.c.l.b16 %v582
    %v1272 = vunpack.c.h.b16 %v582
    %v1273 = vunpack.c.l.b16 %v583
    %v1274 = vunpack.c.h.b16 %v583
    %v1275 = vunpack.c.l.b16 %v584
    %v1276 = vunpack.c.h.b16 %v584
    %v1277 = vunpack.c.l.b16 %v585
    %v1278 = vunpack.c.h.b16 %v585
    %v1279 = vunpack.c.l.b16 %v586
    %v1280 = vunpack.c.h.b16 %v586
    %v1281 = vunpack.c.l.b16 %v587
    %v1282 = vunpack.c.h.b16 %v587
    %v1283 = vunpack.c.l.b16 %v588
    %v1284 = vunpack.c.h.b16 %v588
    %v1285 = vunpack.c.l.b16 %v589
    %v1286 = vunpack.c.h.b16 %v589
    %v1287 = vunpack.c.l.b16 %v590
    %v1288 = vunpack.c.h.b16 %v590
    %v1289 = vunpack.c.l.b16 %v591
    %v1290 = vunpack.c.h.b16 %v591
    %v1291 = vunpack.c.l.b16 %v592
    %v1292 = vunpack.c.h.b16 %v592
    %v1293 = vunpack.c.l.b16 %v593
    %v1294 = vunpack.c.h.b16 %v593
    %v1295 = vunpack.c.l.b16 %v594
    %v1296 = vunpack.c.h.b16 %v594
    %v1297 = vunpack.c.l.b16 %v595
    %v1298 = vunpack.c.h.b16 %v595
    %v1299 = vunpack.c.l.b16 %v596
    %v1300 = vunpack.c.h.b16 %v596
    %v1301 = vunpack.c.l.b16 %v597
    %v1302 = vunpack.c.h.b16 %v597
    %v1303 = vunpack.c.l.b16 %v598
    %v1304 = vunpack.c.h.b16 %v598
    %v1305 = vunpack.c.l.b16 %v599
    %v1306 = vunpack.c.h.b16 %v599
    %v1307 = vunpack.c.l.b16 %v600
    %v1308 = vunpack.c.h.b16 %v600
    %v1309 = vunpack.c.l.b16 %v601
    %v1310 = vunpack.c.h.b16 %v601
    %v1311 = vunpack.c.l.b16 %v602
    %v1312 = vunpack.c.h.b16 %v602
    %v1313 = vunpack.c.l.b16 %v603
    %v1314 = vunpack.c.h.b16 %v603
    %v1315 = vunpack.c.l.b16 %v604
    %v1316 = vunpack.c.h.b16 %v604
    %v1317 = vunpack.c.l.b16 %v605
    %v1318 = vunpack.c.h.b16 %v605
    %v1319 = vunpack.c.l.b16 %v606
    %v1320 = vunpack.c.h.b16 %v606
    %v1321 = vunpack.c.l.b16 %v607
    %v1322 = vunpack.c.h.b16 %v607
    %v1323 = vunpack.c.l.b16 %v608
    %v1324 = vunpack.c.h.b16 %v608
    %v1325 = vunpack.c.l.b16 %v609
    %v1326 = vunpack.c.h.b16 %v609
    %v1327 = vunpack.c.l.b16 %v610
    %v1328 = vunpack.c.h.b16 %v610
    %v1329 = vunpack.c.l.b16 %v611
    %v1330 = vunpack.c.h.b16 %v611
    %v1331 = vunpack.c.l.b16 %v612
    %v1332 = vunpack.c.h.b16 %v612
    %v1333 = vunpack.c.l.b16 %v613
    %v1334 = vunpack.c.h.b16 %v613
    %v1335 = vunpack.c.l.b16 %v614
    %v1336 = vunpack.c.h.b16 %v614
    %v1337 = vunpack.c.l.b16 %v615
    %v1338 = vunpack.c.h.b16 %v615
    %v1339 = vunpack.c.l.b16 %v616
    %v1340 = vunpack.c.h.b16 %v616
    %v1341 = vunpack.c.l.b16 %v617
    %v1342 = vunpack.c.h.b16 %v617
    %v1343 = vunpack.c.l.b16 %v618
    %v1344 = vunpack.c.h.b16 %v618
    %v1345 = vunpack.c.l.b16 %v619
    %v1346 = vunpack.c.h.b16 %v619
    %v1347 = vunpack.c.l.b16 %v620
    %v1348 = vunpack.c.h.b16 %v620
    %v1349 = vunpack.c.l.b16 %v621
    %v1350 = vunpack.c.h.b16 %v621
    %v1351 = vunpack.c.l.b16 %v622
    %v1352 = vunpack.c.h.b16 %v622
    %v1353 = vunpack.c.l.b16 %v623
    %v1354 = vunpack.c.h.b16 %v623
    %v1355 = vunpack.c.l.b16 %v624
    %v1356 = vunpack.c.h.b16 %v624
    %v1357 = vunpack.c.l.b16 %v625
    %v1358 = vunpack.c.h.b16 %v625
    %v1359 = vunpack.c.l.b16 %v626
    %v1360 = vunpack.c.h.b16 %v626
    %v1361 = vunpack.c.l.b16 %v627
    %v1362 = vunpack.c.h.b16 %v627
    %v1363 = vunpack.c.l.b16 %v628
    %v1364 = vunpack.c.h.b16 %v628
    %v1365 = vunpack.c.l.b16 %v629
    %v1366 = vunpack.c.h.b16 %v629
    %v1367 = vunpack.c.l.b16 %v630
    %v1368 = vunpack.c.h.b16 %v630
    %v1369 = vunpack.c.l.b16 %v631
    %v1370 = vunpack.c.h.b16 %v631
    %v1371 = vunpack.c.l.b16 %v632
    %v1372 = vunpack.c.h.b16 %v632
    %v1373 = vunpack.c.l.b16 %v633
    %v1374 = vunpack.c.h.b16 %v633
    %v1375 = vunpack.c.l.b16 %v634
    %v1376 = vunpack.c.h.b16 %v634
    %v1377 = vunpack.c.l.b16 %v635
    %v1378 = vunpack.c.h.b16 %v635
    %v1379 = vunpack.c.l.b16 %v636
    %v1380 = vunpack.c.h.b16 %v636
    %v1381 = vunpack.c.l.b16 %v637
    %v1382 = vunpack.c.h.b16 %v637
    %v1383 = vunpack.c.l.b16 %v638
    %v1384 = vunpack.c.h.b16 %v638
    %v1385 = vunpack.c.l.b16 %v639
    %v1386 = vunpack.c.h.b16 %v639
    %v1387 = vunpack.c.l.b16 %v640
    %v1388 = vunpack.c.h.b16 %v640
    %v1389 = vunpack.c.l.b16 %v641
    %v1390 = vunpack.c.h.b16 %v641
    %v1391 = vunpack.c.l.b16 %v642
    %v1392 = vunpack.c.h.b16 %v642
    %v1393 = vunpack.c.l.b16 %v643
    %v1394 = vunpack.c.h.b16 %v643
    %v1395 = vunpack.c.l.b16 %v644
    %v1396 = vunpack.c.h.b16 %v644
    %v1397 = vunpack.c.l.b16 %v645
    %v1398 = vunpack.c.h.b16 %v645
    %v1399 = vunpack.c.l.b16 %v646
    %v1400 = vunpack.c.h.b16 %v646
    %v1401 = vunpack.c.l.b16 %v647
    %v1402 = vunpack.c.h.b16 %v647
    %v1403 = vunpack.c.l.b16 %v648
    %v1404 = vunpack.c.h.b16 %v648
    %v1405 = vunpack.c.l.b16 %v649
    %v1406 = vunpack.c.h.b16 %v649
    %v1407 = vunpack.c.l.b16 %v650
    %v1408 = vunpack.c.h.b16 %v650
    %v1409 = vunpack.c.l.b16 %v651
    %v1410 = vunpack.c.h.b16 %v651
    %v1411 = vunpack.c.l.b16 %v652
    %v1412 = vunpack.c.h.b16 %v652
    %v1413 = vunpack.c.l.b16 %v653
    %v1414 = vunpack.c.h.b16 %v653
    %v1415 = vunpack.c.l.b16 %v654
    %v1416 = vunpack.c.h.b16 %v654
    %v1417 = vunpack.c.l.b16 %v655
    %v1418 = vunpack.c.h.b16 %v655
    %v1419 = vunpack.c.l.b16 %v656
    %v1420 = vunpack.c.h.b16 %v656
    %v1421 = vunpack.c.l.b16 %v657
    %v1422 = vunpack.c.h.b16 %v657
    %v1423 = vunpack.c.l.b16 %v658
    %v1424 = vunpack.c.h.b16 %v658
    %v1425 = vunpack.c.l.b16 %v659
    %v1426 = vunpack.c.h.b16 %v659
    %v1427 = vunpack.c.l.b16 %v660
    %v1428 = vunpack.c.h.b16 %v660
    %v1429 = vunpack.c.l.b16 %v661
    %v1430 = vunpack.c.h.b16 %v661
    %v1431 = vunpack.c.l.b16 %v662
    %v1432 = vunpack.c.h.b16 %v662
    %v1433 = vunpack.c.l.b16 %v663
    %v1434 = vunpack.c.h.b16 %v663
    %v1435 = vunpack.c.l.b16 %v664
    %v1436 = vunpack.c.h.b16 %v664
    %v1437 = vunpack.c.l.b16 %v665
    %v1438 = vunpack.c.h.b16 %v665
    %v1439 = vunpack.c.l.b16 %v666
    %v1440 = vunpack.c.h.b16 %v666
    %v1441 = vunpack.c.l.b16 %v667
    %v1442 = vunpack.c.h.b16 %v667
    %v1443 = vunpack.c.l.b16 %v668
    %v1444 = vunpack.c.h.b16 %v668
    %v1445 = vunpack.c.l.b16 %v669
    %v1446 = vunpack.c.h.b16 %v669
    %v1447 = vunpack.c.l.b16 %v670
    %v1448 = vunpack.c.h.b16 %v670
    %v1449 = vunpack.c.l.b16 %v671
    %v1450 = vunpack.c.h.b16 %v671
    %v1451 = vunpack.c.l.b16 %v672
    %v1452 = vunpack.c.h.b16 %v672
    %v1453 = vunpack.c.l.b16 %v673
    %v1454 = vunpack.c.h.b16 %v673
    %v1455 = vunpack.c.l.b16 %v674
    %v1456 = vunpack.c.h.b16 %v674
    %v1457 = vunpack.c.l.b16 %v675
    %v1458 = vunpack.c.h.b16 %v675
    %v1459 = vunpack.c.l.b16 %v676
    %v1460 = vunpack.c.h.b16 %v676
    %v1461 = vunpack.c.l.b16 %v677
    %v1462 = vunpack.c.h.b16 %v677
    %v1463 = vunpack.c.l.b16 %v678
    %v1464 = vunpack.c.h.b16 %v678
    %v1465 = vunpack.c.l.b16 %v679
    %v1466 = vunpack.c.h.b16 %v679
    %v1467 = vunpack.c.l.b16 %v680
    %v1468 = vunpack.c.h.b16 %v680
    %v1469 = vunpack.c.l.b16 %v681
    %v1470 = vunpack.c.h.b16 %v681
    %v1471 = vunpack.c.l.b16 %v682
    %v1472 = vunpack.c.h.b16 %v682
    %v1473 = vunpack.c.l.b16 %v683
    %v1474 = vunpack.c.h.b16 %v683
    %v1475 = vunpack.c.l.b16 %v684
    %v1476 = vunpack.c.h.b16 %v684
    %v1477 = vunpack.c.l.b16 %v685
    %v1478 = vunpack.c.h.b16 %v685
    %v1479 = vunpack.c.l.b16 %v686
    %v1480 = vunpack.c.h.b16 %v686
    %v1481 = vunpack.c.l.b16 %v687
    %v1482 = vunpack.c.h.b16 %v687
    %v1483 = vunpack.c.l.b16 %v688
    %v1484 = vunpack.c.h.b16 %v688
    %v1485 = vunpack.c.l.b16 %v689
    %v1486 = vunpack.c.h.b16 %v689
    %v1487 = vunpack.c.l.b16 %v690
    %v1488 = vunpack.c.h.b16 %v690
    %v1489 = vunpack.c.l.b16 %v691
    %v1490 = vunpack.c.h.b16 %v691
    %v1491 = vunpack.c.l.b16 %v692
    %v1492 = vunpack.c.h.b16 %v692
    %v1493 = vpack.c.b16 %v985, %v981
    %v1494 = vpack.c.b16 %v986, %v982
    %v1495 = vpack.c.b16 %v987, %v983
    %v1496 = vpack.c.b16 %v988, %v984
    %v1497 = vpack.c.b16 %v993, %v989
    %v1498 = vpack.c.b16 %v994, %v990
    %v1499 = vpack.c.b16 %v995, %v991
    %v1500 = vpack.c.b16 %v996, %v992
    %v1501 = vpack.c.b16 %v1001, %v997
    %v1502 = vpack.c.b16 %v1002, %v998
    %v1503 = vpack.c.b16 %v1003, %v999
    %v1504 = vpack.c.b16 %v1004, %v1000
    %v1505 = vpack.c.b16 %v1009, %v1005
    %v1506 = vpack.c.b16 %v1010, %v1006
    %v1507 = vpack.c.b16 %v1011, %v1007
    %v1508 = vpack.c.b16 %v1012, %v1008
    %v1509 = vpack.c.b16 %v1017, %v1013
    %v1510 = vpack.c.b16 %v1018, %v1014
    %v1511 = vpack.c.b16 %v1019, %v1015
    %v1512 = vpack.c.b16 %v1020, %v1016
    %v1513 = vpack.c.b16 %v1025, %v1021
    %v1514 = vpack.c.b16 %v1026, %v1022
    %v1515 = vpack.c.b16 %v1027, %v1023
    %v1516 = vpack.c.b16 %v1028, %v1024
    %v1517 = vpack.c.b16 %v1033, %v1029
    %v1518 = vpack.c.b16 %v1034, %v1030
    %v1519 = vpack.c.b16 %v1035, %v1031
    %v1520 = vpack.c.b16 %v1036, %v1032
    %v1521 = vpack.c.b16 %v1041, %v1037
    %v1522 = vpack.c.b16 %v1042, %v1038
    %v1523 = vpack.c.b16 %v1043, %v1039
    %v1524 = vpack.c.b16 %v1044, %v1040
    %v1525 = vpack.c.b16 %v1049, %v1045
    %v1526 = vpack.c.b16 %v1050, %v1046
    %v1527 = vpack.c.b16 %v1051, %v1047
    %v1528 = vpack.c.b16 %v1052, %v1048
    %v1529 = vpack.c.b16 %v1057, %v1053
    %v1530 = vpack.c.b16 %v1058, %v1054
    %v1531 = vpack.c.b16 %v1059, %v1055
    %v1532 = vpack.c.b16 %v1060, %v1056
    %v1533 = vpack.c.b16 %v1065, %v1061
    %v1534 = vpack.c.b16 %v1066, %v1062
    %v1535 = vpack.c.b16 %v1067, %v1063
    %v1536 = vpack.c.b16 %v1068, %v1064
    %v1537 = vpack.c.b16 %v1073, %v1069
    %v1538 = vpack.c.b16 %v1074, %v1070
    %v1539 = vpack.c.b16 %v1075, %v1071
    %v1540 = vpack.c.b16 %v1076, %v1072
    %v1541 = vpack.c.b16 %v1081, %v1077
    %v1542 = vpack.c.b16 %v1082, %v1078
    %v1543 = vpack.c.b16 %v1083, %v1079
    %v1544 = vpack.c.b16 %v1084, %v1080
    %v1545 = vpack.c.b16 %v1089, %v1085
    %v1546 = vpack.c.b16 %v1090, %v1086
    %v1547 = vpack.c.b16 %v1091, %v1087
    %v1548 = vpack.c.b16 %v1092, %v1088
    %v1549 = vpack.c.b16 %v1097, %v1093
    %v1550 = vpack.c.b16 %v1098, %v1094
    %v1551 = vpack.c.b16 %v1099, %v1095
    %v1552 = vpack.c.b16 %v1100, %v1096
    %v1553 = vpack.c.b16 %v1105, %v1101
    %v1554 = vpack.c.b16 %v1106, %v1102
    %v1555 = vpack.c.b16 %v1107, %v1103
    %v1556 = vpack.c.b16 %v1108, %v1104
    %v1557 = vpack.c.b16 %v1113, %v1109
    %v1558 = vpack.c.b16 %v1114, %v1110
    %v1559 = vpack.c.b16 %v1115, %v1111
    %v1560 = vpack.c.b16 %v1116, %v1112
    %v1561 = vpack.c.b16 %v1121, %v1117
    %v1562 = vpack.c.b16 %v1122, %v1118
    %v1563 = vpack.c.b16 %v1123, %v1119
    %v1564 = vpack.c.b16 %v1124, %v1120
    %v1565 = vpack.c.b16 %v1129, %v1125
    %v1566 = vpack.c.b16 %v1130, %v1126
    %v1567 = vpack.c.b16 %v1131, %v1127
    %v1568 = vpack.c.b16 %v1132, %v1128
    %v1569 = vpack.c.b16 %v1137, %v1133
    %v1570 = vpack.c.b16 %v1138, %v1134
    %v1571 = vpack.c.b16 %v1139, %v1135
    %v1572 = vpack.c.b16 %v1140, %v1136
    %v1573 = vpack.c.b16 %v1145, %v1141
    %v1574 = vpack.c.b16 %v1146, %v1142
    %v1575 = vpack.c.b16 %v1147, %v1143
    %v1576 = vpack.c.b16 %v1148, %v1144
    %v1577 = vpack.c.b16 %v1153, %v1149
    %v1578 = vpack.c.b16 %v1154, %v1150
    %v1579 = vpack.c.b16 %v1155, %v1151
    %v1580 = vpack.c.b16 %v1156, %v1152
    %v1581 = vpack.c.b16 %v1161, %v1157
    %v1582 = vpack.c.b16 %v1162, %v1158
    %v1583 = vpack.c.b16 %v1163, %v1159
    %v1584 = vpack.c.b16 %v1164, %v1160
    %v1585 = vpack.c.b16 %v1169, %v1165
    %v1586 = vpack.c.b16 %v1170, %v1166
    %v1587 = vpack.c.b16 %v1171, %v1167
    %v1588 = vpack.c.b16 %v1172, %v1168
    %v1589 = vpack.c.b16 %v1177, %v1173
    %v1590 = vpack.c.b16 %v1178, %v1174
    %v1591 = vpack.c.b16 %v1179, %v1175
    %v1592 = vpack.c.b16 %v1180, %v1176
    %v1593 = vpack.c.b16 %v1185, %v1181
    %v1594 = vpack.c.b16 %v1186, %v1182
    %v1595 = vpack.c.b16 %v1187, %v1183
    %v1596 = vpack.c.b16 %v1188, %v1184
    %v1597 = vpack.c.b16 %v1193, %v1189
    %v1598 = vpack.c.b16 %v1194, %v1190
    %v1599 = vpack.c.b16 %v1195, %v1191
    %v1600 = vpack.c.b16 %v1196, %v1192
    %v1601 = vpack.c.b16 %v1201, %v1197
    %v1602 = vpack.c.b16 %v1202, %v1198
    %v1603 = vpack.c.b16 %v1203, %v1199
    %v1604 = vpack.c.b16 %v1204, %v1200
    %v1605 = vpack.c.b16 %v1209, %v1205
    %v1606 = vpack.c.b16 %v1210, %v1206
    %v1607 = vpack.c.b16 %v1211, %v1207
    %v1608 = vpack.c.b16 %v1212, %v1208
    %v1609 = vpack.c.b16 %v1217, %v1213
    %v1610 = vpack.c.b16 %v1218, %v1214
    %v1611 = vpack.c.b16 %v1219, %v1215
    %v1612 = vpack.c.b16 %v1220, %v1216
    %v1613 = vpack.c.b16 %v1225, %v1221
    %v1614 = vpack.c.b16 %v1226, %v1222
    %v1615 = vpack.c.b16 %v1227, %v1223
    %v1616 = vpack.c.b16 %v1228, %v1224
    %v1617 = vpack.c.b16 %v1233, %v1229
    %v1618 = vpack.c.b16 %v1234, %v1230
    %v1619 = vpack.c.b16 %v1235, %v1231
    %v1620 = vpack.c.b16 %v1236, %v1232
    %v1621 = vpack.c.b16 %v1241, %v1237
    %v1622 = vpack.c.b16 %v1242, %v1238
    %v1623 = vpack.c.b16 %v1243, %v1239
    %v1624 = vpack.c.b16 %v1244, %v1240
    %v1625 = vpack.c.b16 %v1249, %v1245
    %v1626 = vpack.c.b16 %v1250, %v1246
    %v1627 = vpack.c.b16 %v1251, %v1247
    %v1628 = vpack.c.b16 %v1252, %v1248
    %v1629 = vpack.c.b16 %v1257, %v1253
    %v1630 = vpack.c.b16 %v1258, %v1254
    %v1631 = vpack.c.b16 %v1259, %v1255
    %v1632 = vpack.c.b16 %v1260, %v1256
    %v1633 = vpack.c.b16 %v1265, %v1261
    %v1634 = vpack.c.b16 %v1266, %v1262
    %v1635 = vpack.c.b16 %v1267, %v1263
    %v1636 = vpack.c.b16 %v1268, %v1264
    %v1637 = vpack.c.b16 %v1273, %v1269
    %v1638 = vpack.c.b16 %v1274, %v1270
    %v1639 = vpack.c.b16 %v1275, %v1271
    %v1640 = vpack.c.b16 %v1276, %v1272
    %v1641 = vpack.c.b16 %v1281, %v1277
    %v1642 = vpack.c.b16 %v1282, %v1278
    %v1643 = vpack.c.b16 %v1283, %v1279
    %v1644 = vpack.c.b16 %v1284, %v1280
    %v1645 = vpack.c.b16 %v1289, %v1285
    %v1646 = vpack.c.b16 %v1290, %v1286
    %v1647 = vpack.c.b16 %v1291, %v1287
    %v1648 = vpack.c.b16 %v1292, %v1288
    %v1649 = vpack.c.b16 %v1297, %v1293
    %v1650 = vpack.c.b16 %v1298, %v1294
    %v1651 = vpack.c.b16 %v1299, %v1295
    %v1652 = vpack.c.b16 %v1300, %v1296
    %v1653 = vpack.c.b16 %v1305, %v1301
    %v1654 = vpack.c.b16 %v1306, %v1302
    %v1655 = vpack.c.b16 %v1307, %v1303
    %v1656 = vpack.c.b16 %v1308, %v1304
    %v1657 = vpack.c.b16 %v1313, %v1309
    %v1658 = vpack.c.b16 %v1314, %v1310
    %v1659 = vpack.c.b16 %v1315, %v1311
    %v1660 = vpack.c.b16 %v1316, %v1312
    %v1661 = vpack.c.b16 %v1321, %v1317
    %v1662 = vpack.c.b16 %v1322, %v1318
    %v1663 = vpack.c.b16 %v1323, %v1319
    %v1664 = vpack.c.b16 %v1324, %v1320
    %v1665 = vpack.c.b16 %v1329, %v1325
    %v1666 = vpack.c.b16 %v1330, %v1326
    %v1667 = vpack.c.b16 %v1331, %v1327
    %v1668 = vpack.c.b16 %v1332, %v1328
    %v1669 = vpack.c.b16 %v1337, %v1333
    %v1670 = vpack.c.b16 %v1338, %v1334
    %v1671 = vpack.c.b16 %v1339, %v1335
    %v1672 = vpack.c.b16 %v1340, %v1336
    %v1673 = vpack.c.b16 %v1345, %v1341
    %v1674 = vpack.c.b16 %v1346, %v1342
    %v1675 = vpack.c.b16 %v1347, %v1343
    %v1676 = vpack.c.b16 %v1348, %v1344
    %v1677 = vpack.c.b16 %v1353, %v1349
    %v1678 = vpack.c.b16 %v1354, %v1350
    %v1679 = vpack.c.b16 %v1355, %v1351
    %v1680 = vpack.c.b16 %v1356, %v1352
    %v1681 = vpack.c.b16 %v1361, %v1357
    %v1682 = vpack.c.b16 %v1362, %v1358
    %v1683 = vpack.c.b16 %v1363, %v1359
    %v1684 = vpack.c.b16 %v1364, %v1360
    %v1685 = vpack.c.b16 %v1369, %v1365
    %v1686 = vpack.c.b16 %v1370, %v1366
    %v1687 = vpack.c.b16 %v1371, %v1367
    %v1688 = vpack.c.b16 %v1372, %v1368
    %v1689 = vpack.c.b16 %v1377, %v1373
    %v1690 = vpack.c.b16 %v1378, %v1374
    %v1691 = vpack.c.b16 %v1379, %v1375
    %v1692 = vpack.c.b16 %v1380, %v1376
    %v1693 = vpack.c.b16 %v1385, %v1381
    %v1694 = vpack.c.b16 %v1386, %v1382
    %v1695 = vpack.c.b16 %v1387, %v1383
    %v1696 = vpack.c.b16 %v1388, %v1384
    %v1697 = vpack.c.b16 %v1393, %v1389
    %v1698 = vpack.c.b16 %v1394, %v1390
    %v1699 = vpack.c.b16 %v1395, %v1391
    %v1700 = vpack.c.b16 %v1396, %v1392
    %v1701 = vpack.c.b16 %v1401, %v1397
    %v1702 = vpack.c.b16 %v1402, %v1398
    %v1703 = vpack.c.b16 %v1403, %v1399
    %v1704 = vpack.c.b16 %v1404, %v1400
    %v1705 = vpack.c.b16 %v1409, %v1405
    %v1706 = vpack.c.b16 %v1410, %v1406
    %v1707 = vpack.c.b16 %v1411, %v1407
    %v1708 = vpack.c.b16 %v1412, %v1408
    %v1709 = vpack.c.b16 %v1417, %v1413
    %v1710 = vpack.c.b16 %v1418, %v1414
    %v1711 = vpack.c.b16 %v1419, %v1415
    %v1712 = vpack.c.b16 %v1420, %v1416
    %v1713 = vpack.c.b16 %v1425, %v1421
    %v1714 = vpack.c.b16 %v1426, %v1422
    %v1715 = vpack.c.b16 %v1427, %v1423
    %v1716 = vpack.c.b16 %v1428, %v1424
    %v1717 = vpack.c.b16 %v1433, %v1429
    %v1718 = vpack.c.b16 %v1434, %v1430
    %v1719 = vpack.c.b16 %v1435, %v1431
    %v1720 = vpack.c.b16 %v1436, %v1432
    %v1721 = vpack.c.b16 %v1441, %v1437
    %v1722 = vpack.c.b16 %v1442, %v1438
    %v1723 = vpack.c.b16 %v1443, %v1439
    %v1724 = vpack.c.b16 %v1444, %v1440
    %v1725 = vpack.c.b16 %v1449, %v1445
    %v1726 = vpack.c.b16 %v1450, %v1446
    %v1727 = vpack.c.b16 %v1451, %v1447
    %v1728 = vpack.c.b16 %v1452, %v1448
    %v1729 = vpack.c.b16 %v1457, %v1453
    %v1730 = vpack.c.b16 %v1458, %v1454
    %v1731 = vpack.c.b16 %v1459, %v1455
    %v1732 = vpack.c.b16 %v1460, %v1456
    %v1733 = vpack.c.b16 %v1465, %v1461
    %v1734 = vpack.c.b16 %v1466, %v1462
    %v1735 = vpack.c.b16 %v1467, %v1463
    %v1736 = vpack.c.b16 %v1468, %v1464
    %v1737 = vpack.c.b16 %v1473, %v1469
    %v1738 = vpack.c.b16 %v1474, %v1470
    %v1739 = vpack.c.b16 %v1475, %v1471
    %v1740 = vpack.c.b16 %v1476, %v1472
    %v1741 = vpack.c.b16 %v1481, %v1477
    %v1742 = vpack.c.b16 %v1482, %v1478
    %v1743 = vpack.c.b16 %v1483, %v1479
    %v1744 = vpack.c.b16 %v1484, %v1480
    %v1745 = vpack.c.b16 %v1489, %v1485
    %v1746 = vpack.c.b16 %v1490, %v1486
    %v1747 = vpack.c.b16 %v1491, %v1487
    %v1748 = vpack.c.b16 %v1492, %v1488
    %2005 = vmatprep.subr.bf16.mxu0 %v1494
    %2006 = vmatpush1.bf16.msra.mxu0 %v1493
    %2007 = vmatprep.subr.bf16.mxu0 %v1498
    %2008 = vmatpush1.bf16.msra.mxu0 %v1497
    %2009 = vmatprep.subr.bf16.mxu0 %v1502
    %2010 = vmatpush1.bf16.msra.mxu0 %v1501
    %2011 = vmatprep.subr.bf16.mxu0 %v1506
    %2012 = vmatpush1.bf16.msra.mxu0 %v1505
    %2013 = vmatprep.subr.bf16.mxu0 %v1510
    %2014 = vmatpush1.bf16.msra.mxu0 %v1509
    %2015 = vmatprep.subr.bf16.mxu0 %v1514
    %2016 = vmatpush1.bf16.msra.mxu0 %v1513
    %2017 = vmatprep.subr.bf16.mxu0 %v1518
    %2018 = vmatpush1.bf16.msra.mxu0 %v1517
    %2019 = vmatprep.subr.bf16.mxu0 %v1522
    %2020 = vmatpush1.bf16.msra.mxu0 %v1521
    %2021 = vmatprep.subr.bf16.mxu0 %v1526
    %2022 = vmatpush1.bf16.msra.mxu0 %v1525
    %2023 = vmatprep.subr.bf16.mxu0 %v1530
    %2024 = vmatpush1.bf16.msra.mxu0 %v1529
    %2025 = vmatprep.subr.bf16.mxu0 %v1534
    %2026 = vmatpush1.bf16.msra.mxu0 %v1533
    %2027 = vmatprep.subr.bf16.mxu0 %v1538
    %2028 = vmatpush1.bf16.msra.mxu0 %v1537
    %2029 = vmatprep.subr.bf16.mxu0 %v1542
    %2030 = vmatpush1.bf16.msra.mxu0 %v1541
    %2031 = vmatprep.subr.bf16.mxu0 %v1546
    %2032 = vmatpush1.bf16.msra.mxu0 %v1545
    %2033 = vmatprep.subr.bf16.mxu0 %v1550
    %2034 = vmatpush1.bf16.msra.mxu0 %v1549
    %2035 = vmatprep.subr.bf16.mxu0 %v1554
    %2036 = vmatpush1.bf16.msra.mxu0 %v1553
    %2037 = vmatprep.mubr.bf16.mxu0 %v697
    %2038 = vmatmul.mubr.bf16.gmra.mrb[0].mxu0 %v696
    %v2039 = vpop.f32.mrb[0].mxu0
    %v2040 = vadd.f32 %v708, %v2039
    %v2041 = vpop.f32.mrb[0].mxu0
    %v2042 = vadd.f32 %v712, %v2041
    %v2043 = vpop.f32.mrb[0].mxu0
    %v2044 = vpop.f32.mrb[0].mxu0
    %2045 = vdwg.mxu0
    %2046 = vmatprep.subr.bf16.mxu0 %v1558
    %2047 = vmatpush1.bf16.msra.mxu0 %v1557
    %2048 = vmatprep.subr.bf16.mxu0 %v1562
    %2049 = vmatpush1.bf16.msra.mxu0 %v1561
    %2050 = vmatprep.subr.bf16.mxu0 %v1566
    %2051 = vmatpush1.bf16.msra.mxu0 %v1565
    %2052 = vmatprep.subr.bf16.mxu0 %v1570
    %2053 = vmatpush1.bf16.msra.mxu0 %v1569
    %2054 = vmatprep.subr.bf16.mxu0 %v1574
    %2055 = vmatpush1.bf16.msra.mxu0 %v1573
    %2056 = vmatprep.subr.bf16.mxu0 %v1578
    %2057 = vmatpush1.bf16.msra.mxu0 %v1577
    %2058 = vmatprep.subr.bf16.mxu0 %v1582
    %2059 = vmatpush1.bf16.msra.mxu0 %v1581
    %2060 = vmatprep.subr.bf16.mxu0 %v1586
    %2061 = vmatpush1.bf16.msra.mxu0 %v1585
    %2062 = vmatprep.subr.bf16.mxu0 %v1590
    %2063 = vmatpush1.bf16.msra.mxu0 %v1589
    %2064 = vmatprep.subr.bf16.mxu0 %v1594
    %2065 = vmatpush1.bf16.msra.mxu0 %v1593
    %2066 = vmatprep.subr.bf16.mxu0 %v1598
    %2067 = vmatpush1.bf16.msra.mxu0 %v1597
    %2068 = vmatprep.subr.bf16.mxu0 %v1602
    %2069 = vmatpush1.bf16.msra.mxu0 %v1601
    %2070 = vmatprep.subr.bf16.mxu0 %v1606
    %2071 = vmatpush1.bf16.msra.mxu0 %v1605
    %2072 = vmatprep.subr.bf16.mxu0 %v1610
    %2073 = vmatpush1.bf16.msra.mxu0 %v1609
    %2074 = vmatprep.subr.bf16.mxu0 %v1614
    %2075 = vmatpush1.bf16.msra.mxu0 %v1613
    %2076 = vmatprep.subr.bf16.mxu0 %v1618
    %2077 = vmatpush1.bf16.msra.mxu0 %v1617
    %2078 = vmatprep.mubr.bf16.mxu0 %v699
    %2079 = vmatmul.mubr.bf16.gmra.mrb[0].mxu0 %v698
    %v2080 = vpop.f32.mrb[0].mxu0
    %v2081 = vadd.f32 %v2040, %v2080
    %v2082 = vpop.f32.mrb[0].mxu0
    %v2083 = vadd.f32 %v2042, %v2082
    %v2084 = vpop.f32.mrb[0].mxu0
    %v2085 = vpop.f32.mrb[0].mxu0
    %2086 = vdwg.mxu0
    %2087 = vmatprep.subr.bf16.mxu0 %v1622
    %2088 = vmatpush1.bf16.msra.mxu0 %v1621
    %2089 = vmatprep.subr.bf16.mxu0 %v1626
    %2090 = vmatpush1.bf16.msra.mxu0 %v1625
    %2091 = vmatprep.subr.bf16.mxu0 %v1630
    %2092 = vmatpush1.bf16.msra.mxu0 %v1629
    %2093 = vmatprep.subr.bf16.mxu0 %v1634
    %2094 = vmatpush1.bf16.msra.mxu0 %v1633
    %2095 = vmatprep.subr.bf16.mxu0 %v1638
    %2096 = vmatpush1.bf16.msra.mxu0 %v1637
    %2097 = vmatprep.subr.bf16.mxu0 %v1642
    %2098 = vmatpush1.bf16.msra.mxu0 %v1641
    %2099 = vmatprep.subr.bf16.mxu0 %v1646
    %2100 = vmatpush1.bf16.msra.mxu0 %v1645
    %2101 = vmatprep.subr.bf16.mxu0 %v1650
    %2102 = vmatpush1.bf16.msra.mxu0 %v1649
    %2103 = vmatprep.subr.bf16.mxu0 %v1654
    %2104 = vmatpush1.bf16.msra.mxu0 %v1653
    %2105 = vmatprep.subr.bf16.mxu0 %v1658
    %2106 = vmatpush1.bf16.msra.mxu0 %v1657
    %2107 = vmatprep.subr.bf16.mxu0 %v1662
    %2108 = vmatpush1.bf16.msra.mxu0 %v1661
    %2109 = vmatprep.subr.bf16.mxu0 %v1666
    %2110 = vmatpush1.bf16.msra.mxu0 %v1665
    %2111 = vmatprep.subr.bf16.mxu0 %v1670
    %2112 = vmatpush1.bf16.msra.mxu0 %v1669
    %2113 = vmatprep.subr.bf16.mxu0 %v1674
    %2114 = vmatpush1.bf16.msra.mxu0 %v1673
    %2115 = vmatprep.subr.bf16.mxu0 %v1678
    %2116 = vmatpush1.bf16.msra.mxu0 %v1677
    %2117 = vmatprep.subr.bf16.mxu0 %v1682
    %2118 = vmatpush1.bf16.msra.mxu0 %v1681
    %2119 = vmatprep.mubr.bf16.mxu0 %v701
    %2120 = vmatmul.mubr.bf16.gmra.mrb[0].mxu0 %v700
    %v2121 = vpop.f32.mrb[0].mxu0
    %v2122 = vadd.f32 %v2081, %v2121
    %v2123 = vpop.f32.mrb[0].mxu0
    %v2124 = vadd.f32 %v2083, %v2123
    %v2125 = vpop.f32.mrb[0].mxu0
    %v2126 = vpop.f32.mrb[0].mxu0
    %2127 = vdwg.mxu0
    %2128 = vmatprep.subr.bf16.mxu0 %v1686
    %2129 = vmatpush1.bf16.msra.mxu0 %v1685
    %2130 = vmatprep.subr.bf16.mxu0 %v1690
    %2131 = vmatpush1.bf16.msra.mxu0 %v1689
    %2132 = vmatprep.subr.bf16.mxu0 %v1694
    %2133 = vmatpush1.bf16.msra.mxu0 %v1693
    %2134 = vmatprep.subr.bf16.mxu0 %v1698
    %2135 = vmatpush1.bf16.msra.mxu0 %v1697
    %2136 = vmatprep.subr.bf16.mxu0 %v1702
    %2137 = vmatpush1.bf16.msra.mxu0 %v1701
    %2138 = vmatprep.subr.bf16.mxu0 %v1706
    %2139 = vmatpush1.bf16.msra.mxu0 %v1705
    %2140 = vmatprep.subr.bf16.mxu0 %v1710
    %2141 = vmatpush1.bf16.msra.mxu0 %v1709
    %2142 = vmatprep.subr.bf16.mxu0 %v1714
    %2143 = vmatpush1.bf16.msra.mxu0 %v1713
    %2144 = vmatprep.subr.bf16.mxu0 %v1718
    %2145 = vmatpush1.bf16.msra.mxu0 %v1717
    %2146 = vmatprep.subr.bf16.mxu0 %v1722
    %2147 = vmatpush1.bf16.msra.mxu0 %v1721
    %2148 = vmatprep.subr.bf16.mxu0 %v1726
    %2149 = vmatpush1.bf16.msra.mxu0 %v1725
    %2150 = vmatprep.subr.bf16.mxu0 %v1730
    %2151 = vmatpush1.bf16.msra.mxu0 %v1729
    %2152 = vmatprep.subr.bf16.mxu0 %v1734
    %2153 = vmatpush1.bf16.msra.mxu0 %v1733
    %2154 = vmatprep.subr.bf16.mxu0 %v1738
    %2155 = vmatpush1.bf16.msra.mxu0 %v1737
    %2156 = vmatprep.subr.bf16.mxu0 %v1742
    %2157 = vmatpush1.bf16.msra.mxu0 %v1741
    %2158 = vmatprep.subr.bf16.mxu0 %v1746
    %2159 = vmatpush1.bf16.msra.mxu0 %v1745
    %2160 = vmatprep.mubr.bf16.mxu0 %v703
    %2161 = vmatmul.mubr.bf16.gmra.mrb[0].mxu0 %v702
    %v2162 = vpop.f32.mrb[0].mxu0
    %v2163 = vadd.f32 %v2122, %v2162
    %v2164 = vpop.f32.mrb[0].mxu0
    %v2165 = vadd.f32 %v2124, %v2164
    %v2166 = vpop.f32.mrb[0].mxu0
    %v2167 = vpop.f32.mrb[0].mxu0
    %2168 = vdwg.mxu0
    %2169 = vmatprep.subr.bf16.mxu0 %v1496
    %2170 = vmatpush1.bf16.msra.mxu0 %v1495
    %2171 = vmatprep.subr.bf16.mxu0 %v1500
    %2172 = vmatpush1.bf16.msra.mxu0 %v1499
    %2173 = vmatprep.subr.bf16.mxu0 %v1504
    %2174 = vmatpush1.bf16.msra.mxu0 %v1503
    %2175 = vmatprep.subr.bf16.mxu0 %v1508
    %2176 = vmatpush1.bf16.msra.mxu0 %v1507
    %2177 = vmatprep.subr.bf16.mxu0 %v1512
    %2178 = vmatpush1.bf16.msra.mxu0 %v1511
    %2179 = vmatprep.subr.bf16.mxu0 %v1516
    %2180 = vmatpush1.bf16.msra.mxu0 %v1515
    %2181 = vmatprep.subr.bf16.mxu0 %v1520
    %2182 = vmatpush1.bf16.msra.mxu0 %v1519
    %2183 = vmatprep.subr.bf16.mxu0 %v1524
    %2184 = vmatpush1.bf16.msra.mxu0 %v1523
    %2185 = vmatprep.subr.bf16.mxu0 %v1528
    %2186 = vmatpush1.bf16.msra.mxu0 %v1527
    %2187 = vmatprep.subr.bf16.mxu0 %v1532
    %2188 = vmatpush1.bf16.msra.mxu0 %v1531
    %2189 = vmatprep.subr.bf16.mxu0 %v1536
    %2190 = vmatpush1.bf16.msra.mxu0 %v1535
    %2191 = vmatprep.subr.bf16.mxu0 %v1540
    %2192 = vmatpush1.bf16.msra.mxu0 %v1539
    %2193 = vmatprep.subr.bf16.mxu0 %v1544
    %2194 = vmatpush1.bf16.msra.mxu0 %v1543
    %2195 = vmatprep.subr.bf16.mxu0 %v1548
    %2196 = vmatpush1.bf16.msra.mxu0 %v1547
    %2197 = vmatprep.subr.bf16.mxu0 %v1552
    %2198 = vmatpush1.bf16.msra.mxu0 %v1551
    %2199 = vmatprep.subr.bf16.mxu0 %v1556
    %2200 = vmatpush1.bf16.msra.mxu0 %v1555
    %2201 = vmatprep.mubr.bf16.mxu0 %v697
    %2202 = vmatmul.mubr.bf16.gmra.mrb[0].mxu0 %v696
    %v2203 = vpop.f32.mrb[0].mxu0
    %v2204 = vadd.f32 %v716, %v2203
    %v2205 = vpop.f32.mrb[0].mxu0
    %v2206 = vadd.f32 %v720, %v2205
    %v2207 = vpop.f32.mrb[0].mxu0
    %v2208 = vpop.f32.mrb[0].mxu0
    %2209 = vdwg.mxu0
    %2210 = vmatprep.subr.bf16.mxu0 %v1560
    %2211 = vmatpush1.bf16.msra.mxu0 %v1559
    %2212 = vmatprep.subr.bf16.mxu0 %v1564
    %2213 = vmatpush1.bf16.msra.mxu0 %v1563
    %2214 = vmatprep.subr.bf16.mxu0 %v1568
    %2215 = vmatpush1.bf16.msra.mxu0 %v1567
    %2216 = vmatprep.subr.bf16.mxu0 %v1572
    %2217 = vmatpush1.bf16.msra.mxu0 %v1571
    %2218 = vmatprep.subr.bf16.mxu0 %v1576
    %2219 = vmatpush1.bf16.msra.mxu0 %v1575
    %2220 = vmatprep.subr.bf16.mxu0 %v1580
    %2221 = vmatpush1.bf16.msra.mxu0 %v1579
    %2222 = vmatprep.subr.bf16.mxu0 %v1584
    %2223 = vmatpush1.bf16.msra.mxu0 %v1583
    %2224 = vmatprep.subr.bf16.mxu0 %v1588
    %2225 = vmatpush1.bf16.msra.mxu0 %v1587
    %2226 = vmatprep.subr.bf16.mxu0 %v1592
    %2227 = vmatpush1.bf16.msra.mxu0 %v1591
    %2228 = vmatprep.subr.bf16.mxu0 %v1596
    %2229 = vmatpush1.bf16.msra.mxu0 %v1595
    %2230 = vmatprep.subr.bf16.mxu0 %v1600
    %2231 = vmatpush1.bf16.msra.mxu0 %v1599
    %2232 = vmatprep.subr.bf16.mxu0 %v1604
    %2233 = vmatpush1.bf16.msra.mxu0 %v1603
    %2234 = vmatprep.subr.bf16.mxu0 %v1608
    %2235 = vmatpush1.bf16.msra.mxu0 %v1607
    %2236 = vmatprep.subr.bf16.mxu0 %v1612
    %2237 = vmatpush1.bf16.msra.mxu0 %v1611
    %2238 = vmatprep.subr.bf16.mxu0 %v1616
    %2239 = vmatpush1.bf16.msra.mxu0 %v1615
    %2240 = vmatprep.subr.bf16.mxu0 %v1620
    %2241 = vmatpush1.bf16.msra.mxu0 %v1619
    %2242 = vmatprep.mubr.bf16.mxu0 %v699
    %2243 = vmatmul.mubr.bf16.gmra.mrb[0].mxu0 %v698
    %v2244 = vpop.f32.mrb[0].mxu0
    %v2245 = vadd.f32 %v2204, %v2244
    %v2246 = vpop.f32.mrb[0].mxu0
    %v2247 = vadd.f32 %v2206, %v2246
    %v2248 = vpop.f32.mrb[0].mxu0
    %v2249 = vpop.f32.mrb[0].mxu0
    %2250 = vdwg.mxu0
    %2251 = vmatprep.subr.bf16.mxu0 %v1624
    %2252 = vmatpush1.bf16.msra.mxu0 %v1623
    %2253 = vmatprep.subr.bf16.mxu0 %v1628
    %2254 = vmatpush1.bf16.msra.mxu0 %v1627
    %2255 = vmatprep.subr.bf16.mxu0 %v1632
    %2256 = vmatpush1.bf16.msra.mxu0 %v1631
    %2257 = vmatprep.subr.bf16.mxu0 %v1636
    %2258 = vmatpush1.bf16.msra.mxu0 %v1635
    %2259 = vmatprep.subr.bf16.mxu0 %v1640
    %2260 = vmatpush1.bf16.msra.mxu0 %v1639
    %2261 = vmatprep.subr.bf16.mxu0 %v1644
    %2262 = vmatpush1.bf16.msra.mxu0 %v1643
    %2263 = vmatprep.subr.bf16.mxu0 %v1648
    %2264 = vmatpush1.bf16.msra.mxu0 %v1647
    %2265 = vmatprep.subr.bf16.mxu0 %v1652
    %2266 = vmatpush1.bf16.msra.mxu0 %v1651
    %2267 = vmatprep.subr.bf16.mxu0 %v1656
    %2268 = vmatpush1.bf16.msra.mxu0 %v1655
    %2269 = vmatprep.subr.bf16.mxu0 %v1660
    %2270 = vmatpush1.bf16.msra.mxu0 %v1659
    %2271 = vmatprep.subr.bf16.mxu0 %v1664
    %2272 = vmatpush1.bf16.msra.mxu0 %v1663
    %2273 = vmatprep.subr.bf16.mxu0 %v1668
    %2274 = vmatpush1.bf16.msra.mxu0 %v1667
    %2275 = vmatprep.subr.bf16.mxu0 %v1672
    %2276 = vmatpush1.bf16.msra.mxu0 %v1671
    %2277 = vmatprep.subr.bf16.mxu0 %v1676
    %2278 = vmatpush1.bf16.msra.mxu0 %v1675
    %2279 = vmatprep.subr.bf16.mxu0 %v1680
    %2280 = vmatpush1.bf16.msra.mxu0 %v1679
    %2281 = vmatprep.subr.bf16.mxu0 %v1684
    %2282 = vmatpush1.bf16.msra.mxu0 %v1683
    %2283 = vmatprep.mubr.bf16.mxu0 %v701
    %2284 = vmatmul.mubr.bf16.gmra.mrb[0].mxu0 %v700
    %v2285 = vpop.f32.mrb[0].mxu0
    %v2286 = vadd.f32 %v2245, %v2285
    %v2287 = vpop.f32.mrb[0].mxu0
    %v2288 = vadd.f32 %v2247, %v2287
    %v2289 = vpop.f32.mrb[0].mxu0
    %v2290 = vpop.f32.mrb[0].mxu0
    %2291 = vdwg.mxu0
    %2292 = vmatprep.subr.bf16.mxu0 %v1688
    %2293 = vmatpush1.bf16.msra.mxu0 %v1687
    %2294 = vmatprep.subr.bf16.mxu0 %v1692
    %2295 = vmatpush1.bf16.msra.mxu0 %v1691
    %2296 = vmatprep.subr.bf16.mxu0 %v1696
    %2297 = vmatpush1.bf16.msra.mxu0 %v1695
    %2298 = vmatprep.subr.bf16.mxu0 %v1700
    %2299 = vmatpush1.bf16.msra.mxu0 %v1699
    %2300 = vmatprep.subr.bf16.mxu0 %v1704
    %2301 = vmatpush1.bf16.msra.mxu0 %v1703
    %2302 = vmatprep.subr.bf16.mxu0 %v1708
    %2303 = vmatpush1.bf16.msra.mxu0 %v1707
    %2304 = vmatprep.subr.bf16.mxu0 %v1712
    %2305 = vmatpush1.bf16.msra.mxu0 %v1711
    %2306 = vmatprep.subr.bf16.mxu0 %v1716
    %2307 = vmatpush1.bf16.msra.mxu0 %v1715
    %2308 = vmatprep.subr.bf16.mxu0 %v1720
    %2309 = vmatpush1.bf16.msra.mxu0 %v1719
    %2310 = vmatprep.subr.bf16.mxu0 %v1724
    %2311 = vmatpush1.bf16.msra.mxu0 %v1723
    %2312 = vmatprep.subr.bf16.mxu0 %v1728
    %2313 = vmatpush1.bf16.msra.mxu0 %v1727
    %2314 = vmatprep.subr.bf16.mxu0 %v1732
    %2315 = vmatpush1.bf16.msra.mxu0 %v1731
    %2316 = vmatprep.subr.bf16.mxu0 %v1736
    %2317 = vmatpush1.bf16.msra.mxu0 %v1735
    %2318 = vmatprep.subr.bf16.mxu0 %v1740
    %2319 = vmatpush1.bf16.msra.mxu0 %v1739
    %2320 = vmatprep.subr.bf16.mxu0 %v1744
    %2321 = vmatpush1.bf16.msra.mxu0 %v1743
    %2322 = vmatprep.subr.bf16.mxu0 %v1748
    %2323 = vmatpush1.bf16.msra.mxu0 %v1747
    %2324 = vmatprep.mubr.bf16.mxu0 %v703
    %2325 = vmatmul.mubr.bf16.gmra.mrb[0].mxu0 %v702
    %v2326 = vpop.f32.mrb[0].mxu0
    %v2327 = vadd.f32 %v2286, %v2326
    %v2328 = vpop.f32.mrb[0].mxu0
    %v2329 = vadd.f32 %v2288, %v2328
    %v2330 = vpop.f32.mrb[0].mxu0
    %v2331 = vpop.f32.mrb[0].mxu0
    %2332 = vdwg.mxu0
    %vm2333 = vcmp.ge.f32.partialorder %v2163, 0.0
    %vm2334 = vcmp.ge.f32.partialorder %v2165, 0.0
    %vm2335 = vcmp.ge.f32.partialorder %v2327, 0.0
    %vm2336 = vcmp.ge.f32.partialorder %v2329, 0.0
    %v2337 = vmul.f32 %v2163, 0.2
    %v2338 = vmul.f32 %v2165, 0.2
    %v2339 = vmul.f32 %v2327, 0.2
    %v2340 = vmul.f32 %v2329, 0.2
    %v2341 = vsel %vm2333, %v2163, %v2337
    %v2342 = vsel %vm2334, %v2165, %v2338
    %v2343 = vsel %vm2335, %v2327, %v2339
    %v2344 = vsel %vm2336, %v2329, %v2340
    %v2345 = vsel %vm137, %v2341, 0.0
    %v2346 = vrot.slane %v2345, 4
    %v2347 = vadd.f32 %v2345, %v2346
    %v2348 = vrot.slane %v2347, 2
    %v2349 = vadd.f32 %v2347, %v2348
    %v2350 = vrot.slane %v2349, 1
    %v2351 = vadd.f32 %v2349, %v2350
    %v2352 = vsel %vm137, %v2342, 0.0
    %v2353 = vrot.slane %v2352, 4
    %v2354 = vadd.f32 %v2352, %v2353
    %v2355 = vrot.slane %v2354, 2
    %v2356 = vadd.f32 %v2354, %v2355
    %v2357 = vrot.slane %v2356, 1
    %v2358 = vadd.f32 %v2356, %v2357
    %v2359 = vsel %vm137, %v2343, 0.0
    %v2360 = vrot.slane %v2359, 4
    %v2361 = vadd.f32 %v2359, %v2360
    %v2362 = vrot.slane %v2361, 2
    %v2363 = vadd.f32 %v2361, %v2362
    %v2364 = vrot.slane %v2363, 1
    %v2365 = vadd.f32 %v2363, %v2364
    %v2366 = vsel %vm137, %v2344, 0.0
    %v2367 = vrot.slane %v2366, 4
    %v2368 = vadd.f32 %v2366, %v2367
    %v2369 = vrot.slane %v2368, 2
    %v2370 = vadd.f32 %v2368, %v2369
    %v2371 = vrot.slane %v2370, 1
    %v2372 = vadd.f32 %v2370, %v2371
    %v2373 = vmul.f32 %v2351, %v194
    %v2374 = vmul.f32 %v2358, %v194
    %v2375 = vmul.f32 %v2365, %v194
    %v2376 = vmul.f32 %v2372, %v194
    %v2377 = vsub.f32 %v2341, %v2373
    %v2378 = vsub.f32 %v2342, %v2374
    %v2379 = vsub.f32 %v2343, %v2375
    %v2380 = vsub.f32 %v2344, %v2376
    %v2381 = vmul.f32 %v2377, %v2377
    %v2382 = vmul.f32 %v2378, %v2378
    %v2383 = vmul.f32 %v2379, %v2379
    %v2384 = vmul.f32 %v2380, %v2380
    %v2385 = vsel %vm137, %v2381, 0.0
    %v2386 = vrot.slane %v2385, 4
    %v2387 = vadd.f32 %v2385, %v2386
    %v2388 = vrot.slane %v2387, 2
    %v2389 = vadd.f32 %v2387, %v2388
    %v2390 = vrot.slane %v2389, 1
    %v2391 = vadd.f32 %v2389, %v2390
    %v2392 = vsel %vm137, %v2382, 0.0
    %v2393 = vrot.slane %v2392, 4
    %v2394 = vadd.f32 %v2392, %v2393
    %v2395 = vrot.slane %v2394, 2
    %v2396 = vadd.f32 %v2394, %v2395
    %v2397 = vrot.slane %v2396, 1
    %v2398 = vadd.f32 %v2396, %v2397
    %v2399 = vsel %vm137, %v2383, 0.0
    %v2400 = vrot.slane %v2399, 4
    %v2401 = vadd.f32 %v2399, %v2400
    %v2402 = vrot.slane %v2401, 2
    %v2403 = vadd.f32 %v2401, %v2402
    %v2404 = vrot.slane %v2403, 1
    %v2405 = vadd.f32 %v2403, %v2404
    %v2406 = vsel %vm137, %v2384, 0.0
    %v2407 = vrot.slane %v2406, 4
    %v2408 = vadd.f32 %v2406, %v2407
    %v2409 = vrot.slane %v2408, 2
    %v2410 = vadd.f32 %v2408, %v2409
    %v2411 = vrot.slane %v2410, 1
    %v2412 = vadd.f32 %v2410, %v2411
    %v2413 = vmul.f32 %v2391, %v194
    %v2414 = vmul.f32 %v2398, %v194
    %v2415 = vmul.f32 %v2405, %v194
    %v2416 = vmul.f32 %v2412, %v194
    %v2418 = vlaneseq
    %v2419 = vshrl.u32 %v2418, 7
    %v2420 = vsub.s32 0, %v2419
    %v2421 = vrot.slane %v694, %v2420
    %v2422 = vlaneseq
    %v2423 = vshrl.u32 %v2422, 7
    %v2424 = vsub.s32 1, %v2423
    %v2425 = vrot.slane %v694, %v2424
    %v2426 = vlaneseq
    %v2427 = vshrl.u32 %v2426, 7
    %v2428 = vsub.s32 2, %v2427
    %v2429 = vrot.slane %v694, %v2428
    %v2430 = vlaneseq
    %v2431 = vshrl.u32 %v2430, 7
    %v2432 = vsub.s32 3, %v2431
    %v2433 = vrot.slane %v694, %v2432
    %v2438 = vmul.f32 %v2421, %v2377
    %v2439 = vmul.f32 %v2425, %v2378
    %v2440 = vmul.f32 %v2429, %v2379
    %v2441 = vmul.f32 %v2433, %v2380
    %v2442 = vadd.f32 %v2413, 1e-05
    %v2443 = vadd.f32 %v2414, 1e-05
    %v2444 = vadd.f32 %v2415, 1e-05
    %v2445 = vadd.f32 %v2416, 1e-05
    %v2446 = vrsqrt.pop %v2442
    %v2447 = vrsqrt.pop %v2443
    %v2448 = vrsqrt.pop %v2444
    %v2449 = vrsqrt.pop %v2445
    %v2450 = vmul.f32 %v2438, %v2446
    %v2451 = vmul.f32 %v2439, %v2447
    %v2452 = vmul.f32 %v2440, %v2448
    %v2453 = vmul.f32 %v2441, %v2449
    %v2455 = vlaneseq
    %v2456 = vshrl.u32 %v2455, 7
    %v2457 = vsub.s32 0, %v2456
    %v2458 = vrot.slane %v695, %v2457
    %v2459 = vlaneseq
    %v2460 = vshrl.u32 %v2459, 7
    %v2461 = vsub.s32 1, %v2460
    %v2462 = vrot.slane %v695, %v2461
    %v2463 = vlaneseq
    %v2464 = vshrl.u32 %v2463, 7
    %v2465 = vsub.s32 2, %v2464
    %v2466 = vrot.slane %v695, %v2465
    %v2467 = vlaneseq
    %v2468 = vshrl.u32 %v2467, 7
    %v2469 = vsub.s32 3, %v2468
    %v2470 = vrot.slane %v695, %v2469
    %v2475 = vadd.f32 %v2450, %v2458
    %v2476 = vadd.f32 %v2451, %v2462
    %v2477 = vadd.f32 %v2452, %v2466
    %v2478 = vadd.f32 %v2453, %v2470
    %v2479 = vld [vmem:[%s8] sm:$0xff]
    %v2480 = vld [vmem:[%s8 + $0x8] sm:$0xff]
    %v2481 = vld [vmem:[%s8 + $0x10] sm:$0xff]
    %v2482 = vld [vmem:[%s8 + $0x18] sm:$0xff]
    %v2483 = vld [vmem:[%s8 + $0x20] sm:$0xff]
    %v2484 = vld [vmem:[%s8 + $0x28] sm:$0xff]
    %v2485 = vld [vmem:[%s8 + $0x30] sm:$0xff]
    %v2486 = vld [vmem:[%s8 + $0x38] sm:$0xff]
    %v2487 = vld [vmem:[%s8 + $0x40] sm:$0xff]
    %v2488 = vld [vmem:[%s8 + $0x48] sm:$0xff]
    %v2489 = vld [vmem:[%s8 + $0x50] sm:$0xff]
    %v2490 = vld [vmem:[%s8 + $0x58] sm:$0xff]
    %v2491 = vld [vmem:[%s8 + $0x60] sm:$0xff]
    %v2492 = vld [vmem:[%s8 + $0x68] sm:$0xff]
    %v2493 = vld [vmem:[%s8 + $0x70] sm:$0xff]
    %v2494 = vld [vmem:[%s8 + $0x78] sm:$0xff]
    %v2495 = vld [vmem:[%s8 + $0x80] sm:$0xff]
    %v2496 = vld [vmem:[%s8 + $0x88] sm:$0xff]
    %v2497 = vld [vmem:[%s8 + $0x90] sm:$0xff]
    %v2498 = vld [vmem:[%s8 + $0x98] sm:$0xff]
    %v2499 = vld [vmem:[%s8 + $0xa0] sm:$0xff]
    %v2500 = vld [vmem:[%s8 + $0xa8] sm:$0xff]
    %v2501 = vld [vmem:[%s8 + $0xb0] sm:$0xff]
    %v2502 = vld [vmem:[%s8 + $0xb8] sm:$0xff]
    %v2503 = vld [vmem:[%s8 + $0xc0] sm:$0xff]
    %v2504 = vld [vmem:[%s8 + $0xc8] sm:$0xff]
    %v2505 = vld [vmem:[%s8 + $0xd0] sm:$0xff]
    %v2506 = vld [vmem:[%s8 + $0xd8] sm:$0xff]
    %v2507 = vld [vmem:[%s8 + $0xe0] sm:$0xff]
    %v2508 = vld [vmem:[%s8 + $0xe8] sm:$0xff]
    %v2509 = vld [vmem:[%s8 + $0xf0] sm:$0xff]
    %v2510 = vld [vmem:[%s8 + $0xf8] sm:$0xff]
    %v2511 = vld [vmem:[%s8 + $0x100] sm:$0xff]
    %v2512 = vld [vmem:[%s8 + $0x108] sm:$0xff]
    %v2513 = vld [vmem:[%s8 + $0x110] sm:$0xff]
    %v2514 = vld [vmem:[%s8 + $0x118] sm:$0xff]
    %v2515 = vld [vmem:[%s8 + $0x120] sm:$0xff]
    %v2516 = vld [vmem:[%s8 + $0x128] sm:$0xff]
    %v2517 = vld [vmem:[%s8 + $0x130] sm:$0xff]
    %v2518 = vld [vmem:[%s8 + $0x138] sm:$0xff]
    %v2519 = vld [vmem:[%s8 + $0x140] sm:$0xff]
    %v2520 = vld [vmem:[%s8 + $0x148] sm:$0xff]
    %v2521 = vld [vmem:[%s8 + $0x150] sm:$0xff]
    %v2522 = vld [vmem:[%s8 + $0x158] sm:$0xff]
    %v2523 = vld [vmem:[%s8 + $0x160] sm:$0xff]
    %v2524 = vld [vmem:[%s8 + $0x168] sm:$0xff]
    %v2525 = vld [vmem:[%s8 + $0x170] sm:$0xff]
    %v2526 = vld [vmem:[%s8 + $0x178] sm:$0xff]
    %v2527 = vld [vmem:[%s8 + $0x180] sm:$0xff]
    %v2528 = vld [vmem:[%s8 + $0x188] sm:$0xff]
    %v2529 = vld [vmem:[%s8 + $0x190] sm:$0xff]
    %v2530 = vld [vmem:[%s8 + $0x198] sm:$0xff]
    %v2531 = vld [vmem:[%s8 + $0x1a0] sm:$0xff]
    %v2532 = vld [vmem:[%s8 + $0x1a8] sm:$0xff]
    %v2533 = vld [vmem:[%s8 + $0x1b0] sm:$0xff]
    %v2534 = vld [vmem:[%s8 + $0x1b8] sm:$0xff]
    %v2535 = vld [vmem:[%s8 + $0x1c0] sm:$0xff]
    %v2536 = vld [vmem:[%s8 + $0x1c8] sm:$0xff]
    %v2537 = vld [vmem:[%s8 + $0x1d0] sm:$0xff]
    %v2538 = vld [vmem:[%s8 + $0x1d8] sm:$0xff]
    %v2539 = vld [vmem:[%s8 + $0x1e0] sm:$0xff]
    %v2540 = vld [vmem:[%s8 + $0x1e8] sm:$0xff]
    %v2541 = vld [vmem:[%s8 + $0x1f0] sm:$0xff]
    %v2542 = vld [vmem:[%s8 + $0x1f8] sm:$0xff]
    %v2543 = vld [vmem:[%s9] sm:$0x3]
    %v2544 = vld [vmem:[%s10] sm:$0x3]
    %v2545 = vld [vmem:[%s11] sm:$0x3]
    %v2546 = vpack.c.bf16 %v2475, %v2475
    %v2547 = vpack.c.bf16 %v2476, %v2476
    %v2548 = vpack.c.bf16 %v2477, %v2477
    %v2549 = vpack.c.bf16 %v2478, %v2478
    %v2551 = vlaneseq
    %v2552 = vshrl.u32 %v2551, 7
    %v2553 = vsub.s32 0, %v2552
    %v2554 = vrot.slane %v2543, %v2553
    %v2555 = vlaneseq
    %v2556 = vshrl.u32 %v2555, 7
    %v2557 = vsub.s32 1, %v2556
    %v2558 = vrot.slane %v2543, %v2557
    %v2625 = vunpack.c.l.b16 %v2479
    %v2626 = vunpack.c.h.b16 %v2479
    %v2627 = vunpack.c.l.b16 %v2480
    %v2628 = vunpack.c.h.b16 %v2480
    %v2629 = vunpack.c.l.b16 %v2481
    %v2630 = vunpack.c.h.b16 %v2481
    %v2631 = vunpack.c.l.b16 %v2482
    %v2632 = vunpack.c.h.b16 %v2482
    %v2633 = vunpack.c.l.b16 %v2483
    %v2634 = vunpack.c.h.b16 %v2483
    %v2635 = vunpack.c.l.b16 %v2484
    %v2636 = vunpack.c.h.b16 %v2484
    %v2637 = vunpack.c.l.b16 %v2485
    %v2638 = vunpack.c.h.b16 %v2485
    %v2639 = vunpack.c.l.b16 %v2486
    %v2640 = vunpack.c.h.b16 %v2486
    %v2641 = vunpack.c.l.b16 %v2487
    %v2642 = vunpack.c.h.b16 %v2487
    %v2643 = vunpack.c.l.b16 %v2488
    %v2644 = vunpack.c.h.b16 %v2488
    %v2645 = vunpack.c.l.b16 %v2489
    %v2646 = vunpack.c.h.b16 %v2489
    %v2647 = vunpack.c.l.b16 %v2490
    %v2648 = vunpack.c.h.b16 %v2490
    %v2649 = vunpack.c.l.b16 %v2491
    %v2650 = vunpack.c.h.b16 %v2491
    %v2651 = vunpack.c.l.b16 %v2492
    %v2652 = vunpack.c.h.b16 %v2492
    %v2653 = vunpack.c.l.b16 %v2493
    %v2654 = vunpack.c.h.b16 %v2493
    %v2655 = vunpack.c.l.b16 %v2494
    %v2656 = vunpack.c.h.b16 %v2494
    %v2657 = vunpack.c.l.b16 %v2495
    %v2658 = vunpack.c.h.b16 %v2495
    %v2659 = vunpack.c.l.b16 %v2496
    %v2660 = vunpack.c.h.b16 %v2496
    %v2661 = vunpack.c.l.b16 %v2497
    %v2662 = vunpack.c.h.b16 %v2497
    %v2663 = vunpack.c.l.b16 %v2498
    %v2664 = vunpack.c.h.b16 %v2498
    %v2665 = vunpack.c.l.b16 %v2499
    %v2666 = vunpack.c.h.b16 %v2499
    %v2667 = vunpack.c.l.b16 %v2500
    %v2668 = vunpack.c.h.b16 %v2500
    %v2669 = vunpack.c.l.b16 %v2501
    %v2670 = vunpack.c.h.b16 %v2501
    %v2671 = vunpack.c.l.b16 %v2502
    %v2672 = vunpack.c.h.b16 %v2502
    %v2673 = vunpack.c.l.b16 %v2503
    %v2674 = vunpack.c.h.b16 %v2503
    %v2675 = vunpack.c.l.b16 %v2504
    %v2676 = vunpack.c.h.b16 %v2504
    %v2677 = vunpack.c.l.b16 %v2505
    %v2678 = vunpack.c.h.b16 %v2505
    %v2679 = vunpack.c.l.b16 %v2506
    %v2680 = vunpack.c.h.b16 %v2506
    %v2681 = vunpack.c.l.b16 %v2507
    %v2682 = vunpack.c.h.b16 %v2507
    %v2683 = vunpack.c.l.b16 %v2508
    %v2684 = vunpack.c.h.b16 %v2508
    %v2685 = vunpack.c.l.b16 %v2509
    %v2686 = vunpack.c.h.b16 %v2509
    %v2687 = vunpack.c.l.b16 %v2510
    %v2688 = vunpack.c.h.b16 %v2510
    %v2689 = vunpack.c.l.b16 %v2511
    %v2690 = vunpack.c.h.b16 %v2511
    %v2691 = vunpack.c.l.b16 %v2512
    %v2692 = vunpack.c.h.b16 %v2512
    %v2693 = vunpack.c.l.b16 %v2513
    %v2694 = vunpack.c.h.b16 %v2513
    %v2695 = vunpack.c.l.b16 %v2514
    %v2696 = vunpack.c.h.b16 %v2514
    %v2697 = vunpack.c.l.b16 %v2515
    %v2698 = vunpack.c.h.b16 %v2515
    %v2699 = vunpack.c.l.b16 %v2516
    %v2700 = vunpack.c.h.b16 %v2516
    %v2701 = vunpack.c.l.b16 %v2517
    %v2702 = vunpack.c.h.b16 %v2517
    %v2703 = vunpack.c.l.b16 %v2518
    %v2704 = vunpack.c.h.b16 %v2518
    %v2705 = vunpack.c.l.b16 %v2519
    %v2706 = vunpack.c.h.b16 %v2519
    %v2707 = vunpack.c.l.b16 %v2520
    %v2708 = vunpack.c.h.b16 %v2520
    %v2709 = vunpack.c.l.b16 %v2521
    %v2710 = vunpack.c.h.b16 %v2521
    %v2711 = vunpack.c.l.b16 %v2522
    %v2712 = vunpack.c.h.b16 %v2522
    %v2713 = vunpack.c.l.b16 %v2523
    %v2714 = vunpack.c.h.b16 %v2523
    %v2715 = vunpack.c.l.b16 %v2524
    %v2716 = vunpack.c.h.b16 %v2524
    %v2717 = vunpack.c.l.b16 %v2525
    %v2718 = vunpack.c.h.b16 %v2525
    %v2719 = vunpack.c.l.b16 %v2526
    %v2720 = vunpack.c.h.b16 %v2526
    %v2721 = vunpack.c.l.b16 %v2527
    %v2722 = vunpack.c.h.b16 %v2527
    %v2723 = vunpack.c.l.b16 %v2528
    %v2724 = vunpack.c.h.b16 %v2528
    %v2725 = vunpack.c.l.b16 %v2529
    %v2726 = vunpack.c.h.b16 %v2529
    %v2727 = vunpack.c.l.b16 %v2530
    %v2728 = vunpack.c.h.b16 %v2530
    %v2729 = vunpack.c.l.b16 %v2531
    %v2730 = vunpack.c.h.b16 %v2531
    %v2731 = vunpack.c.l.b16 %v2532
    %v2732 = vunpack.c.h.b16 %v2532
    %v2733 = vunpack.c.l.b16 %v2533
    %v2734 = vunpack.c.h.b16 %v2533
    %v2735 = vunpack.c.l.b16 %v2534
    %v2736 = vunpack.c.h.b16 %v2534
    %v2737 = vunpack.c.l.b16 %v2535
    %v2738 = vunpack.c.h.b16 %v2535
    %v2739 = vunpack.c.l.b16 %v2536
    %v2740 = vunpack.c.h.b16 %v2536
    %v2741 = vunpack.c.l.b16 %v2537
    %v2742 = vunpack.c.h.b16 %v2537
    %v2743 = vunpack.c.l.b16 %v2538
    %v2744 = vunpack.c.h.b16 %v2538
    %v2745 = vunpack.c.l.b16 %v2539
    %v2746 = vunpack.c.h.b16 %v2539
    %v2747 = vunpack.c.l.b16 %v2540
    %v2748 = vunpack.c.h.b16 %v2540
    %v2749 = vunpack.c.l.b16 %v2541
    %v2750 = vunpack.c.h.b16 %v2541
    %v2751 = vunpack.c.l.b16 %v2542
    %v2752 = vunpack.c.h.b16 %v2542
    %v2753 = vpack.c.b16 %v2627, %v2625
    %v2754 = vpack.c.b16 %v2628, %v2626
    %v2755 = vpack.c.b16 %v2631, %v2629
    %v2756 = vpack.c.b16 %v2632, %v2630
    %v2757 = vpack.c.b16 %v2635, %v2633
    %v2758 = vpack.c.b16 %v2636, %v2634
    %v2759 = vpack.c.b16 %v2639, %v2637
    %v2760 = vpack.c.b16 %v2640, %v2638
    %v2761 = vpack.c.b16 %v2643, %v2641
    %v2762 = vpack.c.b16 %v2644, %v2642
    %v2763 = vpack.c.b16 %v2647, %v2645
    %v2764 = vpack.c.b16 %v2648, %v2646
    %v2765 = vpack.c.b16 %v2651, %v2649
    %v2766 = vpack.c.b16 %v2652, %v2650
    %v2767 = vpack.c.b16 %v2655, %v2653
    %v2768 = vpack.c.b16 %v2656, %v2654
    %v2769 = vpack.c.b16 %v2659, %v2657
    %v2770 = vpack.c.b16 %v2660, %v2658
    %v2771 = vpack.c.b16 %v2663, %v2661
    %v2772 = vpack.c.b16 %v2664, %v2662
    %v2773 = vpack.c.b16 %v2667, %v2665
    %v2774 = vpack.c.b16 %v2668, %v2666
    %v2775 = vpack.c.b16 %v2671, %v2669
    %v2776 = vpack.c.b16 %v2672, %v2670
    %v2777 = vpack.c.b16 %v2675, %v2673
    %v2778 = vpack.c.b16 %v2676, %v2674
    %v2779 = vpack.c.b16 %v2679, %v2677
    %v2780 = vpack.c.b16 %v2680, %v2678
    %v2781 = vpack.c.b16 %v2683, %v2681
    %v2782 = vpack.c.b16 %v2684, %v2682
    %v2783 = vpack.c.b16 %v2687, %v2685
    %v2784 = vpack.c.b16 %v2688, %v2686
    %v2785 = vpack.c.b16 %v2691, %v2689
    %v2786 = vpack.c.b16 %v2692, %v2690
    %v2787 = vpack.c.b16 %v2695, %v2693
    %v2788 = vpack.c.b16 %v2696, %v2694
    %v2789 = vpack.c.b16 %v2699, %v2697
    %v2790 = vpack.c.b16 %v2700, %v2698
    %v2791 = vpack.c.b16 %v2703, %v2701
    %v2792 = vpack.c.b16 %v2704, %v2702
    %v2793 = vpack.c.b16 %v2707, %v2705
    %v2794 = vpack.c.b16 %v2708, %v2706
    %v2795 = vpack.c.b16 %v2711, %v2709
    %v2796 = vpack.c.b16 %v2712, %v2710
    %v2797 = vpack.c.b16 %v2715, %v2713
    %v2798 = vpack.c.b16 %v2716, %v2714
    %v2799 = vpack.c.b16 %v2719, %v2717
    %v2800 = vpack.c.b16 %v2720, %v2718
    %v2801 = vpack.c.b16 %v2723, %v2721
    %v2802 = vpack.c.b16 %v2724, %v2722
    %v2803 = vpack.c.b16 %v2727, %v2725
    %v2804 = vpack.c.b16 %v2728, %v2726
    %v2805 = vpack.c.b16 %v2731, %v2729
    %v2806 = vpack.c.b16 %v2732, %v2730
    %v2807 = vpack.c.b16 %v2735, %v2733
    %v2808 = vpack.c.b16 %v2736, %v2734
    %v2809 = vpack.c.b16 %v2739, %v2737
    %v2810 = vpack.c.b16 %v2740, %v2738
    %v2811 = vpack.c.b16 %v2743, %v2741
    %v2812 = vpack.c.b16 %v2744, %v2742
    %v2813 = vpack.c.b16 %v2747, %v2745
    %v2814 = vpack.c.b16 %v2748, %v2746
    %v2815 = vpack.c.b16 %v2751, %v2749
    %v2816 = vpack.c.b16 %v2752, %v2750
    %2881 = vmatprep.subr.bf16.mxu0 %v2754
    %2882 = vmatpush1.bf16.msra.mxu0 %v2753
    %2883 = vmatprep.subr.bf16.mxu0 %v2756
    %2884 = vmatpush1.bf16.msra.mxu0 %v2755
    %2885 = vmatprep.subr.bf16.mxu0 %v2758
    %2886 = vmatpush1.bf16.msra.mxu0 %v2757
    %2887 = vmatprep.subr.bf16.mxu0 %v2760
    %2888 = vmatpush1.bf16.msra.mxu0 %v2759
    %2889 = vmatprep.subr.bf16.mxu0 %v2762
    %2890 = vmatpush1.bf16.msra.mxu0 %v2761
    %2891 = vmatprep.subr.bf16.mxu0 %v2764
    %2892 = vmatpush1.bf16.msra.mxu0 %v2763
    %2893 = vmatprep.subr.bf16.mxu0 %v2766
    %2894 = vmatpush1.bf16.msra.mxu0 %v2765
    %2895 = vmatprep.subr.bf16.mxu0 %v2768
    %2896 = vmatpush1.bf16.msra.mxu0 %v2767
    %2897 = vmatprep.subr.bf16.mxu0 %v2770
    %2898 = vmatpush1.bf16.msra.mxu0 %v2769
    %2899 = vmatprep.subr.bf16.mxu0 %v2772
    %2900 = vmatpush1.bf16.msra.mxu0 %v2771
    %2901 = vmatprep.subr.bf16.mxu0 %v2774
    %2902 = vmatpush1.bf16.msra.mxu0 %v2773
    %2903 = vmatprep.subr.bf16.mxu0 %v2776
    %2904 = vmatpush1.bf16.msra.mxu0 %v2775
    %2905 = vmatprep.subr.bf16.mxu0 %v2778
    %2906 = vmatpush1.bf16.msra.mxu0 %v2777
    %2907 = vmatprep.subr.bf16.mxu0 %v2780
    %2908 = vmatpush1.bf16.msra.mxu0 %v2779
    %2909 = vmatprep.subr.bf16.mxu0 %v2782
    %2910 = vmatpush1.bf16.msra.mxu0 %v2781
    %2911 = vmatprep.subr.bf16.mxu0 %v2784
    %2912 = vmatpush1.bf16.msra.mxu0 %v2783
    %2913 = vmatprep.mubr.bf16.mxu0 %v2547
    %2914 = vmatmul.mubr.bf16.gmra.mrb[0].mxu0 %v2546
    %v2915 = vpop.f32.mrb[0].mxu0
    %v2916 = vadd.f32 %v2554, %v2915
    %v2917 = vpop.f32.mrb[0].mxu0
    %v2918 = vadd.f32 %v2558, %v2917
    %v2919 = vpop.f32.mrb[0].mxu0
    %v2920 = vpop.f32.mrb[0].mxu0
    %2921 = vdwg.mxu0
    %2922 = vmatprep.subr.bf16.mxu0 %v2786
    %2923 = vmatpush1.bf16.msra.mxu0 %v2785
    %2924 = vmatprep.subr.bf16.mxu0 %v2788
    %2925 = vmatpush1.bf16.msra.mxu0 %v2787
    %2926 = vmatprep.subr.bf16.mxu0 %v2790
    %2927 = vmatpush1.bf16.msra.mxu0 %v2789
    %2928 = vmatprep.subr.bf16.mxu0 %v2792
    %2929 = vmatpush1.bf16.msra.mxu0 %v2791
    %2930 = vmatprep.subr.bf16.mxu0 %v2794
    %2931 = vmatpush1.bf16.msra.mxu0 %v2793
    %2932 = vmatprep.subr.bf16.mxu0 %v2796
    %2933 = vmatpush1.bf16.msra.mxu0 %v2795
    %2934 = vmatprep.subr.bf16.mxu0 %v2798
    %2935 = vmatpush1.bf16.msra.mxu0 %v2797
    %2936 = vmatprep.subr.bf16.mxu0 %v2800
    %2937 = vmatpush1.bf16.msra.mxu0 %v2799
    %2938 = vmatprep.subr.bf16.mxu0 %v2802
    %2939 = vmatpush1.bf16.msra.mxu0 %v2801
    %2940 = vmatprep.subr.bf16.mxu0 %v2804
    %2941 = vmatpush1.bf16.msra.mxu0 %v2803
    %2942 = vmatprep.subr.bf16.mxu0 %v2806
    %2943 = vmatpush1.bf16.msra.mxu0 %v2805
    %2944 = vmatprep.subr.bf16.mxu0 %v2808
    %2945 = vmatpush1.bf16.msra.mxu0 %v2807
    %2946 = vmatprep.subr.bf16.mxu0 %v2810
    %2947 = vmatpush1.bf16.msra.mxu0 %v2809
    %2948 = vmatprep.subr.bf16.mxu0 %v2812
    %2949 = vmatpush1.bf16.msra.mxu0 %v2811
    %2950 = vmatprep.subr.bf16.mxu0 %v2814
    %2951 = vmatpush1.bf16.msra.mxu0 %v2813
    %2952 = vmatprep.subr.bf16.mxu0 %v2816
    %2953 = vmatpush1.bf16.msra.mxu0 %v2815
    %2954 = vmatprep.mubr.bf16.mxu0 %v2549
    %2955 = vmatmul.mubr.bf16.gmra.mrb[0].mxu0 %v2548
    %v2956 = vpop.f32.mrb[0].mxu0
    %v2957 = vadd.f32 %v2916, %v2956
    %v2958 = vpop.f32.mrb[0].mxu0
    %v2959 = vadd.f32 %v2918, %v2958
    %v2960 = vpop.f32.mrb[0].mxu0
    %v2961 = vpop.f32.mrb[0].mxu0
    %2962 = vdwg.mxu0
    %vm2963 = vcmp.ge.f32.partialorder %v2957, 0.0
    %vm2964 = vcmp.ge.f32.partialorder %v2959, 0.0
    %v2965 = vmul.f32 %v2957, 0.2
    %v2966 = vmul.f32 %v2959, 0.2
    %v2967 = vsel %vm2963, %v2957, %v2965
    %v2968 = vsel %vm2964, %v2959, %v2966
    %v2969 = vsel %vm137, %v2967, 0.0
    %v2970 = vrot.slane %v2969, 4
    %v2971 = vadd.f32 %v2969, %v2970
    %v2972 = vrot.slane %v2971, 2
    %v2973 = vadd.f32 %v2971, %v2972
    %v2974 = vrot.slane %v2973, 1
    %v2975 = vadd.f32 %v2973, %v2974
    %v2976 = vsel %vm137, %v2968, 0.0
    %v2977 = vrot.slane %v2976, 4
    %v2978 = vadd.f32 %v2976, %v2977
    %v2979 = vrot.slane %v2978, 2
    %v2980 = vadd.f32 %v2978, %v2979
    %v2981 = vrot.slane %v2980, 1
    %v2982 = vadd.f32 %v2980, %v2981
    %v2983 = vmul.f32 %v2975, %v194
    %v2984 = vmul.f32 %v2982, %v194
    %v2985 = vsub.f32 %v2967, %v2983
    %v2986 = vsub.f32 %v2968, %v2984
    %v2987 = vmul.f32 %v2985, %v2985
    %v2988 = vmul.f32 %v2986, %v2986
    %v2989 = vsel %vm137, %v2987, 0.0
    %v2990 = vrot.slane %v2989, 4
    %v2991 = vadd.f32 %v2989, %v2990
    %v2992 = vrot.slane %v2991, 2
    %v2993 = vadd.f32 %v2991, %v2992
    %v2994 = vrot.slane %v2993, 1
    %v2995 = vadd.f32 %v2993, %v2994
    %v2996 = vsel %vm137, %v2988, 0.0
    %v2997 = vrot.slane %v2996, 4
    %v2998 = vadd.f32 %v2996, %v2997
    %v2999 = vrot.slane %v2998, 2
    %v3000 = vadd.f32 %v2998, %v2999
    %v3001 = vrot.slane %v3000, 1
    %v3002 = vadd.f32 %v3000, %v3001
    %v3003 = vmul.f32 %v2995, %v194
    %v3004 = vmul.f32 %v3002, %v194
    %v3006 = vlaneseq
    %v3007 = vshrl.u32 %v3006, 7
    %v3008 = vsub.s32 0, %v3007
    %v3009 = vrot.slane %v2544, %v3008
    %v3010 = vlaneseq
    %v3011 = vshrl.u32 %v3010, 7
    %v3012 = vsub.s32 1, %v3011
    %v3013 = vrot.slane %v2544, %v3012
    %v3016 = vmul.f32 %v3009, %v2985
    %v3017 = vmul.f32 %v3013, %v2986
    %v3018 = vadd.f32 %v3003, 1e-05
    %v3019 = vadd.f32 %v3004, 1e-05
    %v3020 = vrsqrt.pop %v3018
    %v3021 = vrsqrt.pop %v3019
    %v3022 = vmul.f32 %v3016, %v3020
    %v3023 = vmul.f32 %v3017, %v3021
    %v3025 = vlaneseq
    %v3026 = vshrl.u32 %v3025, 7
    %v3027 = vsub.s32 0, %v3026
    %v3028 = vrot.slane %v2545, %v3027
    %v3029 = vlaneseq
    %v3030 = vshrl.u32 %v3029, 7
    %v3031 = vsub.s32 1, %v3030
    %v3032 = vrot.slane %v2545, %v3031
    %v3035 = vadd.f32 %v3022, %v3028
    %v3036 = vadd.f32 %v3023, %v3032
    %v3037 = vld [vmem:[%s12] sm:$0xf]
    %v3038 = vld [vmem:[%s12 + $0x4] sm:$0xf]
    %v3039 = vld [vmem:[%s12 + $0x8] sm:$0xf]
    %v3040 = vld [vmem:[%s12 + $0xc] sm:$0xf]
    %v3041 = vld [vmem:[%s12 + $0x10] sm:$0xf]
    %v3042 = vld [vmem:[%s12 + $0x14] sm:$0xf]
    %v3043 = vld [vmem:[%s12 + $0x18] sm:$0xf]
    %v3044 = vld [vmem:[%s12 + $0x1c] sm:$0xf]
    %v3045 = vld [vmem:[%s12 + $0x20] sm:$0xf]
    %v3046 = vld [vmem:[%s12 + $0x24] sm:$0xf]
    %v3047 = vld [vmem:[%s12 + $0x28] sm:$0xf]
    %v3048 = vld [vmem:[%s12 + $0x2c] sm:$0xf]
    %v3049 = vld [vmem:[%s12 + $0x30] sm:$0xf]
    %v3050 = vld [vmem:[%s12 + $0x34] sm:$0xf]
    %v3051 = vld [vmem:[%s12 + $0x38] sm:$0xf]
    %v3052 = vld [vmem:[%s12 + $0x3c] sm:$0xf]
    %v3053 = vld [vmem:[%s12 + $0x40] sm:$0xf]
    %v3054 = vld [vmem:[%s12 + $0x44] sm:$0xf]
    %v3055 = vld [vmem:[%s12 + $0x48] sm:$0xf]
    %v3056 = vld [vmem:[%s12 + $0x4c] sm:$0xf]
    %v3057 = vld [vmem:[%s12 + $0x50] sm:$0xf]
    %v3058 = vld [vmem:[%s12 + $0x54] sm:$0xf]
    %v3059 = vld [vmem:[%s12 + $0x58] sm:$0xf]
    %v3060 = vld [vmem:[%s12 + $0x5c] sm:$0xf]
    %v3061 = vld [vmem:[%s12 + $0x60] sm:$0xf]
    %v3062 = vld [vmem:[%s12 + $0x64] sm:$0xf]
    %v3063 = vld [vmem:[%s12 + $0x68] sm:$0xf]
    %v3064 = vld [vmem:[%s12 + $0x6c] sm:$0xf]
    %v3065 = vld [vmem:[%s12 + $0x70] sm:$0xf]
    %v3066 = vld [vmem:[%s12 + $0x74] sm:$0xf]
    %v3067 = vld [vmem:[%s12 + $0x78] sm:$0xf]
    %v3068 = vld [vmem:[%s12 + $0x7c] sm:$0xf]
    %v3069 = vld [vmem:[%s13] sm:$0x1]
    %v3070 = vld [vmem:[%s14] sm:$0x1]
    %v3071 = vld [vmem:[%s15] sm:$0x1]
    %v3072 = vpack.c.bf16 %v3035, %v3035
    %v3073 = vpack.c.bf16 %v3036, %v3036
    %v3075 = vlaneseq
    %v3076 = vshrl.u32 %v3075, 7
    %v3077 = vsub.s32 0, %v3076
    %v3078 = vrot.slane %v3069, %v3077
    %v3112 = vunpack.c.l.b16 %v3037
    %v3113 = vunpack.c.l.b16 %v3038
    %v3114 = vunpack.c.l.b16 %v3039
    %v3115 = vunpack.c.l.b16 %v3040
    %v3116 = vunpack.c.l.b16 %v3041
    %v3117 = vunpack.c.l.b16 %v3042
    %v3118 = vunpack.c.l.b16 %v3043
    %v3119 = vunpack.c.l.b16 %v3044
    %v3120 = vunpack.c.l.b16 %v3045
    %v3121 = vunpack.c.l.b16 %v3046
    %v3122 = vunpack.c.l.b16 %v3047
    %v3123 = vunpack.c.l.b16 %v3048
    %v3124 = vunpack.c.l.b16 %v3049
    %v3125 = vunpack.c.l.b16 %v3050
    %v3126 = vunpack.c.l.b16 %v3051
    %v3127 = vunpack.c.l.b16 %v3052
    %v3128 = vunpack.c.l.b16 %v3053
    %v3129 = vunpack.c.l.b16 %v3054
    %v3130 = vunpack.c.l.b16 %v3055
    %v3131 = vunpack.c.l.b16 %v3056
    %v3132 = vunpack.c.l.b16 %v3057
    %v3133 = vunpack.c.l.b16 %v3058
    %v3134 = vunpack.c.l.b16 %v3059
    %v3135 = vunpack.c.l.b16 %v3060
    %v3136 = vunpack.c.l.b16 %v3061
    %v3137 = vunpack.c.l.b16 %v3062
    %v3138 = vunpack.c.l.b16 %v3063
    %v3139 = vunpack.c.l.b16 %v3064
    %v3140 = vunpack.c.l.b16 %v3065
    %v3141 = vunpack.c.l.b16 %v3066
    %v3142 = vunpack.c.l.b16 %v3067
    %v3143 = vunpack.c.l.b16 %v3068
    %v3144 = vpack.c.b16 %v3113, %v3112
    %v3145 = vpack.c.b16 %v3115, %v3114
    %v3146 = vpack.c.b16 %v3117, %v3116
    %v3147 = vpack.c.b16 %v3119, %v3118
    %v3148 = vpack.c.b16 %v3121, %v3120
    %v3149 = vpack.c.b16 %v3123, %v3122
    %v3150 = vpack.c.b16 %v3125, %v3124
    %v3151 = vpack.c.b16 %v3127, %v3126
    %v3152 = vpack.c.b16 %v3129, %v3128
    %v3153 = vpack.c.b16 %v3131, %v3130
    %v3154 = vpack.c.b16 %v3133, %v3132
    %v3155 = vpack.c.b16 %v3135, %v3134
    %v3156 = vpack.c.b16 %v3137, %v3136
    %v3157 = vpack.c.b16 %v3139, %v3138
    %v3158 = vpack.c.b16 %v3141, %v3140
    %v3159 = vpack.c.b16 %v3143, %v3142
    %3176 = vmatprep.subr.bf16.mxu0 0
    %3177 = vmatpush1.bf16.msra.mxu0 %v3144
    %3178 = vmatprep.subr.bf16.mxu0 0
    %3179 = vmatpush1.bf16.msra.mxu0 %v3145
    %3180 = vmatprep.subr.bf16.mxu0 0
    %3181 = vmatpush1.bf16.msra.mxu0 %v3146
    %3182 = vmatprep.subr.bf16.mxu0 0
    %3183 = vmatpush1.bf16.msra.mxu0 %v3147
    %3184 = vmatprep.subr.bf16.mxu0 0
    %3185 = vmatpush1.bf16.msra.mxu0 %v3148
    %3186 = vmatprep.subr.bf16.mxu0 0
    %3187 = vmatpush1.bf16.msra.mxu0 %v3149
    %3188 = vmatprep.subr.bf16.mxu0 0
    %3189 = vmatpush1.bf16.msra.mxu0 %v3150
    %3190 = vmatprep.subr.bf16.mxu0 0
    %3191 = vmatpush1.bf16.msra.mxu0 %v3151
    %3192 = vmatprep.subr.bf16.mxu0 0
    %3193 = vmatpush1.bf16.msra.mxu0 %v3152
    %3194 = vmatprep.subr.bf16.mxu0 0
    %3195 = vmatpush1.bf16.msra.mxu0 %v3153
    %3196 = vmatprep.subr.bf16.mxu0 0
    %3197 = vmatpush1.bf16.msra.mxu0 %v3154
    %3198 = vmatprep.subr.bf16.mxu0 0
    %3199 = vmatpush1.bf16.msra.mxu0 %v3155
    %3200 = vmatprep.subr.bf16.mxu0 0
    %3201 = vmatpush1.bf16.msra.mxu0 %v3156
    %3202 = vmatprep.subr.bf16.mxu0 0
    %3203 = vmatpush1.bf16.msra.mxu0 %v3157
    %3204 = vmatprep.subr.bf16.mxu0 0
    %3205 = vmatpush1.bf16.msra.mxu0 %v3158
    %3206 = vmatprep.subr.bf16.mxu0 0
    %3207 = vmatpush1.bf16.msra.mxu0 %v3159
    %3208 = vmatprep.mubr.bf16.mxu0 %v3073
    %3209 = vmatmul.mubr.bf16.gmra.mrb[0].mxu0 %v3072
    %v3210 = vpop.f32.mrb[0].mxu0
    %v3211 = vadd.f32 %v3078, %v3210
    %v3212 = vpop.f32.mrb[0].mxu0
    %v3213 = vpop.f32.mrb[0].mxu0
    %v3214 = vpop.f32.mrb[0].mxu0
    %3215 = vdwg.mxu0
    %vm3216 = vcmp.ge.f32.partialorder %v3211, 0.0
    %v3217 = vmul.f32 %v3211, 0.2
    %v3218 = vsel %vm3216, %v3211, %v3217
    %v3219 = vsel %vm137, %v3218, 0.0
    %v3220 = vrot.slane %v3219, 4
    %v3221 = vadd.f32 %v3219, %v3220
    %v3222 = vrot.slane %v3221, 2
    %v3223 = vadd.f32 %v3221, %v3222
    %v3224 = vrot.slane %v3223, 1
    %v3225 = vadd.f32 %v3223, %v3224
    %v3226 = vmul.f32 %v3225, %v194
    %v3227 = vsub.f32 %v3218, %v3226
    %v3228 = vmul.f32 %v3227, %v3227
    %v3229 = vsel %vm137, %v3228, 0.0
    %v3230 = vrot.slane %v3229, 4
    %v3231 = vadd.f32 %v3229, %v3230
    %v3232 = vrot.slane %v3231, 2
    %v3233 = vadd.f32 %v3231, %v3232
    %v3234 = vrot.slane %v3233, 1
    %v3235 = vadd.f32 %v3233, %v3234
    %v3236 = vmul.f32 %v3235, %v194
    %v3238 = vlaneseq
    %v3239 = vshrl.u32 %v3238, 7
    %v3240 = vsub.s32 0, %v3239
    %v3241 = vrot.slane %v3070, %v3240
    %v3243 = vmul.f32 %v3241, %v3227
    %v3244 = vadd.f32 %v3236, 1e-05
    %v3245 = vrsqrt.pop %v3244
    %v3246 = vmul.f32 %v3243, %v3245
    %v3248 = vlaneseq
    %v3249 = vshrl.u32 %v3248, 7
    %v3250 = vsub.s32 0, %v3249
    %v3251 = vrot.slane %v3071, %v3250
    %v3253 = vadd.f32 %v3246, %v3251
    %v3254 = vpack.c.bf16 %v3253, %v3253
    %v3255 = vld [vmem:[%s16] sm:$0xf]
    %v3256 = vld [vmem:[%s16 + $0x4] sm:$0xf]
    %v3257 = vld [vmem:[%s16 + $0x8] sm:$0xf]
    %v3258 = vld [vmem:[%s16 + $0xc] sm:$0xf]
    %v3259 = vld [vmem:[%s16 + $0x10] sm:$0xf]
    %v3260 = vld [vmem:[%s16 + $0x14] sm:$0xf]
    %v3261 = vld [vmem:[%s16 + $0x18] sm:$0xf]
    %v3262 = vld [vmem:[%s16 + $0x1c] sm:$0xf]
    %v3263 = vld [vmem:[%s16 + $0x20] sm:$0xf]
    %v3264 = vld [vmem:[%s16 + $0x24] sm:$0xf]
    %v3265 = vld [vmem:[%s16 + $0x28] sm:$0xf]
    %v3266 = vld [vmem:[%s16 + $0x2c] sm:$0xf]
    %v3267 = vld [vmem:[%s16 + $0x30] sm:$0xf]
    %v3268 = vld [vmem:[%s16 + $0x34] sm:$0xf]
    %v3269 = vld [vmem:[%s16 + $0x38] sm:$0xf]
    %v3270 = vld [vmem:[%s16 + $0x3c] sm:$0xf]
    %v3271 = vld [vmem:[%s17] sm:$0x1]
    %v3273 = vlaneseq
    %v3274 = vshrl.u32 %v3273, 7
    %v3275 = vsub.s32 0, %v3274
    %v3276 = vrot.slane %v3271, %v3275
    %v3294 = vunpack.c.l.b16 %v3255
    %v3295 = vunpack.c.l.b16 %v3256
    %v3296 = vunpack.c.l.b16 %v3257
    %v3297 = vunpack.c.l.b16 %v3258
    %v3298 = vunpack.c.l.b16 %v3259
    %v3299 = vunpack.c.l.b16 %v3260
    %v3300 = vunpack.c.l.b16 %v3261
    %v3301 = vunpack.c.l.b16 %v3262
    %v3302 = vunpack.c.l.b16 %v3263
    %v3303 = vunpack.c.l.b16 %v3264
    %v3304 = vunpack.c.l.b16 %v3265
    %v3305 = vunpack.c.l.b16 %v3266
    %v3306 = vunpack.c.l.b16 %v3267
    %v3307 = vunpack.c.l.b16 %v3268
    %v3308 = vunpack.c.l.b16 %v3269
    %v3309 = vunpack.c.l.b16 %v3270
    %v3310 = vpack.c.b16 %v3295, %v3294
    %v3311 = vpack.c.b16 %v3297, %v3296
    %v3312 = vpack.c.b16 %v3299, %v3298
    %v3313 = vpack.c.b16 %v3301, %v3300
    %v3314 = vpack.c.b16 %v3303, %v3302
    %v3315 = vpack.c.b16 %v3305, %v3304
    %v3316 = vpack.c.b16 %v3307, %v3306
    %v3317 = vpack.c.b16 %v3309, %v3308
    %3326 = vmatprep.subr.bf16.mxu0 0
    %3327 = vmatpush1.bf16.msra.mxu0 %v3310
    %3328 = vmatprep.subr.bf16.mxu0 0
    %3329 = vmatpush1.bf16.msra.mxu0 %v3311
    %3330 = vmatprep.subr.bf16.mxu0 0
    %3331 = vmatpush1.bf16.msra.mxu0 %v3312
    %3332 = vmatprep.subr.bf16.mxu0 0
    %3333 = vmatpush1.bf16.msra.mxu0 %v3313
    %3334 = vmatprep.subr.bf16.mxu0 0
    %3335 = vmatpush1.bf16.msra.mxu0 %v3314
    %3336 = vmatprep.subr.bf16.mxu0 0
    %3337 = vmatpush1.bf16.msra.mxu0 %v3315
    %3338 = vmatprep.subr.bf16.mxu0 0
    %3339 = vmatpush1.bf16.msra.mxu0 %v3316
    %3340 = vmatprep.subr.bf16.mxu0 0
    %3341 = vmatpush1.bf16.msra.mxu0 %v3317
    %3342 = vmatprep.subr.bf16.mxu0 0
    %3343 = vmatpush1.bf16.msra.mxu0 0
    %3344 = vmatprep.subr.bf16.mxu0 0
    %3345 = vmatpush1.bf16.msra.mxu0 0
    %3346 = vmatprep.subr.bf16.mxu0 0
    %3347 = vmatpush1.bf16.msra.mxu0 0
    %3348 = vmatprep.subr.bf16.mxu0 0
    %3349 = vmatpush1.bf16.msra.mxu0 0
    %3350 = vmatprep.subr.bf16.mxu0 0
    %3351 = vmatpush1.bf16.msra.mxu0 0
    %3352 = vmatprep.subr.bf16.mxu0 0
    %3353 = vmatpush1.bf16.msra.mxu0 0
    %3354 = vmatprep.subr.bf16.mxu0 0
    %3355 = vmatpush1.bf16.msra.mxu0 0
    %3356 = vmatprep.subr.bf16.mxu0 0
    %3357 = vmatpush1.bf16.msra.mxu0 0
    %3358 = vmatprep.mubr.bf16.mxu0 0
    %3359 = vmatmul.mubr.bf16.gmra.mrb[0].mxu0 %v3254
    %v3360 = vpop.f32.mrb[0].mxu0
    %v3361 = vadd.f32 %v3276, %v3360
    %v3362 = vpop.f32.mrb[0].mxu0
    %v3363 = vpop.f32.mrb[0].mxu0
    %v3364 = vpop.f32.mrb[0].mxu0
    %3365 = vdwg.mxu0
    %3366 = vst [vmem:[#allocation2] sm:$0xf] %v3361
    // Predicated region
    $region74: #{encoder_forward.3} parent=1 // pred_check
      _
    $region75: #{encoder_forward.3} parent=1 // pred_check_branch
      %3368 = sbr.rel (0) target = $region77
    $region76: #{encoder_forward.3} parent=1 // pred_region
      %s3370 = ssub.s32 64, 64
      %3371 = vsyncadd [#allocation3], %s3370
      %s3373 = sshll.u32 [#allocation2], 4
      %s3374 = int_to_ptr.vmem [resolvable:$true] %s3373
      %3376 = dma.vmem_to_hbm [thread:$0]  %s3374, 64, %s18, [#allocation3]
    $region77: #{encoder_forward.3} parent=1 // pred_fallthru
      _
    // Predicated region
    $region78: #{encoder_forward.3} parent=1 // pred_check
      _
    $region79: #{encoder_forward.3} parent=1 // pred_check_branch
      %3378 = sbr.rel (0) target = $region81
    $region80: #{encoder_forward.3} parent=1 // pred_region
      %3379 = dma.done [#allocation3], 64
    $region81: #{encoder_forward.3} parent=1 // pred_fallthru
      _
    %3380 = vsyncpa [#allocation3], 1

</llo_original>
